<compile_context>
chip_gen: v5e
topology: v5e:2x2
jax: 0.10.0
libtpu: 0.0.40
codegen_flags: <defaults>
</compile_context>

<pallas_src>
import jax
import jax.numpy as jnp
from jax import lax
from jax.experimental import pallas as pl
from jax.experimental.pallas import tpu as pltpu

# ----- static config (small shapes consistent with the module's args) -----
B = 2              # batch
N_OBJ = 4          # objects per image
C_IMG = 16         # args.n_img_feats (feature-map channels)
H_IMG = W_IMG = 16 # feature-map spatial size
VOCAB = 32         # args.ques_vocab_sz
T_Q = 8            # args.max_ques_len
E_WORD = 16        # args.ques_word_vec_dim
N_ATTN = 32        # args.n_attn == args.n_ques_emb
N_ANS = 10         # args.n_ans
ROI_OUT = 5        # self.roi_output_size = (5, 5)

_CW = C_IMG * W_IMG        # 256 lanes: lane index = c * W + x
_BN = B * N_OBJ            # 8 objects total
NEG = -1.0e30              # additive "masked out" value (finite: no inf/NaN paths)
_ROLL_SHIFTS = (1, 2, 4, 8)

assert _CW % 128 == 0
# roll-max tree must stay inside one 16-lane channel block (channel max lands on
# lane c*W + (W-1) under jnp.roll semantics of pltpu.roll).
assert sum(_ROLL_SHIFTS) == W_IMG - 1

# ----- packed parameter slab layout (static, 8-row aligned) -----
_PARAM_SPECS = (
    ("emb_ih",    VOCAB,       4 * N_ATTN),  # emb @ W_ih folded offline
    ("w_hh",      N_ATTN,      4 * N_ATTN),
    ("b_lstm",    1,           4 * N_ATTN),
    ("w_vm_exp",  _CW,         2 * N_ATTN),  # sel-expanded [w_att_v | w_v] / 25
    ("w_qm",      N_ATTN,      2 * N_ATTN),  # [w_att_q | w_q] merged
    ("b_att",     1,           N_ATTN),
    ("w_att_lin", 1,           N_ATTN),
    ("b_att_lin", 1,           1),
    ("b_q",       1,           N_ATTN),
    ("b_v",       1,           N_ATTN),
    ("w_c1",      N_ATTN,      2 * N_ATTN),
    ("b_c1",      1,           2 * N_ATTN),
    ("w_c2",      2 * N_ATTN,  N_ANS),
    ("b_c2",      1,           N_ANS),
)


def _build_layout():
    lay, off = {}, 0
    for name, r, c in _PARAM_SPECS:
        lay[name] = (off, r, c)
        off += ((r + 7) // 8) * 8          # keep every tensor sublane-aligned
    return lay, off


_LAYOUT, _SLAB_ROWS = _build_layout()


def _p(p_ref, name):
    off, r, c = _LAYOUT[name]
    return p_ref[off:off + r, 0:c]         # static slice of the param slab


# ------------------------------------------------------------------------
# Fused kernel: ROI pool -> LSTM question encoder -> attention + FCNets +
# SimpleClassifier, everything in VMEM, no grid.
# ------------------------------------------------------------------------
def fused_kernel(img_ref, rbias_ref, cbias_ref, ques_ref, lens_ref, nobj_ref,
                 p_ref, out_ref):
    # img_ref  : (H, B*N_OBJ, C*W) f32   image rows replicated per object
    # rbias_ref: (H, 5, B*N_OBJ, 1) f32  additive row-bin mask (0 / -1e30)
    # cbias_ref: (5, B*N_OBJ, C*W) f32   additive col-bin mask (0 / -1e30)
    # ques_ref : (B*T, 1) i32            row = b*T + t
    # lens_ref : (B, 1) i32, nobj_ref : (B, 1) i32
    # p_ref    : (_SLAB_ROWS, 128) f32   packed parameter slab
    # out_ref  : (B, N_ANS) f32

    # ---------- 1) ROI adaptive max pool (5x5) + 5x5 average ----------
    # Row bins: one masked-max sweep over the 16 image rows, vectorized over all
    # objects and all 5 row bins -> (5, BN, C*W).
    colmax = jnp.full((ROI_OUT, _BN, _CW), NEG, jnp.float32)
    for y in range(H_IMG):                                   # static, unrolled
        colmax = jnp.maximum(colmax, img_ref[y][None, :, :] + rbias_ref[y])

    # Col bins: mask the per-object x-range, then a 4-step roll-max tree; lane
    # c*W + (W-1) ends up holding that channel's bin max (total shift = W-1, so
    # nothing leaks across channel blocks).
    vsum = jnp.zeros((ROI_OUT * _BN, _CW), jnp.float32)
    for j in range(ROI_OUT):
        m = (colmax + cbias_ref[j][None, :, :]).reshape(ROI_OUT * _BN, _CW)
        for s in _ROLL_SHIFTS:
            m = jnp.maximum(m, pltpu.roll(m, s, 1))          # XLU vrot, not concat copies
        vsum = vsum + m
    # sum over the 5 row bins -> per-object 25-bin sums (1/25 folded into weights)
    v_dil = (vsum[0 * _BN:1 * _BN] + vsum[1 * _BN:2 * _BN] + vsum[2 * _BN:3 * _BN]
             + vsum[3 * _BN:4 * _BN] + vsum[4 * _BN:5 * _BN])          # (BN, C*W)

    # per-object [attention-proj | v_net-proj]: sel compaction + mean folded into
    # the expanded weight (nonzero rows only at lanes c*W + W-1).
    pv = jnp.dot(v_dil, _p(p_ref, "w_vm_exp"),
                 preferred_element_type=jnp.float32)                   # (BN, 2A)
    proj_v = pv[:, 0:N_ATTN]
    v_w = pv[:, N_ATTN:2 * N_ATTN]

    # ---------- 2) question encoder (embedding lookup + 1-layer LSTM) ----------
    tok = ques_ref[...]                                               # (B*T, 1)
    vocab_iota = lax.broadcasted_iota(jnp.int32, (1, VOCAB), 1)
    onehot = (tok == vocab_iota).astype(jnp.float32)                  # (B*T, VOCAB)
    # embedding lookup + input projection fused into ONE matmul, hoisted out of
    # the recurrence (bias folded in once).
    xg = (jnp.dot(onehot, _p(p_ref, "emb_ih"), preferred_element_type=jnp.float32)
          + _p(p_ref, "b_lstm"))                                      # (B*T, 4H)
    xg = xg.reshape(B, T_Q, 4 * N_ATTN)

    w_hh = _p(p_ref, "w_hh")                                          # (H, 4H)
    lens = lens_ref[...]                                              # (B, 1)
    Hh = N_ATTN
    h_t = jnp.zeros((B, Hh), jnp.float32)
    c_t = jnp.zeros((B, Hh), jnp.float32)
    for t in range(T_Q):                                              # fully unrolled
        gates = xg[:, t, :] + jnp.dot(h_t, w_hh, preferred_element_type=jnp.float32)
        i_g = jax.nn.sigmoid(gates[:, 0:Hh])
        f_g = jax.nn.sigmoid(gates[:, Hh:2 * Hh])
        g_g = jnp.tanh(gates[:, 2 * Hh:3 * Hh])
        o_g = jax.nn.sigmoid(gates[:, 3 * Hh:4 * Hh])
        c_new = f_g * c_t + i_g * g_g
        h_new = o_g * jnp.tanh(c_new)
        valid = t < lens                                              # (B, 1)
        h_t = jnp.where(valid, h_new, h_t)                            # packed-seq final state
        c_t = jnp.where(valid, c_new, c_t)
    q_emb = h_t                                                       # (B, H)

    # ---------- 3) attention + q_net / v_net + SimpleClassifier ----------
    q_all = jnp.dot(q_emb, _p(p_ref, "w_qm"),
                    preferred_element_type=jnp.float32)               # (B, 2A) merged dot
    proj_q = q_all[:, 0:N_ATTN]
    q_lin = q_all[:, N_ATTN:2 * N_ATTN]

    joint = jnp.maximum(proj_v.reshape(B, N_OBJ, N_ATTN)
                        + proj_q[:, None, :] + _p(p_ref, "b_att"), 0.0)   # (B, N, A)
    att_logits = (jnp.sum(joint * _p(p_ref, "w_att_lin"), axis=-1)
                  + _p(p_ref, "b_att_lin"))                           # (B, N)

    obj_iota = lax.broadcasted_iota(jnp.int32, (B, N_OBJ), 1)
    valid_o = obj_iota < nobj_ref[...]                                # num_obj >= 1 assumed
    att_logits = jnp.where(valid_o, att_logits, NEG)
    mx = jnp.max(att_logits, axis=-1, keepdims=True)
    e = jnp.exp(att_logits - mx)
    att = e / jnp.sum(e, axis=-1, keepdims=True)                      # (B, N)

    # v_repr = relu((sum_o att_o * v_o) @ w_v + b_v) computed as the attention-
    # weighted sum of the per-object projections (exact by linearity).
    v_emb_w = jnp.sum(att[:, :, None] * v_w.reshape(B, N_OBJ, N_ATTN), axis=1)  # (B, A)
    q_repr = jnp.maximum(q_lin + _p(p_ref, "b_q"), 0.0)
    v_repr = jnp.maximum(v_emb_w + _p(p_ref, "b_v"), 0.0)
    jr = q_repr * v_repr                                              # (B, A)

    hid = jnp.maximum(jnp.dot(jr, _p(p_ref, "w_c1"),
                              preferred_element_type=jnp.float32)
                      + _p(p_ref, "b_c1"), 0.0)
    out_ref[...] = (jnp.dot(hid, _p(p_ref, "w_c2"),
                            preferred_element_type=jnp.float32)
                    + _p(p_ref, "b_c2"))


# ------------------------------------------------------------------------
# Wrapper: ROI bin-mask precompute + layout glue + one pallas_call.
# ------------------------------------------------------------------------
def _roi_bin_biases(objs):
    """Additive (0 / -1e30) row/col bin masks for adaptive_max_pool2d (5,5)."""
    o = objs.astype(jnp.int32).reshape(_BN, 4)
    x1 = jnp.clip(o[:, 0], 0, W_IMG - 1)
    y1 = jnp.clip(o[:, 1], 0, H_IMG - 1)
    x2 = jnp.clip(o[:, 2], x1, W_IMG - 1)                  # degenerate-box guard
    y2 = jnp.clip(o[:, 3], y1, H_IMG - 1)
    h = y2 - y1 + 1
    w = x2 - x1 + 1
    i = jnp.arange(ROI_OUT)[:, None]                       # (5, 1)
    ys = y1[None] + (i * h[None]) // ROI_OUT               # (5, BN)
    ye = y1[None] + ((i + 1) * h[None] + ROI_OUT - 1) // ROI_OUT
    xs = x1[None] + (i * w[None]) // ROI_OUT
    xe = x1[None] + ((i + 1) * w[None] + ROI_OUT - 1) // ROI_OUT

    yy = jnp.arange(H_IMG)[:, None, None]                  # (H, 1, 1)
    in_row = (yy >= ys[None]) & (yy < ye[None])            # (H, 5, BN)
    rbias = jnp.where(in_row, 0.0, NEG).astype(jnp.float32)[..., None]   # (H, 5, BN, 1)

    xx = jnp.arange(W_IMG)[None, None, :]                  # (1, 1, W)
    in_col = (xx >= xs[:, :, None]) & (xx < xe[:, :, None])              # (5, BN, W)
    cbias = jnp.where(in_col, 0.0, NEG).astype(jnp.float32)
    cbias = jnp.tile(cbias, (1, 1, C_IMG))                 # (5, BN, C*W), lane = c*W + x
    return rbias, cbias


def base_model2_forward(param_slab, img_feats, ques, objs, adj_mat, ques_lens, num_obj):
    del adj_mat  # unused by the reference forward pass

    # lane-dense image layout (lane = c*W + x), rows replicated per object so the
    # ROI stage runs fully vectorized.
    # TODO(synk): accept this layout from the producer to drop the XLA transpose.
    img_cw = jnp.transpose(img_feats.astype(jnp.float32),
                           (0, 2, 1, 3)).reshape(B, H_IMG, _CW)        # (B, H, C*W)
    img_exp = jnp.repeat(jnp.transpose(img_cw, (1, 0, 2)), N_OBJ, axis=1)  # (H, BN, C*W)

    rbias, cbias = _roi_bin_biases(objs)

    ques_k = ques.astype(jnp.int32).reshape(B * T_Q, 1)
    lens_k = ques_lens.astype(jnp.int32).reshape(B, 1)
    nobj_k = num_obj.astype(jnp.int32).reshape(B, 1)

    vmem = pl.BlockSpec(memory_space=pltpu.MemorySpace.VMEM)
    cost = pl.CostEstimate(flops=700_000, transcendentals=3_000,
                           bytes_accessed=450_000)
    return pl.pallas_call(
        fused_kernel,
        out_shape=jax.ShapeDtypeStruct((B, N_ANS), jnp.float32),
        in_specs=[vmem] * 7,
        out_specs=vmem,
        cost_estimate=cost,
    )(img_exp, rbias, cbias, ques_k, lens_k, nobj_k, param_slab)


# ------------------------------------------------------------------------
# Parameters (PyTorch-equivalent raw tensors) and one-time offline packing.
# ------------------------------------------------------------------------
def init_params(key):
    ks = jax.random.split(key, 16)

    def w(k, shape, scale=0.1):
        return scale * jax.random.normal(k, shape, jnp.float32)

    return dict(
        emb=w(ks[0], (VOCAB, E_WORD)),
        w_ih=w(ks[1], (E_WORD, 4 * N_ATTN)),
        w_hh=w(ks[2], (N_ATTN, 4 * N_ATTN)),
        b_lstm=w(ks[3], (1, 4 * N_ATTN)),
        # Attention: FCNet([C+A, A]) split into v/q parts + Linear(A, 1)
        w_att_v=w(ks[4], (C_IMG, N_ATTN)),
        w_att_q=w(ks[5], (N_ATTN, N_ATTN)),
        b_att=w(ks[6], (1, N_ATTN)),
        w_att_lin=w(ks[7], (1, N_ATTN)),
        b_att_lin=w(ks[8], (1, 1)),
        # q_net / v_net
        w_q=w(ks[9], (N_ATTN, N_ATTN)),
        b_q=w(ks[10], (1, N_ATTN)),
        w_v=w(ks[11], (C_IMG, N_ATTN)),
        b_v=w(ks[12], (1, N_ATTN)),
        # classifier
        w_c1=w(ks[13], (N_ATTN, 2 * N_ATTN)),
        b_c1=w(ks[14], (1, 2 * N_ATTN)),
        w_c2=w(ks[15], (2 * N_ATTN, N_ANS)),
        b_c2=jnp.zeros((1, N_ANS), jnp.float32),
    )


def pack_params(params):
    """One-time packing of every parameter into a single (rows, 128) f32 slab."""
    emb_ih = jnp.dot(params["emb"].astype(jnp.float32),
                     params["w_ih"].astype(jnp.float32))     # fold embedding @ W_ih
    # Fold the channel compaction (old `sel`), the 1/25 bin average and the
    # roll-tree output lane (c*W + W-1) into one expanded [w_att_v | w_v] weight.
    w_vm = jnp.concatenate([params["w_att_v"], params["w_v"]], axis=1) \
        * (1.0 / (ROI_OUT * ROI_OUT))
    rows = jnp.arange(C_IMG) * W_IMG + (W_IMG - 1)
    w_vm_exp = jnp.zeros((_CW, 2 * N_ATTN), jnp.float32).at[rows].set(
        w_vm.astype(jnp.float32))

    tensors = dict(params)
    tensors["emb_ih"] = emb_ih
    tensors["w_vm_exp"] = w_vm_exp
    tensors["w_qm"] = jnp.concatenate([params["w_att_q"], params["w_q"]], axis=1)

    slab = jnp.zeros((_SLAB_ROWS, 128), jnp.float32)
    for name, (off, r, c) in _LAYOUT.items():
        t = jnp.asarray(tensors[name], jnp.float32).reshape(r, c)
        slab = slab.at[off:off + r, 0:c].set(t)
    return slab


if __name__ == "__main__":
    key = jax.random.PRNGKey(0)
    k_img, k_box, k_q, k_len, k_no, k_p = jax.random.split(key, 6)

    img_feats = jax.random.normal(k_img, (B, C_IMG, H_IMG, W_IMG), jnp.float32)  # NCHW

    # boxes [x1, y1, x2, y2] inclusive, inside the 16x16 feature map
    k1, k2, k3, k4 = jax.random.split(k_box, 4)
    x1 = jax.random.randint(k1, (B, N_OBJ, 1), 0, 8)
    y1 = jax.random.randint(k2, (B, N_OBJ, 1), 0, 8)
    bw = jax.random.randint(k3, (B, N_OBJ, 1), 3, 9)
    bh = jax.random.randint(k4, (B, N_OBJ, 1), 3, 9)
    objs = jnp.concatenate([x1, y1, x1 + bw - 1, y1 + bh - 1], axis=-1).astype(jnp.int32)

    ques = jax.random.randint(k_q, (B, T_Q), 0, VOCAB)
    ques_lens = jax.random.randint(k_len, (B,), 2, T_Q + 1)
    num_obj = jax.random.randint(k_no, (B,), 1, N_OBJ + 1)
    adj_mat = jnp.zeros((B, N_OBJ, N_OBJ), jnp.float32)  # accepted but unused

    params = init_params(k_p)
    slab = pack_params(params)

    fwd = jax.jit(base_model2_forward)
    logits = fwd(slab, img_feats, ques, objs, adj_mat, ques_lens, num_obj)
    jax.block_until_ready(logits)
    assert logits.shape == (B, N_ANS)
    assert bool(jnp.all(jnp.isfinite(logits)))
    print("KERNEL_OK")
</pallas_src>

<mosaic_0001>
module attributes {stable_mosaic.version = 11 : i64} {
  func.func @fused_kernel(%arg0: memref<16x8x256xf32, #tpu.memory_space<vmem>>, %arg1: memref<16x5x8x1xf32, #tpu.memory_space<vmem>>, %arg2: memref<5x8x256xf32, #tpu.memory_space<vmem>>, %arg3: memref<16x1xi32, #tpu.memory_space<vmem>>, %arg4: memref<2x1xi32, #tpu.memory_space<vmem>>, %arg5: memref<2x1xi32, #tpu.memory_space<vmem>>, %arg6: memref<512x128xf32, #tpu.memory_space<vmem>>, %arg7: memref<2x10xf32, #tpu.memory_space<vmem>>) attributes {dimension_semantics = [], scalar_prefetch = 0 : i64, scratch_operands = 0 : i64, tpu.core_type = #tpu.core_type<tc>} {
    %cst = arith.constant -1.000000e+30 : f32
    %0 = vector.broadcast %cst : f32 to vector<5x8x256xf32>
    %c0 = arith.constant 0 : index
    %c0_0 = arith.constant 0 : index
    %c0_1 = arith.constant 0 : index
    %1 = vector.load %arg0[%c0, %c0_0, %c0_1] : memref<16x8x256xf32, #tpu.memory_space<vmem>>, vector<1x8x256xf32>
    %2 = vector.shape_cast %1 : vector<1x8x256xf32> to vector<8x256xf32>
    %3 = vector.shape_cast %2 : vector<8x256xf32> to vector<1x8x256xf32>
    %c0_2 = arith.constant 0 : index
    %c0_3 = arith.constant 0 : index
    %c0_4 = arith.constant 0 : index
    %c0_5 = arith.constant 0 : index
    %4 = vector.load %arg1[%c0_2, %c0_3, %c0_4, %c0_5] : memref<16x5x8x1xf32, #tpu.memory_space<vmem>>, vector<1x5x8x1xf32>
    %5 = vector.shape_cast %4 : vector<1x5x8x1xf32> to vector<5x8x1xf32>
    %6 = vector.broadcast %3 : vector<1x8x256xf32> to vector<5x8x256xf32>
    %7 = vector.broadcast %5 : vector<5x8x1xf32> to vector<5x8x256xf32>
    %8 = arith.addf %6, %7 : vector<5x8x256xf32>
    %9 = arith.maximumf %0, %8 : vector<5x8x256xf32>
    %c1 = arith.constant 1 : index
    %c0_6 = arith.constant 0 : index
    %c0_7 = arith.constant 0 : index
    %10 = vector.load %arg0[%c1, %c0_6, %c0_7] : memref<16x8x256xf32, #tpu.memory_space<vmem>>, vector<1x8x256xf32>
    %11 = vector.shape_cast %10 : vector<1x8x256xf32> to vector<8x256xf32>
    %12 = vector.shape_cast %11 : vector<8x256xf32> to vector<1x8x256xf32>
    %c1_8 = arith.constant 1 : index
    %c0_9 = arith.constant 0 : index
    %c0_10 = arith.constant 0 : index
    %c0_11 = arith.constant 0 : index
    %13 = vector.load %arg1[%c1_8, %c0_9, %c0_10, %c0_11] : memref<16x5x8x1xf32, #tpu.memory_space<vmem>>, vector<1x5x8x1xf32>
    %14 = vector.shape_cast %13 : vector<1x5x8x1xf32> to vector<5x8x1xf32>
    %15 = vector.broadcast %12 : vector<1x8x256xf32> to vector<5x8x256xf32>
    %16 = vector.broadcast %14 : vector<5x8x1xf32> to vector<5x8x256xf32>
    %17 = arith.addf %15, %16 : vector<5x8x256xf32>
    %18 = arith.maximumf %9, %17 : vector<5x8x256xf32>
    %c2 = arith.constant 2 : index
    %c0_12 = arith.constant 0 : index
    %c0_13 = arith.constant 0 : index
    %19 = vector.load %arg0[%c2, %c0_12, %c0_13] : memref<16x8x256xf32, #tpu.memory_space<vmem>>, vector<1x8x256xf32>
    %20 = vector.shape_cast %19 : vector<1x8x256xf32> to vector<8x256xf32>
    %21 = vector.shape_cast %20 : vector<8x256xf32> to vector<1x8x256xf32>
    %c2_14 = arith.constant 2 : index
    %c0_15 = arith.constant 0 : index
    %c0_16 = arith.constant 0 : index
    %c0_17 = arith.constant 0 : index
    %22 = vector.load %arg1[%c2_14, %c0_15, %c0_16, %c0_17] : memref<16x5x8x1xf32, #tpu.memory_space<vmem>>, vector<1x5x8x1xf32>
    %23 = vector.shape_cast %22 : vector<1x5x8x1xf32> to vector<5x8x1xf32>
    %24 = vector.broadcast %21 : vector<1x8x256xf32> to vector<5x8x256xf32>
    %25 = vector.broadcast %23 : vector<5x8x1xf32> to vector<5x8x256xf32>
    %26 = arith.addf %24, %25 : vector<5x8x256xf32>
    %27 = arith.maximumf %18, %26 : vector<5x8x256xf32>
    %c3 = arith.constant 3 : index
    %c0_18 = arith.constant 0 : index
    %c0_19 = arith.constant 0 : index
    %28 = vector.load %arg0[%c3, %c0_18, %c0_19] : memref<16x8x256xf32, #tpu.memory_space<vmem>>, vector<1x8x256xf32>
    %29 = vector.shape_cast %28 : vector<1x8x256xf32> to vector<8x256xf32>
    %30 = vector.shape_cast %29 : vector<8x256xf32> to vector<1x8x256xf32>
    %c3_20 = arith.constant 3 : index
    %c0_21 = arith.constant 0 : index
    %c0_22 = arith.constant 0 : index
    %c0_23 = arith.constant 0 : index
    %31 = vector.load %arg1[%c3_20, %c0_21, %c0_22, %c0_23] : memref<16x5x8x1xf32, #tpu.memory_space<vmem>>, vector<1x5x8x1xf32>
    %32 = vector.shape_cast %31 : vector<1x5x8x1xf32> to vector<5x8x1xf32>
    %33 = vector.broadcast %30 : vector<1x8x256xf32> to vector<5x8x256xf32>
    %34 = vector.broadcast %32 : vector<5x8x1xf32> to vector<5x8x256xf32>
    %35 = arith.addf %33, %34 : vector<5x8x256xf32>
    %36 = arith.maximumf %27, %35 : vector<5x8x256xf32>
    %c4 = arith.constant 4 : index
    %c0_24 = arith.constant 0 : index
    %c0_25 = arith.constant 0 : index
    %37 = vector.load %arg0[%c4, %c0_24, %c0_25] : memref<16x8x256xf32, #tpu.memory_space<vmem>>, vector<1x8x256xf32>
    %38 = vector.shape_cast %37 : vector<1x8x256xf32> to vector<8x256xf32>
    %39 = vector.shape_cast %38 : vector<8x256xf32> to vector<1x8x256xf32>
    %c4_26 = arith.constant 4 : index
    %c0_27 = arith.constant 0 : index
    %c0_28 = arith.constant 0 : index
    %c0_29 = arith.constant 0 : index
    %40 = vector.load %arg1[%c4_26, %c0_27, %c0_28, %c0_29] : memref<16x5x8x1xf32, #tpu.memory_space<vmem>>, vector<1x5x8x1xf32>
    %41 = vector.shape_cast %40 : vector<1x5x8x1xf32> to vector<5x8x1xf32>
    %42 = vector.broadcast %39 : vector<1x8x256xf32> to vector<5x8x256xf32>
    %43 = vector.broadcast %41 : vector<5x8x1xf32> to vector<5x8x256xf32>
    %44 = arith.addf %42, %43 : vector<5x8x256xf32>
    %45 = arith.maximumf %36, %44 : vector<5x8x256xf32>
    %c5 = arith.constant 5 : index
    %c0_30 = arith.constant 0 : index
    %c0_31 = arith.constant 0 : index
    %46 = vector.load %arg0[%c5, %c0_30, %c0_31] : memref<16x8x256xf32, #tpu.memory_space<vmem>>, vector<1x8x256xf32>
    %47 = vector.shape_cast %46 : vector<1x8x256xf32> to vector<8x256xf32>
    %48 = vector.shape_cast %47 : vector<8x256xf32> to vector<1x8x256xf32>
    %c5_32 = arith.constant 5 : index
    %c0_33 = arith.constant 0 : index
    %c0_34 = arith.constant 0 : index
    %c0_35 = arith.constant 0 : index
    %49 = vector.load %arg1[%c5_32, %c0_33, %c0_34, %c0_35] : memref<16x5x8x1xf32, #tpu.memory_space<vmem>>, vector<1x5x8x1xf32>
    %50 = vector.shape_cast %49 : vector<1x5x8x1xf32> to vector<5x8x1xf32>
    %51 = vector.broadcast %48 : vector<1x8x256xf32> to vector<5x8x256xf32>
    %52 = vector.broadcast %50 : vector<5x8x1xf32> to vector<5x8x256xf32>
    %53 = arith.addf %51, %52 : vector<5x8x256xf32>
    %54 = arith.maximumf %45, %53 : vector<5x8x256xf32>
    %c6 = arith.constant 6 : index
    %c0_36 = arith.constant 0 : index
    %c0_37 = arith.constant 0 : index
    %55 = vector.load %arg0[%c6, %c0_36, %c0_37] : memref<16x8x256xf32, #tpu.memory_space<vmem>>, vector<1x8x256xf32>
    %56 = vector.shape_cast %55 : vector<1x8x256xf32> to vector<8x256xf32>
    %57 = vector.shape_cast %56 : vector<8x256xf32> to vector<1x8x256xf32>
    %c6_38 = arith.constant 6 : index
    %c0_39 = arith.constant 0 : index
    %c0_40 = arith.constant 0 : index
    %c0_41 = arith.constant 0 : index
    %58 = vector.load %arg1[%c6_38, %c0_39, %c0_40, %c0_41] : memref<16x5x8x1xf32, #tpu.memory_space<vmem>>, vector<1x5x8x1xf32>
    %59 = vector.shape_cast %58 : vector<1x5x8x1xf32> to vector<5x8x1xf32>
    %60 = vector.broadcast %57 : vector<1x8x256xf32> to vector<5x8x256xf32>
    %61 = vector.broadcast %59 : vector<5x8x1xf32> to vector<5x8x256xf32>
    %62 = arith.addf %60, %61 : vector<5x8x256xf32>
    %63 = arith.maximumf %54, %62 : vector<5x8x256xf32>
    %c7 = arith.constant 7 : index
    %c0_42 = arith.constant 0 : index
    %c0_43 = arith.constant 0 : index
    %64 = vector.load %arg0[%c7, %c0_42, %c0_43] : memref<16x8x256xf32, #tpu.memory_space<vmem>>, vector<1x8x256xf32>
    %65 = vector.shape_cast %64 : vector<1x8x256xf32> to vector<8x256xf32>
    %66 = vector.shape_cast %65 : vector<8x256xf32> to vector<1x8x256xf32>
    %c7_44 = arith.constant 7 : index
    %c0_45 = arith.constant 0 : index
    %c0_46 = arith.constant 0 : index
    %c0_47 = arith.constant 0 : index
    %67 = vector.load %arg1[%c7_44, %c0_45, %c0_46, %c0_47] : memref<16x5x8x1xf32, #tpu.memory_space<vmem>>, vector<1x5x8x1xf32>
    %68 = vector.shape_cast %67 : vector<1x5x8x1xf32> to vector<5x8x1xf32>
    %69 = vector.broadcast %66 : vector<1x8x256xf32> to vector<5x8x256xf32>
    %70 = vector.broadcast %68 : vector<5x8x1xf32> to vector<5x8x256xf32>
    %71 = arith.addf %69, %70 : vector<5x8x256xf32>
    %72 = arith.maximumf %63, %71 : vector<5x8x256xf32>
    %c8 = arith.constant 8 : index
    %c0_48 = arith.constant 0 : index
    %c0_49 = arith.constant 0 : index
    %73 = vector.load %arg0[%c8, %c0_48, %c0_49] : memref<16x8x256xf32, #tpu.memory_space<vmem>>, vector<1x8x256xf32>
    %74 = vector.shape_cast %73 : vector<1x8x256xf32> to vector<8x256xf32>
    %75 = vector.shape_cast %74 : vector<8x256xf32> to vector<1x8x256xf32>
    %c8_50 = arith.constant 8 : index
    %c0_51 = arith.constant 0 : index
    %c0_52 = arith.constant 0 : index
    %c0_53 = arith.constant 0 : index
    %76 = vector.load %arg1[%c8_50, %c0_51, %c0_52, %c0_53] : memref<16x5x8x1xf32, #tpu.memory_space<vmem>>, vector<1x5x8x1xf32>
    %77 = vector.shape_cast %76 : vector<1x5x8x1xf32> to vector<5x8x1xf32>
    %78 = vector.broadcast %75 : vector<1x8x256xf32> to vector<5x8x256xf32>
    %79 = vector.broadcast %77 : vector<5x8x1xf32> to vector<5x8x256xf32>
    %80 = arith.addf %78, %79 : vector<5x8x256xf32>
    %81 = arith.maximumf %72, %80 : vector<5x8x256xf32>
    %c9 = arith.constant 9 : index
    %c0_54 = arith.constant 0 : index
    %c0_55 = arith.constant 0 : index
    %82 = vector.load %arg0[%c9, %c0_54, %c0_55] : memref<16x8x256xf32, #tpu.memory_space<vmem>>, vector<1x8x256xf32>
    %83 = vector.shape_cast %82 : vector<1x8x256xf32> to vector<8x256xf32>
    %84 = vector.shape_cast %83 : vector<8x256xf32> to vector<1x8x256xf32>
    %c9_56 = arith.constant 9 : index
    %c0_57 = arith.constant 0 : index
    %c0_58 = arith.constant 0 : index
    %c0_59 = arith.constant 0 : index
    %85 = vector.load %arg1[%c9_56, %c0_57, %c0_58, %c0_59] : memref<16x5x8x1xf32, #tpu.memory_space<vmem>>, vector<1x5x8x1xf32>
    %86 = vector.shape_cast %85 : vector<1x5x8x1xf32> to vector<5x8x1xf32>
    %87 = vector.broadcast %84 : vector<1x8x256xf32> to vector<5x8x256xf32>
    %88 = vector.broadcast %86 : vector<5x8x1xf32> to vector<5x8x256xf32>
    %89 = arith.addf %87, %88 : vector<5x8x256xf32>
    %90 = arith.maximumf %81, %89 : vector<5x8x256xf32>
    %c10 = arith.constant 10 : index
    %c0_60 = arith.constant 0 : index
    %c0_61 = arith.constant 0 : index
    %91 = vector.load %arg0[%c10, %c0_60, %c0_61] : memref<16x8x256xf32, #tpu.memory_space<vmem>>, vector<1x8x256xf32>
    %92 = vector.shape_cast %91 : vector<1x8x256xf32> to vector<8x256xf32>
    %93 = vector.shape_cast %92 : vector<8x256xf32> to vector<1x8x256xf32>
    %c10_62 = arith.constant 10 : index
    %c0_63 = arith.constant 0 : index
    %c0_64 = arith.constant 0 : index
    %c0_65 = arith.constant 0 : index
    %94 = vector.load %arg1[%c10_62, %c0_63, %c0_64, %c0_65] : memref<16x5x8x1xf32, #tpu.memory_space<vmem>>, vector<1x5x8x1xf32>
    %95 = vector.shape_cast %94 : vector<1x5x8x1xf32> to vector<5x8x1xf32>
    %96 = vector.broadcast %93 : vector<1x8x256xf32> to vector<5x8x256xf32>
    %97 = vector.broadcast %95 : vector<5x8x1xf32> to vector<5x8x256xf32>
    %98 = arith.addf %96, %97 : vector<5x8x256xf32>
    %99 = arith.maximumf %90, %98 : vector<5x8x256xf32>
    %c11 = arith.constant 11 : index
    %c0_66 = arith.constant 0 : index
    %c0_67 = arith.constant 0 : index
    %100 = vector.load %arg0[%c11, %c0_66, %c0_67] : memref<16x8x256xf32, #tpu.memory_space<vmem>>, vector<1x8x256xf32>
    %101 = vector.shape_cast %100 : vector<1x8x256xf32> to vector<8x256xf32>
    %102 = vector.shape_cast %101 : vector<8x256xf32> to vector<1x8x256xf32>
    %c11_68 = arith.constant 11 : index
    %c0_69 = arith.constant 0 : index
    %c0_70 = arith.constant 0 : index
    %c0_71 = arith.constant 0 : index
    %103 = vector.load %arg1[%c11_68, %c0_69, %c0_70, %c0_71] : memref<16x5x8x1xf32, #tpu.memory_space<vmem>>, vector<1x5x8x1xf32>
    %104 = vector.shape_cast %103 : vector<1x5x8x1xf32> to vector<5x8x1xf32>
    %105 = vector.broadcast %102 : vector<1x8x256xf32> to vector<5x8x256xf32>
    %106 = vector.broadcast %104 : vector<5x8x1xf32> to vector<5x8x256xf32>
    %107 = arith.addf %105, %106 : vector<5x8x256xf32>
    %108 = arith.maximumf %99, %107 : vector<5x8x256xf32>
    %c12 = arith.constant 12 : index
    %c0_72 = arith.constant 0 : index
    %c0_73 = arith.constant 0 : index
    %109 = vector.load %arg0[%c12, %c0_72, %c0_73] : memref<16x8x256xf32, #tpu.memory_space<vmem>>, vector<1x8x256xf32>
    %110 = vector.shape_cast %109 : vector<1x8x256xf32> to vector<8x256xf32>
    %111 = vector.shape_cast %110 : vector<8x256xf32> to vector<1x8x256xf32>
    %c12_74 = arith.constant 12 : index
    %c0_75 = arith.constant 0 : index
    %c0_76 = arith.constant 0 : index
    %c0_77 = arith.constant 0 : index
    %112 = vector.load %arg1[%c12_74, %c0_75, %c0_76, %c0_77] : memref<16x5x8x1xf32, #tpu.memory_space<vmem>>, vector<1x5x8x1xf32>
    %113 = vector.shape_cast %112 : vector<1x5x8x1xf32> to vector<5x8x1xf32>
    %114 = vector.broadcast %111 : vector<1x8x256xf32> to vector<5x8x256xf32>
    %115 = vector.broadcast %113 : vector<5x8x1xf32> to vector<5x8x256xf32>
    %116 = arith.addf %114, %115 : vector<5x8x256xf32>
    %117 = arith.maximumf %108, %116 : vector<5x8x256xf32>
    %c13 = arith.constant 13 : index
    %c0_78 = arith.constant 0 : index
    %c0_79 = arith.constant 0 : index
    %118 = vector.load %arg0[%c13, %c0_78, %c0_79] : memref<16x8x256xf32, #tpu.memory_space<vmem>>, vector<1x8x256xf32>
    %119 = vector.shape_cast %118 : vector<1x8x256xf32> to vector<8x256xf32>
    %120 = vector.shape_cast %119 : vector<8x256xf32> to vector<1x8x256xf32>
    %c13_80 = arith.constant 13 : index
    %c0_81 = arith.constant 0 : index
    %c0_82 = arith.constant 0 : index
    %c0_83 = arith.constant 0 : index
    %121 = vector.load %arg1[%c13_80, %c0_81, %c0_82, %c0_83] : memref<16x5x8x1xf32, #tpu.memory_space<vmem>>, vector<1x5x8x1xf32>
    %122 = vector.shape_cast %121 : vector<1x5x8x1xf32> to vector<5x8x1xf32>
    %123 = vector.broadcast %120 : vector<1x8x256xf32> to vector<5x8x256xf32>
    %124 = vector.broadcast %122 : vector<5x8x1xf32> to vector<5x8x256xf32>
    %125 = arith.addf %123, %124 : vector<5x8x256xf32>
    %126 = arith.maximumf %117, %125 : vector<5x8x256xf32>
    %c14 = arith.constant 14 : index
    %c0_84 = arith.constant 0 : index
    %c0_85 = arith.constant 0 : index
    %127 = vector.load %arg0[%c14, %c0_84, %c0_85] : memref<16x8x256xf32, #tpu.memory_space<vmem>>, vector<1x8x256xf32>
    %128 = vector.shape_cast %127 : vector<1x8x256xf32> to vector<8x256xf32>
    %129 = vector.shape_cast %128 : vector<8x256xf32> to vector<1x8x256xf32>
    %c14_86 = arith.constant 14 : index
    %c0_87 = arith.constant 0 : index
    %c0_88 = arith.constant 0 : index
    %c0_89 = arith.constant 0 : index
    %130 = vector.load %arg1[%c14_86, %c0_87, %c0_88, %c0_89] : memref<16x5x8x1xf32, #tpu.memory_space<vmem>>, vector<1x5x8x1xf32>
    %131 = vector.shape_cast %130 : vector<1x5x8x1xf32> to vector<5x8x1xf32>
    %132 = vector.broadcast %129 : vector<1x8x256xf32> to vector<5x8x256xf32>
    %133 = vector.broadcast %131 : vector<5x8x1xf32> to vector<5x8x256xf32>
    %134 = arith.addf %132, %133 : vector<5x8x256xf32>
    %135 = arith.maximumf %126, %134 : vector<5x8x256xf32>
    %c15 = arith.constant 15 : index
    %c0_90 = arith.constant 0 : index
    %c0_91 = arith.constant 0 : index
    %136 = vector.load %arg0[%c15, %c0_90, %c0_91] : memref<16x8x256xf32, #tpu.memory_space<vmem>>, vector<1x8x256xf32>
    %137 = vector.shape_cast %136 : vector<1x8x256xf32> to vector<8x256xf32>
    %138 = vector.shape_cast %137 : vector<8x256xf32> to vector<1x8x256xf32>
    %c15_92 = arith.constant 15 : index
    %c0_93 = arith.constant 0 : index
    %c0_94 = arith.constant 0 : index
    %c0_95 = arith.constant 0 : index
    %139 = vector.load %arg1[%c15_92, %c0_93, %c0_94, %c0_95] : memref<16x5x8x1xf32, #tpu.memory_space<vmem>>, vector<1x5x8x1xf32>
    %140 = vector.shape_cast %139 : vector<1x5x8x1xf32> to vector<5x8x1xf32>
    %141 = vector.broadcast %138 : vector<1x8x256xf32> to vector<5x8x256xf32>
    %142 = vector.broadcast %140 : vector<5x8x1xf32> to vector<5x8x256xf32>
    %143 = arith.addf %141, %142 : vector<5x8x256xf32>
    %144 = arith.maximumf %135, %143 : vector<5x8x256xf32>
    %cst_96 = arith.constant 0.000000e+00 : f32
    %145 = vector.broadcast %cst_96 : f32 to vector<40x256xf32>
    %c0_97 = arith.constant 0 : index
    %c0_98 = arith.constant 0 : index
    %c0_99 = arith.constant 0 : index
    %146 = vector.load %arg2[%c0_97, %c0_98, %c0_99] : memref<5x8x256xf32, #tpu.memory_space<vmem>>, vector<1x8x256xf32>
    %147 = vector.shape_cast %146 : vector<1x8x256xf32> to vector<8x256xf32>
    %148 = vector.shape_cast %147 : vector<8x256xf32> to vector<1x8x256xf32>
    %149 = vector.broadcast %148 : vector<1x8x256xf32> to vector<5x8x256xf32>
    %150 = arith.addf %144, %149 : vector<5x8x256xf32>
    %151 = vector.shape_cast %150 : vector<5x8x256xf32> to vector<40x256xf32>
    %c1_i32 = arith.constant 1 : i32
    %152 = tpu.dynamic_rotate %151 by %c1_i32 dim 1 : vector<40x256xf32>, i32 -> vector<40x256xf32>
    %153 = arith.maximumf %151, %152 : vector<40x256xf32>
    %c2_i32 = arith.constant 2 : i32
    %154 = tpu.dynamic_rotate %153 by %c2_i32 dim 1 : vector<40x256xf32>, i32 -> vector<40x256xf32>
    %155 = arith.maximumf %153, %154 : vector<40x256xf32>
    %c4_i32 = arith.constant 4 : i32
    %156 = tpu.dynamic_rotate %155 by %c4_i32 dim 1 : vector<40x256xf32>, i32 -> vector<40x256xf32>
    %157 = arith.maximumf %155, %156 : vector<40x256xf32>
    %c8_i32 = arith.constant 8 : i32
    %158 = tpu.dynamic_rotate %157 by %c8_i32 dim 1 : vector<40x256xf32>, i32 -> vector<40x256xf32>
    %159 = arith.maximumf %157, %158 : vector<40x256xf32>
    %160 = arith.addf %145, %159 : vector<40x256xf32>
    %c1_100 = arith.constant 1 : index
    %c0_101 = arith.constant 0 : index
    %c0_102 = arith.constant 0 : index
    %161 = vector.load %arg2[%c1_100, %c0_101, %c0_102] : memref<5x8x256xf32, #tpu.memory_space<vmem>>, vector<1x8x256xf32>
    %162 = vector.shape_cast %161 : vector<1x8x256xf32> to vector<8x256xf32>
    %163 = vector.shape_cast %162 : vector<8x256xf32> to vector<1x8x256xf32>
    %164 = vector.broadcast %163 : vector<1x8x256xf32> to vector<5x8x256xf32>
    %165 = arith.addf %144, %164 : vector<5x8x256xf32>
    %166 = vector.shape_cast %165 : vector<5x8x256xf32> to vector<40x256xf32>
    %c1_i32_103 = arith.constant 1 : i32
    %167 = tpu.dynamic_rotate %166 by %c1_i32_103 dim 1 : vector<40x256xf32>, i32 -> vector<40x256xf32>
    %168 = arith.maximumf %166, %167 : vector<40x256xf32>
    %c2_i32_104 = arith.constant 2 : i32
    %169 = tpu.dynamic_rotate %168 by %c2_i32_104 dim 1 : vector<40x256xf32>, i32 -> vector<40x256xf32>
    %170 = arith.maximumf %168, %169 : vector<40x256xf32>
    %c4_i32_105 = arith.constant 4 : i32
    %171 = tpu.dynamic_rotate %170 by %c4_i32_105 dim 1 : vector<40x256xf32>, i32 -> vector<40x256xf32>
    %172 = arith.maximumf %170, %171 : vector<40x256xf32>
    %c8_i32_106 = arith.constant 8 : i32
    %173 = tpu.dynamic_rotate %172 by %c8_i32_106 dim 1 : vector<40x256xf32>, i32 -> vector<40x256xf32>
    %174 = arith.maximumf %172, %173 : vector<40x256xf32>
    %175 = arith.addf %160, %174 : vector<40x256xf32>
    %c2_107 = arith.constant 2 : index
    %c0_108 = arith.constant 0 : index
    %c0_109 = arith.constant 0 : index
    %176 = vector.load %arg2[%c2_107, %c0_108, %c0_109] : memref<5x8x256xf32, #tpu.memory_space<vmem>>, vector<1x8x256xf32>
    %177 = vector.shape_cast %176 : vector<1x8x256xf32> to vector<8x256xf32>
    %178 = vector.shape_cast %177 : vector<8x256xf32> to vector<1x8x256xf32>
    %179 = vector.broadcast %178 : vector<1x8x256xf32> to vector<5x8x256xf32>
    %180 = arith.addf %144, %179 : vector<5x8x256xf32>
    %181 = vector.shape_cast %180 : vector<5x8x256xf32> to vector<40x256xf32>
    %c1_i32_110 = arith.constant 1 : i32
    %182 = tpu.dynamic_rotate %181 by %c1_i32_110 dim 1 : vector<40x256xf32>, i32 -> vector<40x256xf32>
    %183 = arith.maximumf %181, %182 : vector<40x256xf32>
    %c2_i32_111 = arith.constant 2 : i32
    %184 = tpu.dynamic_rotate %183 by %c2_i32_111 dim 1 : vector<40x256xf32>, i32 -> vector<40x256xf32>
    %185 = arith.maximumf %183, %184 : vector<40x256xf32>
    %c4_i32_112 = arith.constant 4 : i32
    %186 = tpu.dynamic_rotate %185 by %c4_i32_112 dim 1 : vector<40x256xf32>, i32 -> vector<40x256xf32>
    %187 = arith.maximumf %185, %186 : vector<40x256xf32>
    %c8_i32_113 = arith.constant 8 : i32
    %188 = tpu.dynamic_rotate %187 by %c8_i32_113 dim 1 : vector<40x256xf32>, i32 -> vector<40x256xf32>
    %189 = arith.maximumf %187, %188 : vector<40x256xf32>
    %190 = arith.addf %175, %189 : vector<40x256xf32>
    %c3_114 = arith.constant 3 : index
    %c0_115 = arith.constant 0 : index
    %c0_116 = arith.constant 0 : index
    %191 = vector.load %arg2[%c3_114, %c0_115, %c0_116] : memref<5x8x256xf32, #tpu.memory_space<vmem>>, vector<1x8x256xf32>
    %192 = vector.shape_cast %191 : vector<1x8x256xf32> to vector<8x256xf32>
    %193 = vector.shape_cast %192 : vector<8x256xf32> to vector<1x8x256xf32>
    %194 = vector.broadcast %193 : vector<1x8x256xf32> to vector<5x8x256xf32>
    %195 = arith.addf %144, %194 : vector<5x8x256xf32>
    %196 = vector.shape_cast %195 : vector<5x8x256xf32> to vector<40x256xf32>
    %c1_i32_117 = arith.constant 1 : i32
    %197 = tpu.dynamic_rotate %196 by %c1_i32_117 dim 1 : vector<40x256xf32>, i32 -> vector<40x256xf32>
    %198 = arith.maximumf %196, %197 : vector<40x256xf32>
    %c2_i32_118 = arith.constant 2 : i32
    %199 = tpu.dynamic_rotate %198 by %c2_i32_118 dim 1 : vector<40x256xf32>, i32 -> vector<40x256xf32>
    %200 = arith.maximumf %198, %199 : vector<40x256xf32>
    %c4_i32_119 = arith.constant 4 : i32
    %201 = tpu.dynamic_rotate %200 by %c4_i32_119 dim 1 : vector<40x256xf32>, i32 -> vector<40x256xf32>
    %202 = arith.maximumf %200, %201 : vector<40x256xf32>
    %c8_i32_120 = arith.constant 8 : i32
    %203 = tpu.dynamic_rotate %202 by %c8_i32_120 dim 1 : vector<40x256xf32>, i32 -> vector<40x256xf32>
    %204 = arith.maximumf %202, %203 : vector<40x256xf32>
    %205 = arith.addf %190, %204 : vector<40x256xf32>
    %c4_121 = arith.constant 4 : index
    %c0_122 = arith.constant 0 : index
    %c0_123 = arith.constant 0 : index
    %206 = vector.load %arg2[%c4_121, %c0_122, %c0_123] : memref<5x8x256xf32, #tpu.memory_space<vmem>>, vector<1x8x256xf32>
    %207 = vector.shape_cast %206 : vector<1x8x256xf32> to vector<8x256xf32>
    %208 = vector.shape_cast %207 : vector<8x256xf32> to vector<1x8x256xf32>
    %209 = vector.broadcast %208 : vector<1x8x256xf32> to vector<5x8x256xf32>
    %210 = arith.addf %144, %209 : vector<5x8x256xf32>
    %211 = vector.shape_cast %210 : vector<5x8x256xf32> to vector<40x256xf32>
    %c1_i32_124 = arith.constant 1 : i32
    %212 = tpu.dynamic_rotate %211 by %c1_i32_124 dim 1 : vector<40x256xf32>, i32 -> vector<40x256xf32>
    %213 = arith.maximumf %211, %212 : vector<40x256xf32>
    %c2_i32_125 = arith.constant 2 : i32
    %214 = tpu.dynamic_rotate %213 by %c2_i32_125 dim 1 : vector<40x256xf32>, i32 -> vector<40x256xf32>
    %215 = arith.maximumf %213, %214 : vector<40x256xf32>
    %c4_i32_126 = arith.constant 4 : i32
    %216 = tpu.dynamic_rotate %215 by %c4_i32_126 dim 1 : vector<40x256xf32>, i32 -> vector<40x256xf32>
    %217 = arith.maximumf %215, %216 : vector<40x256xf32>
    %c8_i32_127 = arith.constant 8 : i32
    %218 = tpu.dynamic_rotate %217 by %c8_i32_127 dim 1 : vector<40x256xf32>, i32 -> vector<40x256xf32>
    %219 = arith.maximumf %217, %218 : vector<40x256xf32>
    %220 = arith.addf %205, %219 : vector<40x256xf32>
    %221 = vector.extract_strided_slice %220 {offsets = [0, 0], sizes = [8, 256], strides = [1, 1]} : vector<40x256xf32> to vector<8x256xf32>
    %222 = vector.extract_strided_slice %220 {offsets = [8, 0], sizes = [8, 256], strides = [1, 1]} : vector<40x256xf32> to vector<8x256xf32>
    %223 = arith.addf %221, %222 : vector<8x256xf32>
    %224 = vector.extract_strided_slice %220 {offsets = [16, 0], sizes = [8, 256], strides = [1, 1]} : vector<40x256xf32> to vector<8x256xf32>
    %225 = arith.addf %223, %224 : vector<8x256xf32>
    %226 = vector.extract_strided_slice %220 {offsets = [24, 0], sizes = [8, 256], strides = [1, 1]} : vector<40x256xf32> to vector<8x256xf32>
    %227 = arith.addf %225, %226 : vector<8x256xf32>
    %228 = vector.extract_strided_slice %220 {offsets = [32, 0], sizes = [8, 256], strides = [1, 1]} : vector<40x256xf32> to vector<8x256xf32>
    %229 = arith.addf %227, %228 : vector<8x256xf32>
    %c72 = arith.constant 72 : index
    %c0_128 = arith.constant 0 : index
    %230 = vector.load %arg6[%c72, %c0_128] : memref<512x128xf32, #tpu.memory_space<vmem>>, vector<256x64xf32>
    %cst_129 = arith.constant dense<0.000000e+00> : vector<8x64xf32>
    %231 = tpu.matmul %229, %230, %cst_129 {dimension_numbers = #tpu.dot_dimension_numbers<[1], [0], [0], [1], [0, 0, 1, 1], [], []>} : vector<8x256xf32>, vector<256x64xf32>, vector<8x64xf32> -> vector<8x64xf32>
    %232 = vector.extract_strided_slice %231 {offsets = [0, 0], sizes = [8, 32], strides = [1, 1]} : vector<8x64xf32> to vector<8x32xf32>
    %233 = vector.extract_strided_slice %231 {offsets = [0, 32], sizes = [8, 32], strides = [1, 1]} : vector<8x64xf32> to vector<8x32xf32>
    %c0_130 = arith.constant 0 : index
    %c0_131 = arith.constant 0 : index
    %234 = vector.load %arg3[%c0_130, %c0_131] : memref<16x1xi32, #tpu.memory_space<vmem>>, vector<16x1xi32>
    %235 = tpu.iota {dimensions = array<i32: 1>} : vector<1x32xi32>
    %236 = vector.broadcast %234 : vector<16x1xi32> to vector<16x32xi32>
    %237 = vector.broadcast %235 : vector<1x32xi32> to vector<16x32xi32>
    %238 = arith.cmpi eq, %236, %237 : vector<16x32xi32>
    %239 = arith.extui %238 : vector<16x32xi1> to vector<16x32xi32>
    %240 = arith.sitofp %239 : vector<16x32xi32> to vector<16x32xf32>
    %c0_132 = arith.constant 0 : index
    %c0_133 = arith.constant 0 : index
    %241 = vector.load %arg6[%c0_132, %c0_133] : memref<512x128xf32, #tpu.memory_space<vmem>>, vector<32x128xf32>
    %cst_134 = arith.constant dense<0.000000e+00> : vector<16x128xf32>
    %242 = tpu.matmul %240, %241, %cst_134 {dimension_numbers = #tpu.dot_dimension_numbers<[1], [0], [0], [1], [0, 0, 1, 1], [], []>} : vector<16x32xf32>, vector<32x128xf32>, vector<16x128xf32> -> vector<16x128xf32>
    %c64 = arith.constant 64 : index
    %c0_135 = arith.constant 0 : index
    %243 = vector.load %arg6[%c64, %c0_135] : memref<512x128xf32, #tpu.memory_space<vmem>>, vector<1x128xf32>
    %244 = vector.broadcast %243 : vector<1x128xf32> to vector<16x128xf32>
    %245 = arith.addf %242, %244 : vector<16x128xf32>
    %246 = vector.shape_cast %245 : vector<16x128xf32> to vector<2x8x128xf32>
    %c32 = arith.constant 32 : index
    %c0_136 = arith.constant 0 : index
    %247 = vector.load %arg6[%c32, %c0_136] : memref<512x128xf32, #tpu.memory_space<vmem>>, vector<32x128xf32>
    %c0_137 = arith.constant 0 : index
    %c0_138 = arith.constant 0 : index
    %248 = vector.load %arg4[%c0_137, %c0_138] : memref<2x1xi32, #tpu.memory_space<vmem>>, vector<2x1xi32>
    %cst_139 = arith.constant 0.000000e+00 : f32
    %249 = vector.broadcast %cst_139 : f32 to vector<2x32xf32>
    %cst_140 = arith.constant 0.000000e+00 : f32
    %250 = vector.broadcast %cst_140 : f32 to vector<2x32xf32>
    %251 = vector.extract_strided_slice %246 {offsets = [0, 0, 0], sizes = [2, 1, 128], strides = [1, 1, 1]} : vector<2x8x128xf32> to vector<2x1x128xf32>
    %252 = vector.shape_cast %251 : vector<2x1x128xf32> to vector<2x128xf32>
    %cst_141 = arith.constant dense<0.000000e+00> : vector<2x128xf32>
    %253 = tpu.matmul %249, %247, %cst_141 {dimension_numbers = #tpu.dot_dimension_numbers<[1], [0], [0], [1], [0, 0, 1, 1], [], []>} : vector<2x32xf32>, vector<32x128xf32>, vector<2x128xf32> -> vector<2x128xf32>
    %254 = arith.addf %252, %253 : vector<2x128xf32>
    %255 = vector.extract_strided_slice %254 {offsets = [0, 0], sizes = [2, 32], strides = [1, 1]} : vector<2x128xf32> to vector<2x32xf32>
    %256 = arith.negf %255 : vector<2x32xf32>
    %257 = math.exp %256 : vector<2x32xf32>
    %cst_142 = arith.constant 1.000000e+00 : f32
    %258 = vector.broadcast %cst_142 : f32 to vector<2x32xf32>
    %259 = arith.addf %258, %257 : vector<2x32xf32>
    %260 = arith.divf %258, %259 : vector<2x32xf32>
    %261 = vector.extract_strided_slice %254 {offsets = [0, 32], sizes = [2, 32], strides = [1, 1]} : vector<2x128xf32> to vector<2x32xf32>
    %262 = arith.negf %261 : vector<2x32xf32>
    %263 = math.exp %262 : vector<2x32xf32>
    %cst_143 = arith.constant 1.000000e+00 : f32
    %264 = vector.broadcast %cst_143 : f32 to vector<2x32xf32>
    %265 = arith.addf %264, %263 : vector<2x32xf32>
    %266 = arith.divf %264, %265 : vector<2x32xf32>
    %267 = vector.extract_strided_slice %254 {offsets = [0, 64], sizes = [2, 32], strides = [1, 1]} : vector<2x128xf32> to vector<2x32xf32>
    %268 = math.tanh %267 : vector<2x32xf32>
    %269 = vector.extract_strided_slice %254 {offsets = [0, 96], sizes = [2, 32], strides = [1, 1]} : vector<2x128xf32> to vector<2x32xf32>
    %270 = arith.negf %269 : vector<2x32xf32>
    %271 = math.exp %270 : vector<2x32xf32>
    %cst_144 = arith.constant 1.000000e+00 : f32
    %272 = vector.broadcast %cst_144 : f32 to vector<2x32xf32>
    %273 = arith.addf %272, %271 : vector<2x32xf32>
    %274 = arith.divf %272, %273 : vector<2x32xf32>
    %275 = arith.mulf %266, %250 : vector<2x32xf32>
    %276 = arith.mulf %260, %268 : vector<2x32xf32>
    %277 = arith.addf %275, %276 : vector<2x32xf32>
    %278 = math.tanh %277 : vector<2x32xf32>
    %279 = arith.mulf %274, %278 : vector<2x32xf32>
    %c0_i32 = arith.constant 0 : i32
    %280 = vector.broadcast %c0_i32 : i32 to vector<2x1xi32>
    %281 = arith.cmpi sgt, %248, %280 : vector<2x1xi32>
    %282 = vector.shape_cast %281 : vector<2x1xi1> to vector<2x1xi1>
    %283 = vector.broadcast %282 : vector<2x1xi1> to vector<2x32xi1>
    %284 = arith.select %283, %279, %249 : vector<2x32xi1>, vector<2x32xf32>
    %285 = vector.shape_cast %281 : vector<2x1xi1> to vector<2x1xi1>
    %286 = vector.broadcast %285 : vector<2x1xi1> to vector<2x32xi1>
    %287 = arith.select %286, %277, %250 : vector<2x32xi1>, vector<2x32xf32>
    %288 = vector.extract_strided_slice %246 {offsets = [0, 1, 0], sizes = [2, 1, 128], strides = [1, 1, 1]} : vector<2x8x128xf32> to vector<2x1x128xf32>
    %289 = vector.shape_cast %288 : vector<2x1x128xf32> to vector<2x128xf32>
    %cst_145 = arith.constant dense<0.000000e+00> : vector<2x128xf32>
    %290 = tpu.matmul %284, %247, %cst_145 {dimension_numbers = #tpu.dot_dimension_numbers<[1], [0], [0], [1], [0, 0, 1, 1], [], []>} : vector<2x32xf32>, vector<32x128xf32>, vector<2x128xf32> -> vector<2x128xf32>
    %291 = arith.addf %289, %290 : vector<2x128xf32>
    %292 = vector.extract_strided_slice %291 {offsets = [0, 0], sizes = [2, 32], strides = [1, 1]} : vector<2x128xf32> to vector<2x32xf32>
    %293 = arith.negf %292 : vector<2x32xf32>
    %294 = math.exp %293 : vector<2x32xf32>
    %cst_146 = arith.constant 1.000000e+00 : f32
    %295 = vector.broadcast %cst_146 : f32 to vector<2x32xf32>
    %296 = arith.addf %295, %294 : vector<2x32xf32>
    %297 = arith.divf %295, %296 : vector<2x32xf32>
    %298 = vector.extract_strided_slice %291 {offsets = [0, 32], sizes = [2, 32], strides = [1, 1]} : vector<2x128xf32> to vector<2x32xf32>
    %299 = arith.negf %298 : vector<2x32xf32>
    %300 = math.exp %299 : vector<2x32xf32>
    %cst_147 = arith.constant 1.000000e+00 : f32
    %301 = vector.broadcast %cst_147 : f32 to vector<2x32xf32>
    %302 = arith.addf %301, %300 : vector<2x32xf32>
    %303 = arith.divf %301, %302 : vector<2x32xf32>
    %304 = vector.extract_strided_slice %291 {offsets = [0, 64], sizes = [2, 32], strides = [1, 1]} : vector<2x128xf32> to vector<2x32xf32>
    %305 = math.tanh %304 : vector<2x32xf32>
    %306 = vector.extract_strided_slice %291 {offsets = [0, 96], sizes = [2, 32], strides = [1, 1]} : vector<2x128xf32> to vector<2x32xf32>
    %307 = arith.negf %306 : vector<2x32xf32>
    %308 = math.exp %307 : vector<2x32xf32>
    %cst_148 = arith.constant 1.000000e+00 : f32
    %309 = vector.broadcast %cst_148 : f32 to vector<2x32xf32>
    %310 = arith.addf %309, %308 : vector<2x32xf32>
    %311 = arith.divf %309, %310 : vector<2x32xf32>
    %312 = arith.mulf %303, %287 : vector<2x32xf32>
    %313 = arith.mulf %297, %305 : vector<2x32xf32>
    %314 = arith.addf %312, %313 : vector<2x32xf32>
    %315 = math.tanh %314 : vector<2x32xf32>
    %316 = arith.mulf %311, %315 : vector<2x32xf32>
    %c1_i32_149 = arith.constant 1 : i32
    %317 = vector.broadcast %c1_i32_149 : i32 to vector<2x1xi32>
    %318 = arith.cmpi sgt, %248, %317 : vector<2x1xi32>
    %319 = vector.shape_cast %318 : vector<2x1xi1> to vector<2x1xi1>
    %320 = vector.broadcast %319 : vector<2x1xi1> to vector<2x32xi1>
    %321 = arith.select %320, %316, %284 : vector<2x32xi1>, vector<2x32xf32>
    %322 = vector.shape_cast %318 : vector<2x1xi1> to vector<2x1xi1>
    %323 = vector.broadcast %322 : vector<2x1xi1> to vector<2x32xi1>
    %324 = arith.select %323, %314, %287 : vector<2x32xi1>, vector<2x32xf32>
    %325 = vector.extract_strided_slice %246 {offsets = [0, 2, 0], sizes = [2, 1, 128], strides = [1, 1, 1]} : vector<2x8x128xf32> to vector<2x1x128xf32>
    %326 = vector.shape_cast %325 : vector<2x1x128xf32> to vector<2x128xf32>
    %cst_150 = arith.constant dense<0.000000e+00> : vector<2x128xf32>
    %327 = tpu.matmul %321, %247, %cst_150 {dimension_numbers = #tpu.dot_dimension_numbers<[1], [0], [0], [1], [0, 0, 1, 1], [], []>} : vector<2x32xf32>, vector<32x128xf32>, vector<2x128xf32> -> vector<2x128xf32>
    %328 = arith.addf %326, %327 : vector<2x128xf32>
    %329 = vector.extract_strided_slice %328 {offsets = [0, 0], sizes = [2, 32], strides = [1, 1]} : vector<2x128xf32> to vector<2x32xf32>
    %330 = arith.negf %329 : vector<2x32xf32>
    %331 = math.exp %330 : vector<2x32xf32>
    %cst_151 = arith.constant 1.000000e+00 : f32
    %332 = vector.broadcast %cst_151 : f32 to vector<2x32xf32>
    %333 = arith.addf %332, %331 : vector<2x32xf32>
    %334 = arith.divf %332, %333 : vector<2x32xf32>
    %335 = vector.extract_strided_slice %328 {offsets = [0, 32], sizes = [2, 32], strides = [1, 1]} : vector<2x128xf32> to vector<2x32xf32>
    %336 = arith.negf %335 : vector<2x32xf32>
    %337 = math.exp %336 : vector<2x32xf32>
    %cst_152 = arith.constant 1.000000e+00 : f32
    %338 = vector.broadcast %cst_152 : f32 to vector<2x32xf32>
    %339 = arith.addf %338, %337 : vector<2x32xf32>
    %340 = arith.divf %338, %339 : vector<2x32xf32>
    %341 = vector.extract_strided_slice %328 {offsets = [0, 64], sizes = [2, 32], strides = [1, 1]} : vector<2x128xf32> to vector<2x32xf32>
    %342 = math.tanh %341 : vector<2x32xf32>
    %343 = vector.extract_strided_slice %328 {offsets = [0, 96], sizes = [2, 32], strides = [1, 1]} : vector<2x128xf32> to vector<2x32xf32>
    %344 = arith.negf %343 : vector<2x32xf32>
    %345 = math.exp %344 : vector<2x32xf32>
    %cst_153 = arith.constant 1.000000e+00 : f32
    %346 = vector.broadcast %cst_153 : f32 to vector<2x32xf32>
    %347 = arith.addf %346, %345 : vector<2x32xf32>
    %348 = arith.divf %346, %347 : vector<2x32xf32>
    %349 = arith.mulf %340, %324 : vector<2x32xf32>
    %350 = arith.mulf %334, %342 : vector<2x32xf32>
    %351 = arith.addf %349, %350 : vector<2x32xf32>
    %352 = math.tanh %351 : vector<2x32xf32>
    %353 = arith.mulf %348, %352 : vector<2x32xf32>
    %c2_i32_154 = arith.constant 2 : i32
    %354 = vector.broadcast %c2_i32_154 : i32 to vector<2x1xi32>
    %355 = arith.cmpi sgt, %248, %354 : vector<2x1xi32>
    %356 = vector.shape_cast %355 : vector<2x1xi1> to vector<2x1xi1>
    %357 = vector.broadcast %356 : vector<2x1xi1> to vector<2x32xi1>
    %358 = arith.select %357, %353, %321 : vector<2x32xi1>, vector<2x32xf32>
    %359 = vector.shape_cast %355 : vector<2x1xi1> to vector<2x1xi1>
    %360 = vector.broadcast %359 : vector<2x1xi1> to vector<2x32xi1>
    %361 = arith.select %360, %351, %324 : vector<2x32xi1>, vector<2x32xf32>
    %362 = vector.extract_strided_slice %246 {offsets = [0, 3, 0], sizes = [2, 1, 128], strides = [1, 1, 1]} : vector<2x8x128xf32> to vector<2x1x128xf32>
    %363 = vector.shape_cast %362 : vector<2x1x128xf32> to vector<2x128xf32>
    %cst_155 = arith.constant dense<0.000000e+00> : vector<2x128xf32>
    %364 = tpu.matmul %358, %247, %cst_155 {dimension_numbers = #tpu.dot_dimension_numbers<[1], [0], [0], [1], [0, 0, 1, 1], [], []>} : vector<2x32xf32>, vector<32x128xf32>, vector<2x128xf32> -> vector<2x128xf32>
    %365 = arith.addf %363, %364 : vector<2x128xf32>
    %366 = vector.extract_strided_slice %365 {offsets = [0, 0], sizes = [2, 32], strides = [1, 1]} : vector<2x128xf32> to vector<2x32xf32>
    %367 = arith.negf %366 : vector<2x32xf32>
    %368 = math.exp %367 : vector<2x32xf32>
    %cst_156 = arith.constant 1.000000e+00 : f32
    %369 = vector.broadcast %cst_156 : f32 to vector<2x32xf32>
    %370 = arith.addf %369, %368 : vector<2x32xf32>
    %371 = arith.divf %369, %370 : vector<2x32xf32>
    %372 = vector.extract_strided_slice %365 {offsets = [0, 32], sizes = [2, 32], strides = [1, 1]} : vector<2x128xf32> to vector<2x32xf32>
    %373 = arith.negf %372 : vector<2x32xf32>
    %374 = math.exp %373 : vector<2x32xf32>
    %cst_157 = arith.constant 1.000000e+00 : f32
    %375 = vector.broadcast %cst_157 : f32 to vector<2x32xf32>
    %376 = arith.addf %375, %374 : vector<2x32xf32>
    %377 = arith.divf %375, %376 : vector<2x32xf32>
    %378 = vector.extract_strided_slice %365 {offsets = [0, 64], sizes = [2, 32], strides = [1, 1]} : vector<2x128xf32> to vector<2x32xf32>
    %379 = math.tanh %378 : vector<2x32xf32>
    %380 = vector.extract_strided_slice %365 {offsets = [0, 96], sizes = [2, 32], strides = [1, 1]} : vector<2x128xf32> to vector<2x32xf32>
    %381 = arith.negf %380 : vector<2x32xf32>
    %382 = math.exp %381 : vector<2x32xf32>
    %cst_158 = arith.constant 1.000000e+00 : f32
    %383 = vector.broadcast %cst_158 : f32 to vector<2x32xf32>
    %384 = arith.addf %383, %382 : vector<2x32xf32>
    %385 = arith.divf %383, %384 : vector<2x32xf32>
    %386 = arith.mulf %377, %361 : vector<2x32xf32>
    %387 = arith.mulf %371, %379 : vector<2x32xf32>
    %388 = arith.addf %386, %387 : vector<2x32xf32>
    %389 = math.tanh %388 : vector<2x32xf32>
    %390 = arith.mulf %385, %389 : vector<2x32xf32>
    %c3_i32 = arith.constant 3 : i32
    %391 = vector.broadcast %c3_i32 : i32 to vector<2x1xi32>
    %392 = arith.cmpi sgt, %248, %391 : vector<2x1xi32>
    %393 = vector.shape_cast %392 : vector<2x1xi1> to vector<2x1xi1>
    %394 = vector.broadcast %393 : vector<2x1xi1> to vector<2x32xi1>
    %395 = arith.select %394, %390, %358 : vector<2x32xi1>, vector<2x32xf32>
    %396 = vector.shape_cast %392 : vector<2x1xi1> to vector<2x1xi1>
    %397 = vector.broadcast %396 : vector<2x1xi1> to vector<2x32xi1>
    %398 = arith.select %397, %388, %361 : vector<2x32xi1>, vector<2x32xf32>
    %399 = vector.extract_strided_slice %246 {offsets = [0, 4, 0], sizes = [2, 1, 128], strides = [1, 1, 1]} : vector<2x8x128xf32> to vector<2x1x128xf32>
    %400 = vector.shape_cast %399 : vector<2x1x128xf32> to vector<2x128xf32>
    %cst_159 = arith.constant dense<0.000000e+00> : vector<2x128xf32>
    %401 = tpu.matmul %395, %247, %cst_159 {dimension_numbers = #tpu.dot_dimension_numbers<[1], [0], [0], [1], [0, 0, 1, 1], [], []>} : vector<2x32xf32>, vector<32x128xf32>, vector<2x128xf32> -> vector<2x128xf32>
    %402 = arith.addf %400, %401 : vector<2x128xf32>
    %403 = vector.extract_strided_slice %402 {offsets = [0, 0], sizes = [2, 32], strides = [1, 1]} : vector<2x128xf32> to vector<2x32xf32>
    %404 = arith.negf %403 : vector<2x32xf32>
    %405 = math.exp %404 : vector<2x32xf32>
    %cst_160 = arith.constant 1.000000e+00 : f32
    %406 = vector.broadcast %cst_160 : f32 to vector<2x32xf32>
    %407 = arith.addf %406, %405 : vector<2x32xf32>
    %408 = arith.divf %406, %407 : vector<2x32xf32>
    %409 = vector.extract_strided_slice %402 {offsets = [0, 32], sizes = [2, 32], strides = [1, 1]} : vector<2x128xf32> to vector<2x32xf32>
    %410 = arith.negf %409 : vector<2x32xf32>
    %411 = math.exp %410 : vector<2x32xf32>
    %cst_161 = arith.constant 1.000000e+00 : f32
    %412 = vector.broadcast %cst_161 : f32 to vector<2x32xf32>
    %413 = arith.addf %412, %411 : vector<2x32xf32>
    %414 = arith.divf %412, %413 : vector<2x32xf32>
    %415 = vector.extract_strided_slice %402 {offsets = [0, 64], sizes = [2, 32], strides = [1, 1]} : vector<2x128xf32> to vector<2x32xf32>
    %416 = math.tanh %415 : vector<2x32xf32>
    %417 = vector.extract_strided_slice %402 {offsets = [0, 96], sizes = [2, 32], strides = [1, 1]} : vector<2x128xf32> to vector<2x32xf32>
    %418 = arith.negf %417 : vector<2x32xf32>
    %419 = math.exp %418 : vector<2x32xf32>
    %cst_162 = arith.constant 1.000000e+00 : f32
    %420 = vector.broadcast %cst_162 : f32 to vector<2x32xf32>
    %421 = arith.addf %420, %419 : vector<2x32xf32>
    %422 = arith.divf %420, %421 : vector<2x32xf32>
    %423 = arith.mulf %414, %398 : vector<2x32xf32>
    %424 = arith.mulf %408, %416 : vector<2x32xf32>
    %425 = arith.addf %423, %424 : vector<2x32xf32>
    %426 = math.tanh %425 : vector<2x32xf32>
    %427 = arith.mulf %422, %426 : vector<2x32xf32>
    %c4_i32_163 = arith.constant 4 : i32
    %428 = vector.broadcast %c4_i32_163 : i32 to vector<2x1xi32>
    %429 = arith.cmpi sgt, %248, %428 : vector<2x1xi32>
    %430 = vector.shape_cast %429 : vector<2x1xi1> to vector<2x1xi1>
    %431 = vector.broadcast %430 : vector<2x1xi1> to vector<2x32xi1>
    %432 = arith.select %431, %427, %395 : vector<2x32xi1>, vector<2x32xf32>
    %433 = vector.shape_cast %429 : vector<2x1xi1> to vector<2x1xi1>
    %434 = vector.broadcast %433 : vector<2x1xi1> to vector<2x32xi1>
    %435 = arith.select %434, %425, %398 : vector<2x32xi1>, vector<2x32xf32>
    %436 = vector.extract_strided_slice %246 {offsets = [0, 5, 0], sizes = [2, 1, 128], strides = [1, 1, 1]} : vector<2x8x128xf32> to vector<2x1x128xf32>
    %437 = vector.shape_cast %436 : vector<2x1x128xf32> to vector<2x128xf32>
    %cst_164 = arith.constant dense<0.000000e+00> : vector<2x128xf32>
    %438 = tpu.matmul %432, %247, %cst_164 {dimension_numbers = #tpu.dot_dimension_numbers<[1], [0], [0], [1], [0, 0, 1, 1], [], []>} : vector<2x32xf32>, vector<32x128xf32>, vector<2x128xf32> -> vector<2x128xf32>
    %439 = arith.addf %437, %438 : vector<2x128xf32>
    %440 = vector.extract_strided_slice %439 {offsets = [0, 0], sizes = [2, 32], strides = [1, 1]} : vector<2x128xf32> to vector<2x32xf32>
    %441 = arith.negf %440 : vector<2x32xf32>
    %442 = math.exp %441 : vector<2x32xf32>
    %cst_165 = arith.constant 1.000000e+00 : f32
    %443 = vector.broadcast %cst_165 : f32 to vector<2x32xf32>
    %444 = arith.addf %443, %442 : vector<2x32xf32>
    %445 = arith.divf %443, %444 : vector<2x32xf32>
    %446 = vector.extract_strided_slice %439 {offsets = [0, 32], sizes = [2, 32], strides = [1, 1]} : vector<2x128xf32> to vector<2x32xf32>
    %447 = arith.negf %446 : vector<2x32xf32>
    %448 = math.exp %447 : vector<2x32xf32>
    %cst_166 = arith.constant 1.000000e+00 : f32
    %449 = vector.broadcast %cst_166 : f32 to vector<2x32xf32>
    %450 = arith.addf %449, %448 : vector<2x32xf32>
    %451 = arith.divf %449, %450 : vector<2x32xf32>
    %452 = vector.extract_strided_slice %439 {offsets = [0, 64], sizes = [2, 32], strides = [1, 1]} : vector<2x128xf32> to vector<2x32xf32>
    %453 = math.tanh %452 : vector<2x32xf32>
    %454 = vector.extract_strided_slice %439 {offsets = [0, 96], sizes = [2, 32], strides = [1, 1]} : vector<2x128xf32> to vector<2x32xf32>
    %455 = arith.negf %454 : vector<2x32xf32>
    %456 = math.exp %455 : vector<2x32xf32>
    %cst_167 = arith.constant 1.000000e+00 : f32
    %457 = vector.broadcast %cst_167 : f32 to vector<2x32xf32>
    %458 = arith.addf %457, %456 : vector<2x32xf32>
    %459 = arith.divf %457, %458 : vector<2x32xf32>
    %460 = arith.mulf %451, %435 : vector<2x32xf32>
    %461 = arith.mulf %445, %453 : vector<2x32xf32>
    %462 = arith.addf %460, %461 : vector<2x32xf32>
    %463 = math.tanh %462 : vector<2x32xf32>
    %464 = arith.mulf %459, %463 : vector<2x32xf32>
    %c5_i32 = arith.constant 5 : i32
    %465 = vector.broadcast %c5_i32 : i32 to vector<2x1xi32>
    %466 = arith.cmpi sgt, %248, %465 : vector<2x1xi32>
    %467 = vector.shape_cast %466 : vector<2x1xi1> to vector<2x1xi1>
    %468 = vector.broadcast %467 : vector<2x1xi1> to vector<2x32xi1>
    %469 = arith.select %468, %464, %432 : vector<2x32xi1>, vector<2x32xf32>
    %470 = vector.shape_cast %466 : vector<2x1xi1> to vector<2x1xi1>
    %471 = vector.broadcast %470 : vector<2x1xi1> to vector<2x32xi1>
    %472 = arith.select %471, %462, %435 : vector<2x32xi1>, vector<2x32xf32>
    %473 = vector.extract_strided_slice %246 {offsets = [0, 6, 0], sizes = [2, 1, 128], strides = [1, 1, 1]} : vector<2x8x128xf32> to vector<2x1x128xf32>
    %474 = vector.shape_cast %473 : vector<2x1x128xf32> to vector<2x128xf32>
    %cst_168 = arith.constant dense<0.000000e+00> : vector<2x128xf32>
    %475 = tpu.matmul %469, %247, %cst_168 {dimension_numbers = #tpu.dot_dimension_numbers<[1], [0], [0], [1], [0, 0, 1, 1], [], []>} : vector<2x32xf32>, vector<32x128xf32>, vector<2x128xf32> -> vector<2x128xf32>
    %476 = arith.addf %474, %475 : vector<2x128xf32>
    %477 = vector.extract_strided_slice %476 {offsets = [0, 0], sizes = [2, 32], strides = [1, 1]} : vector<2x128xf32> to vector<2x32xf32>
    %478 = arith.negf %477 : vector<2x32xf32>
    %479 = math.exp %478 : vector<2x32xf32>
    %cst_169 = arith.constant 1.000000e+00 : f32
    %480 = vector.broadcast %cst_169 : f32 to vector<2x32xf32>
    %481 = arith.addf %480, %479 : vector<2x32xf32>
    %482 = arith.divf %480, %481 : vector<2x32xf32>
    %483 = vector.extract_strided_slice %476 {offsets = [0, 32], sizes = [2, 32], strides = [1, 1]} : vector<2x128xf32> to vector<2x32xf32>
    %484 = arith.negf %483 : vector<2x32xf32>
    %485 = math.exp %484 : vector<2x32xf32>
    %cst_170 = arith.constant 1.000000e+00 : f32
    %486 = vector.broadcast %cst_170 : f32 to vector<2x32xf32>
    %487 = arith.addf %486, %485 : vector<2x32xf32>
    %488 = arith.divf %486, %487 : vector<2x32xf32>
    %489 = vector.extract_strided_slice %476 {offsets = [0, 64], sizes = [2, 32], strides = [1, 1]} : vector<2x128xf32> to vector<2x32xf32>
    %490 = math.tanh %489 : vector<2x32xf32>
    %491 = vector.extract_strided_slice %476 {offsets = [0, 96], sizes = [2, 32], strides = [1, 1]} : vector<2x128xf32> to vector<2x32xf32>
    %492 = arith.negf %491 : vector<2x32xf32>
    %493 = math.exp %492 : vector<2x32xf32>
    %cst_171 = arith.constant 1.000000e+00 : f32
    %494 = vector.broadcast %cst_171 : f32 to vector<2x32xf32>
    %495 = arith.addf %494, %493 : vector<2x32xf32>
    %496 = arith.divf %494, %495 : vector<2x32xf32>
    %497 = arith.mulf %488, %472 : vector<2x32xf32>
    %498 = arith.mulf %482, %490 : vector<2x32xf32>
    %499 = arith.addf %497, %498 : vector<2x32xf32>
    %500 = math.tanh %499 : vector<2x32xf32>
    %501 = arith.mulf %496, %500 : vector<2x32xf32>
    %c6_i32 = arith.constant 6 : i32
    %502 = vector.broadcast %c6_i32 : i32 to vector<2x1xi32>
    %503 = arith.cmpi sgt, %248, %502 : vector<2x1xi32>
    %504 = vector.shape_cast %503 : vector<2x1xi1> to vector<2x1xi1>
    %505 = vector.broadcast %504 : vector<2x1xi1> to vector<2x32xi1>
    %506 = arith.select %505, %501, %469 : vector<2x32xi1>, vector<2x32xf32>
    %507 = vector.shape_cast %503 : vector<2x1xi1> to vector<2x1xi1>
    %508 = vector.broadcast %507 : vector<2x1xi1> to vector<2x32xi1>
    %509 = arith.select %508, %499, %472 : vector<2x32xi1>, vector<2x32xf32>
    %510 = vector.extract_strided_slice %246 {offsets = [0, 7, 0], sizes = [2, 1, 128], strides = [1, 1, 1]} : vector<2x8x128xf32> to vector<2x1x128xf32>
    %511 = vector.shape_cast %510 : vector<2x1x128xf32> to vector<2x128xf32>
    %cst_172 = arith.constant dense<0.000000e+00> : vector<2x128xf32>
    %512 = tpu.matmul %506, %247, %cst_172 {dimension_numbers = #tpu.dot_dimension_numbers<[1], [0], [0], [1], [0, 0, 1, 1], [], []>} : vector<2x32xf32>, vector<32x128xf32>, vector<2x128xf32> -> vector<2x128xf32>
    %513 = arith.addf %511, %512 : vector<2x128xf32>
    %514 = vector.extract_strided_slice %513 {offsets = [0, 0], sizes = [2, 32], strides = [1, 1]} : vector<2x128xf32> to vector<2x32xf32>
    %515 = arith.negf %514 : vector<2x32xf32>
    %516 = math.exp %515 : vector<2x32xf32>
    %cst_173 = arith.constant 1.000000e+00 : f32
    %517 = vector.broadcast %cst_173 : f32 to vector<2x32xf32>
    %518 = arith.addf %517, %516 : vector<2x32xf32>
    %519 = arith.divf %517, %518 : vector<2x32xf32>
    %520 = vector.extract_strided_slice %513 {offsets = [0, 32], sizes = [2, 32], strides = [1, 1]} : vector<2x128xf32> to vector<2x32xf32>
    %521 = arith.negf %520 : vector<2x32xf32>
    %522 = math.exp %521 : vector<2x32xf32>
    %cst_174 = arith.constant 1.000000e+00 : f32
    %523 = vector.broadcast %cst_174 : f32 to vector<2x32xf32>
    %524 = arith.addf %523, %522 : vector<2x32xf32>
    %525 = arith.divf %523, %524 : vector<2x32xf32>
    %526 = vector.extract_strided_slice %513 {offsets = [0, 64], sizes = [2, 32], strides = [1, 1]} : vector<2x128xf32> to vector<2x32xf32>
    %527 = math.tanh %526 : vector<2x32xf32>
    %528 = vector.extract_strided_slice %513 {offsets = [0, 96], sizes = [2, 32], strides = [1, 1]} : vector<2x128xf32> to vector<2x32xf32>
    %529 = arith.negf %528 : vector<2x32xf32>
    %530 = math.exp %529 : vector<2x32xf32>
    %cst_175 = arith.constant 1.000000e+00 : f32
    %531 = vector.broadcast %cst_175 : f32 to vector<2x32xf32>
    %532 = arith.addf %531, %530 : vector<2x32xf32>
    %533 = arith.divf %531, %532 : vector<2x32xf32>
    %534 = arith.mulf %525, %509 : vector<2x32xf32>
    %535 = arith.mulf %519, %527 : vector<2x32xf32>
    %536 = arith.addf %534, %535 : vector<2x32xf32>
    %537 = math.tanh %536 : vector<2x32xf32>
    %538 = arith.mulf %533, %537 : vector<2x32xf32>
    %c7_i32 = arith.constant 7 : i32
    %539 = vector.broadcast %c7_i32 : i32 to vector<2x1xi32>
    %540 = arith.cmpi sgt, %248, %539 : vector<2x1xi32>
    %541 = vector.shape_cast %540 : vector<2x1xi1> to vector<2x1xi1>
    %542 = vector.broadcast %541 : vector<2x1xi1> to vector<2x32xi1>
    %543 = arith.select %542, %538, %506 : vector<2x32xi1>, vector<2x32xf32>
    %c328 = arith.constant 328 : index
    %c0_176 = arith.constant 0 : index
    %544 = vector.load %arg6[%c328, %c0_176] : memref<512x128xf32, #tpu.memory_space<vmem>>, vector<32x64xf32>
    %cst_177 = arith.constant dense<0.000000e+00> : vector<2x64xf32>
    %545 = tpu.matmul %543, %544, %cst_177 {dimension_numbers = #tpu.dot_dimension_numbers<[1], [0], [0], [1], [0, 0, 1, 1], [], []>} : vector<2x32xf32>, vector<32x64xf32>, vector<2x64xf32> -> vector<2x64xf32>
    %546 = vector.extract_strided_slice %545 {offsets = [0, 0], sizes = [2, 32], strides = [1, 1]} : vector<2x64xf32> to vector<2x32xf32>
    %547 = vector.extract_strided_slice %545 {offsets = [0, 32], sizes = [2, 32], strides = [1, 1]} : vector<2x64xf32> to vector<2x32xf32>
    %548 = vector.shape_cast %232 : vector<8x32xf32> to vector<2x4x32xf32>
    %549 = vector.shape_cast %546 : vector<2x32xf32> to vector<2x1x32xf32>
    %550 = vector.broadcast %549 : vector<2x1x32xf32> to vector<2x4x32xf32>
    %551 = arith.addf %548, %550 : vector<2x4x32xf32>
    %c360 = arith.constant 360 : index
    %c0_178 = arith.constant 0 : index
    %552 = vector.load %arg6[%c360, %c0_178] : memref<512x128xf32, #tpu.memory_space<vmem>>, vector<1x32xf32>
    %553 = vector.shape_cast %552 : vector<1x32xf32> to vector<1x1x32xf32>
    %554 = vector.broadcast %553 : vector<1x1x32xf32> to vector<2x4x32xf32>
    %555 = arith.addf %551, %554 : vector<2x4x32xf32>
    %cst_179 = arith.constant 0.000000e+00 : f32
    %556 = vector.broadcast %cst_179 : f32 to vector<2x4x32xf32>
    %557 = arith.maximumf %555, %556 : vector<2x4x32xf32>
    %c368 = arith.constant 368 : index
    %c0_180 = arith.constant 0 : index
    %558 = vector.load %arg6[%c368, %c0_180] : memref<512x128xf32, #tpu.memory_space<vmem>>, vector<1x32xf32>
    %559 = vector.shape_cast %558 : vector<1x32xf32> to vector<1x1x32xf32>
    %560 = vector.broadcast %559 : vector<1x1x32xf32> to vector<2x4x32xf32>
    %561 = arith.mulf %557, %560 : vector<2x4x32xf32>
    %cst_181 = arith.constant dense<0.000000e+00> : vector<2x4xf32>
    %562 = vector.multi_reduction <add>, %561, %cst_181 [2] : vector<2x4x32xf32> to vector<2x4xf32>
    %c376 = arith.constant 376 : index
    %c0_182 = arith.constant 0 : index
    %563 = vector.load %arg6[%c376, %c0_182] : memref<512x128xf32, #tpu.memory_space<vmem>>, vector<1x1xf32>
    %564 = vector.broadcast %563 : vector<1x1xf32> to vector<2x4xf32>
    %565 = arith.addf %562, %564 : vector<2x4xf32>
    %566 = tpu.iota {dimensions = array<i32: 1>} : vector<2x4xi32>
    %c0_183 = arith.constant 0 : index
    %c0_184 = arith.constant 0 : index
    %567 = vector.load %arg5[%c0_183, %c0_184] : memref<2x1xi32, #tpu.memory_space<vmem>>, vector<2x1xi32>
    %568 = vector.broadcast %567 : vector<2x1xi32> to vector<2x4xi32>
    %569 = arith.cmpi slt, %566, %568 : vector<2x4xi32>
    %cst_185 = arith.constant -1.000000e+30 : f32
    %570 = vector.broadcast %cst_185 : f32 to vector<2x4xf32>
    %571 = arith.select %569, %565, %570 : vector<2x4xi1>, vector<2x4xf32>
    %cst_186 = arith.constant dense<0xFF800000> : vector<2xf32>
    %572 = vector.multi_reduction <maximumf>, %571, %cst_186 [1] : vector<2x4xf32> to vector<2xf32>
    %573 = vector.shape_cast %572 : vector<2xf32> to vector<2x1xf32>
    %574 = vector.broadcast %573 : vector<2x1xf32> to vector<2x4xf32>
    %575 = arith.subf %571, %574 : vector<2x4xf32>
    %576 = math.exp %575 : vector<2x4xf32>
    %cst_187 = arith.constant dense<0.000000e+00> : vector<2xf32>
    %577 = vector.multi_reduction <add>, %576, %cst_187 [1] : vector<2x4xf32> to vector<2xf32>
    %578 = vector.shape_cast %577 : vector<2xf32> to vector<2x1xf32>
    %579 = vector.broadcast %578 : vector<2x1xf32> to vector<2x4xf32>
    %580 = arith.divf %576, %579 : vector<2x4xf32>
    %581 = vector.shape_cast %580 : vector<2x4xf32> to vector<2x4x1xf32>
    %582 = vector.shape_cast %233 : vector<8x32xf32> to vector<2x4x32xf32>
    %583 = vector.broadcast %581 : vector<2x4x1xf32> to vector<2x4x32xf32>
    %584 = arith.mulf %583, %582 : vector<2x4x32xf32>
    %cst_188 = arith.constant dense<0.000000e+00> : vector<2x32xf32>
    %585 = vector.multi_reduction <add>, %584, %cst_188 [1] : vector<2x4x32xf32> to vector<2x32xf32>
    %c384 = arith.constant 384 : index
    %c0_189 = arith.constant 0 : index
    %586 = vector.load %arg6[%c384, %c0_189] : memref<512x128xf32, #tpu.memory_space<vmem>>, vector<1x32xf32>
    %587 = vector.broadcast %586 : vector<1x32xf32> to vector<2x32xf32>
    %588 = arith.addf %547, %587 : vector<2x32xf32>
    %cst_190 = arith.constant 0.000000e+00 : f32
    %589 = vector.broadcast %cst_190 : f32 to vector<2x32xf32>
    %590 = arith.maximumf %588, %589 : vector<2x32xf32>
    %c392 = arith.constant 392 : index
    %c0_191 = arith.constant 0 : index
    %591 = vector.load %arg6[%c392, %c0_191] : memref<512x128xf32, #tpu.memory_space<vmem>>, vector<1x32xf32>
    %592 = vector.broadcast %591 : vector<1x32xf32> to vector<2x32xf32>
    %593 = arith.addf %585, %592 : vector<2x32xf32>
    %cst_192 = arith.constant 0.000000e+00 : f32
    %594 = vector.broadcast %cst_192 : f32 to vector<2x32xf32>
    %595 = arith.maximumf %593, %594 : vector<2x32xf32>
    %596 = arith.mulf %590, %595 : vector<2x32xf32>
    %c400 = arith.constant 400 : index
    %c0_193 = arith.constant 0 : index
    %597 = vector.load %arg6[%c400, %c0_193] : memref<512x128xf32, #tpu.memory_space<vmem>>, vector<32x64xf32>
    %cst_194 = arith.constant dense<0.000000e+00> : vector<2x64xf32>
    %598 = tpu.matmul %596, %597, %cst_194 {dimension_numbers = #tpu.dot_dimension_numbers<[1], [0], [0], [1], [0, 0, 1, 1], [], []>} : vector<2x32xf32>, vector<32x64xf32>, vector<2x64xf32> -> vector<2x64xf32>
    %c432 = arith.constant 432 : index
    %c0_195 = arith.constant 0 : index
    %599 = vector.load %arg6[%c432, %c0_195] : memref<512x128xf32, #tpu.memory_space<vmem>>, vector<1x64xf32>
    %600 = vector.broadcast %599 : vector<1x64xf32> to vector<2x64xf32>
    %601 = arith.addf %598, %600 : vector<2x64xf32>
    %cst_196 = arith.constant 0.000000e+00 : f32
    %602 = vector.broadcast %cst_196 : f32 to vector<2x64xf32>
    %603 = arith.maximumf %601, %602 : vector<2x64xf32>
    %c440 = arith.constant 440 : index
    %c0_197 = arith.constant 0 : index
    %604 = vector.load %arg6[%c440, %c0_197] : memref<512x128xf32, #tpu.memory_space<vmem>>, vector<64x10xf32>
    %cst_198 = arith.constant dense<0.000000e+00> : vector<2x10xf32>
    %605 = tpu.matmul %603, %604, %cst_198 {dimension_numbers = #tpu.dot_dimension_numbers<[1], [0], [0], [1], [0, 0, 1, 1], [], []>} : vector<2x64xf32>, vector<64x10xf32>, vector<2x10xf32> -> vector<2x10xf32>
    %c504 = arith.constant 504 : index
    %c0_199 = arith.constant 0 : index
    %606 = vector.load %arg6[%c504, %c0_199] : memref<512x128xf32, #tpu.memory_space<vmem>>, vector<1x10xf32>
    %607 = vector.broadcast %606 : vector<1x10xf32> to vector<2x10xf32>
    %608 = arith.addf %605, %607 : vector<2x10xf32>
    %c0_200 = arith.constant 0 : index
    %c0_201 = arith.constant 0 : index
    %609 = vector.load %arg7[%c0_200, %c0_201] : memref<2x10xf32, #tpu.memory_space<vmem>>, vector<2x10xf32>
    tpu.vector_store %arg7[%c0_200, %c0_201], %608 {strides = array<i32>} : memref<2x10xf32, #tpu.memory_space<vmem>>, vector<2x10xf32>,
    return
  }
}

</mosaic_0001>

<llo_original>
// kernel: tile.9
$region0: #{tile.9}
  %s0 = inlined_call_operand.vmem [shape: f32[5,8,16,16], index: 0, kind: input, shape index: {}]
  %s1 = inlined_call_operand.vmem [shape: f32[5,8,256], index: 1, kind: output, shape index: {}]
  %v2 = vld [vmem:[%s0] ss:$8 sm:$0xf]
  %v3 = vld [vmem:[%s0] ss:$8 sm:$0xf0]
  %vm4 = vcmask 1047556
  %v5 = vsel %vm4, %v3, %v2
  %vm6 = vcmask 130048
  %7 = vst.msk [vmem:[%s1] ss:$8 sm:$0x3] %vm6, %v5
  %s8 = scalar_lea.vmem %s1, 4294967281
  %9 = vst.msk [vmem:[%s8] ss:$8 sm:$0xc] %vm6, %v5
  %s10 = scalar_lea.vmem %s1, 4294967266
  %11 = vst.msk [vmem:[%s10] ss:$8 sm:$0x30] %vm6, %v5
  %s12 = scalar_lea.vmem %s1, 4294967251
  %13 = vst.msk [vmem:[%s12] ss:$8 sm:$0xc0] %vm6, %v5
  %s14 = scalar_lea.vmem %s0, 64
  %v15 = vld [vmem:[%s14] ss:$8 sm:$0xf]
  %s16 = scalar_lea.vmem %s0, 64
  %v17 = vld [vmem:[%s16] ss:$8 sm:$0xf0]
  %vm18 = vcmask 1047556
  %v19 = vsel %vm18, %v17, %v15
  %vm20 = vcmask 130048
  %s21 = scalar_lea.vmem %s1, 4
  %22 = vst.msk [vmem:[%s21] ss:$8 sm:$0x3] %vm20, %v19
  %s23 = scalar_lea.vmem %s1, 4294967285
  %24 = vst.msk [vmem:[%s23] ss:$8 sm:$0xc] %vm20, %v19
  %s25 = scalar_lea.vmem %s1, 4294967270
  %26 = vst.msk [vmem:[%s25] ss:$8 sm:$0x30] %vm20, %v19
  %s27 = scalar_lea.vmem %s1, 4294967255
  %28 = vst.msk [vmem:[%s27] ss:$8 sm:$0xc0] %vm20, %v19
  %s29 = scalar_lea.vmem %s0, 128
  %v30 = vld [vmem:[%s29] ss:$8 sm:$0xf]
  %s31 = scalar_lea.vmem %s0, 128
  %v32 = vld [vmem:[%s31] ss:$8 sm:$0xf0]
  %vm33 = vcmask 1047556
  %v34 = vsel %vm33, %v32, %v30
  %vm35 = vcmask 130048
  %s36 = scalar_lea.vmem %s1, 16
  %37 = vst.msk [vmem:[%s36] ss:$8 sm:$0x3] %vm35, %v34
  %s38 = scalar_lea.vmem %s1, 1
  %39 = vst.msk [vmem:[%s38] ss:$8 sm:$0xc] %vm35, %v34
  %s40 = scalar_lea.vmem %s1, 4294967282
  %41 = vst.msk [vmem:[%s40] ss:$8 sm:$0x30] %vm35, %v34
  %s42 = scalar_lea.vmem %s1, 4294967267
  %43 = vst.msk [vmem:[%s42] ss:$8 sm:$0xc0] %vm35, %v34
  %s44 = scalar_lea.vmem %s0, 192
  %v45 = vld [vmem:[%s44] ss:$8 sm:$0xf]
  %s46 = scalar_lea.vmem %s0, 192
  %v47 = vld [vmem:[%s46] ss:$8 sm:$0xf0]
  %vm48 = vcmask 1047556
  %v49 = vsel %vm48, %v47, %v45
  %vm50 = vcmask 130048
  %s51 = scalar_lea.vmem %s1, 20
  %52 = vst.msk [vmem:[%s51] ss:$8 sm:$0x3] %vm50, %v49
  %s53 = scalar_lea.vmem %s1, 5
  %54 = vst.msk [vmem:[%s53] ss:$8 sm:$0xc] %vm50, %v49
  %s55 = scalar_lea.vmem %s1, 4294967286
  %56 = vst.msk [vmem:[%s55] ss:$8 sm:$0x30] %vm50, %v49
  %s57 = scalar_lea.vmem %s1, 4294967271
  %58 = vst.msk [vmem:[%s57] ss:$8 sm:$0xc0] %vm50, %v49
  %s59 = scalar_lea.vmem %s0, 256
  %v60 = vld [vmem:[%s59] ss:$8 sm:$0xf]
  %s61 = scalar_lea.vmem %s0, 256
  %v62 = vld [vmem:[%s61] ss:$8 sm:$0xf0]
  %vm63 = vcmask 1047556
  %v64 = vsel %vm63, %v62, %v60
  %vm65 = vcmask 130048
  %s66 = scalar_lea.vmem %s1, 32
  %67 = vst.msk [vmem:[%s66] ss:$8 sm:$0x3] %vm65, %v64
  %s68 = scalar_lea.vmem %s1, 17
  %69 = vst.msk [vmem:[%s68] ss:$8 sm:$0xc] %vm65, %v64
  %s70 = scalar_lea.vmem %s1, 2
  %71 = vst.msk [vmem:[%s70] ss:$8 sm:$0x30] %vm65, %v64
  %s72 = scalar_lea.vmem %s1, 4294967283
  %73 = vst.msk [vmem:[%s72] ss:$8 sm:$0xc0] %vm65, %v64
  %s74 = scalar_lea.vmem %s0, 320
  %v75 = vld [vmem:[%s74] ss:$8 sm:$0xf]
  %s76 = scalar_lea.vmem %s0, 320
  %v77 = vld [vmem:[%s76] ss:$8 sm:$0xf0]
  %vm78 = vcmask 1047556
  %v79 = vsel %vm78, %v77, %v75
  %vm80 = vcmask 130048
  %s81 = scalar_lea.vmem %s1, 36
  %82 = vst.msk [vmem:[%s81] ss:$8 sm:$0x3] %vm80, %v79
  %s83 = scalar_lea.vmem %s1, 21
  %84 = vst.msk [vmem:[%s83] ss:$8 sm:$0xc] %vm80, %v79
  %s85 = scalar_lea.vmem %s1, 6
  %86 = vst.msk [vmem:[%s85] ss:$8 sm:$0x30] %vm80, %v79
  %s87 = scalar_lea.vmem %s1, 4294967287
  %88 = vst.msk [vmem:[%s87] ss:$8 sm:$0xc0] %vm80, %v79
  %s89 = scalar_lea.vmem %s0, 384
  %v90 = vld [vmem:[%s89] ss:$8 sm:$0xf]
  %s91 = scalar_lea.vmem %s0, 384
  %v92 = vld [vmem:[%s91] ss:$8 sm:$0xf0]
  %vm93 = vcmask 1047556
  %v94 = vsel %vm93, %v92, %v90
  %vm95 = vcmask 130048
  %s96 = scalar_lea.vmem %s1, 48
  %97 = vst.msk [vmem:[%s96] ss:$8 sm:$0x3] %vm95, %v94
  %s98 = scalar_lea.vmem %s1, 33
  %99 = vst.msk [vmem:[%s98] ss:$8 sm:$0xc] %vm95, %v94
  %s100 = scalar_lea.vmem %s1, 18
  %101 = vst.msk [vmem:[%s100] ss:$8 sm:$0x30] %vm95, %v94
  %s102 = scalar_lea.vmem %s1, 3
  %103 = vst.msk [vmem:[%s102] ss:$8 sm:$0xc0] %vm95, %v94
  %s104 = scalar_lea.vmem %s0, 448
  %v105 = vld [vmem:[%s104] ss:$8 sm:$0xf]
  %s106 = scalar_lea.vmem %s0, 448
  %v107 = vld [vmem:[%s106] ss:$8 sm:$0xf0]
  %vm108 = vcmask 1047556
  %v109 = vsel %vm108, %v107, %v105
  %vm110 = vcmask 130048
  %s111 = scalar_lea.vmem %s1, 52
  %112 = vst.msk [vmem:[%s111] ss:$8 sm:$0x3] %vm110, %v109
  %s113 = scalar_lea.vmem %s1, 37
  %114 = vst.msk [vmem:[%s113] ss:$8 sm:$0xc] %vm110, %v109
  %s115 = scalar_lea.vmem %s1, 22
  %116 = vst.msk [vmem:[%s115] ss:$8 sm:$0x30] %vm110, %v109
  %s117 = scalar_lea.vmem %s1, 7
  %118 = vst.msk [vmem:[%s117] ss:$8 sm:$0xc0] %vm110, %v109
  %s119 = scalar_lea.vmem %s0, 512
  %v120 = vld [vmem:[%s119] ss:$8 sm:$0xf]
  %s121 = scalar_lea.vmem %s0, 512
  %v122 = vld [vmem:[%s121] ss:$8 sm:$0xf0]
  %vm123 = vcmask 1047556
  %v124 = vsel %vm123, %v122, %v120
  %vm125 = vcmask 130048
  %s126 = scalar_lea.vmem %s1, 64
  %127 = vst.msk [vmem:[%s126] ss:$8 sm:$0x3] %vm125, %v124
  %s128 = scalar_lea.vmem %s1, 49
  %129 = vst.msk [vmem:[%s128] ss:$8 sm:$0xc] %vm125, %v124
  %s130 = scalar_lea.vmem %s1, 34
  %131 = vst.msk [vmem:[%s130] ss:$8 sm:$0x30] %vm125, %v124
  %s132 = scalar_lea.vmem %s1, 19
  %133 = vst.msk [vmem:[%s132] ss:$8 sm:$0xc0] %vm125, %v124
  %s134 = scalar_lea.vmem %s0, 576
  %v135 = vld [vmem:[%s134] ss:$8 sm:$0xf]
  %s136 = scalar_lea.vmem %s0, 576
  %v137 = vld [vmem:[%s136] ss:$8 sm:$0xf0]
  %vm138 = vcmask 1047556
  %v139 = vsel %vm138, %v137, %v135
  %vm140 = vcmask 130048
  %s141 = scalar_lea.vmem %s1, 68
  %142 = vst.msk [vmem:[%s141] ss:$8 sm:$0x3] %vm140, %v139
  %s143 = scalar_lea.vmem %s1, 53
  %144 = vst.msk [vmem:[%s143] ss:$8 sm:$0xc] %vm140, %v139
  %s145 = scalar_lea.vmem %s1, 38
  %146 = vst.msk [vmem:[%s145] ss:$8 sm:$0x30] %vm140, %v139
  %s147 = scalar_lea.vmem %s1, 23
  %148 = vst.msk [vmem:[%s147] ss:$8 sm:$0xc0] %vm140, %v139
  %s149 = scalar_lea.vmem %s0, 7
  %s150 = smov 3
  %v151 = vld [vmem:[%s149] ss:$16 sm:%s150]
  %s152 = scalar_lea.vmem %s0, 7
  %s153 = smov 12
  %v154 = vld [vmem:[%s152] ss:$16 sm:%s153]
  %vm155 = vcmask 1043458
  %v156 = vsel %vm155, %v154, %v151
  %s157 = scalar_lea.vmem %s0, 7
  %s158 = smov 48
  %v159 = vld [vmem:[%s157] ss:$16 sm:%s158]
  %vm160 = vcmask 1045508
  %v161 = vsel %vm160, %v159, %v156
  %s162 = scalar_lea.vmem %s0, 7
  %s163 = smov 192
  %v164 = vld [vmem:[%s162] ss:$16 sm:%s163]
  %vm165 = vcmask 1047558
  %v166 = vsel %vm165, %v164, %v161
  %167 = vrot.lane.b32.xlu0 %v166, 112
  %v168 = vpop.permute.xlu0 %167
  %vm169 = vcmask 1048448
  %170 = vst.msk [vmem:[%s1] sm:$0xff] %vm169, %v168
  %s171 = scalar_lea.vmem %s0, 263
  %s172 = smov 3
  %v173 = vld [vmem:[%s171] ss:$16 sm:%s172]
  %s174 = scalar_lea.vmem %s0, 263
  %s175 = smov 12
  %v176 = vld [vmem:[%s174] ss:$16 sm:%s175]
  %vm177 = vcmask 1043458
  %v178 = vsel %vm177, %v176, %v173
  %s179 = scalar_lea.vmem %s0, 263
  %s180 = smov 48
  %v181 = vld [vmem:[%s179] ss:$16 sm:%s180]
  %vm182 = vcmask 1045508
  %v183 = vsel %vm182, %v181, %v178
  %s184 = scalar_lea.vmem %s0, 263
  %s185 = smov 192
  %v186 = vld [vmem:[%s184] ss:$16 sm:%s185]
  %vm187 = vcmask 1047558
  %v188 = vsel %vm187, %v186, %v183
  %189 = vrot.lane.b32.xlu0 %v188, 112
  %v190 = vpop.permute.xlu0 %189
  %vm191 = vcmask 1048448
  %s192 = scalar_lea.vmem %s1, 32
  %193 = vst.msk [vmem:[%s192] sm:$0xff] %vm191, %v190
  %s194 = scalar_lea.vmem %s0, 519
  %s195 = smov 3
  %v196 = vld [vmem:[%s194] ss:$16 sm:%s195]
  %s197 = scalar_lea.vmem %s0, 519
  %s198 = smov 12
  %v199 = vld [vmem:[%s197] ss:$16 sm:%s198]
  %vm200 = vcmask 1043458
  %v201 = vsel %vm200, %v199, %v196
  %s202 = scalar_lea.vmem %s0, 519
  %s203 = smov 48
  %v204 = vld [vmem:[%s202] ss:$16 sm:%s203]
  %vm205 = vcmask 1045508
  %v206 = vsel %vm205, %v204, %v201
  %s207 = scalar_lea.vmem %s0, 519
  %s208 = smov 192
  %v209 = vld [vmem:[%s207] ss:$16 sm:%s208]
  %vm210 = vcmask 1047558
  %v211 = vsel %vm210, %v209, %v206
  %212 = vrot.lane.b32.xlu0 %v211, 112
  %v213 = vpop.permute.xlu0 %212
  %vm214 = vcmask 1048448
  %s215 = scalar_lea.vmem %s1, 64
  %216 = vst.msk [vmem:[%s215] sm:$0xff] %vm214, %v213
  %s217 = scalar_lea.vmem %s0, 15
  %s218 = smov 3
  %v219 = vld [vmem:[%s217] ss:$16 sm:%s218]
  %s220 = scalar_lea.vmem %s0, 15
  %s221 = smov 12
  %v222 = vld [vmem:[%s220] ss:$16 sm:%s221]
  %vm223 = vcmask 1043458
  %v224 = vsel %vm223, %v222, %v219
  %s225 = scalar_lea.vmem %s0, 15
  %s226 = smov 48
  %v227 = vld [vmem:[%s225] ss:$16 sm:%s226]
  %vm228 = vcmask 1045508
  %v229 = vsel %vm228, %v227, %v224
  %s230 = scalar_lea.vmem %s0, 15
  %s231 = smov 192
  %v232 = vld [vmem:[%s230] ss:$16 sm:%s231]
  %vm233 = vcmask 1047558
  %v234 = vsel %vm233, %v232, %v229
  %235 = vrot.lane.b32.xlu0 %v234, 112
  %v236 = vpop.permute.xlu0 %235
  %vm237 = vcmask 1048448
  %s238 = scalar_lea.vmem %s1, 8
  %239 = vst.msk [vmem:[%s238] sm:$0xff] %vm237, %v236
  %s240 = scalar_lea.vmem %s0, 271
  %s241 = smov 3
  %v242 = vld [vmem:[%s240] ss:$16 sm:%s241]
  %s243 = scalar_lea.vmem %s0, 271
  %s244 = smov 12
  %v245 = vld [vmem:[%s243] ss:$16 sm:%s244]
  %vm246 = vcmask 1043458
  %v247 = vsel %vm246, %v245, %v242
  %s248 = scalar_lea.vmem %s0, 271
  %s249 = smov 48
  %v250 = vld [vmem:[%s248] ss:$16 sm:%s249]
  %vm251 = vcmask 1045508
  %v252 = vsel %vm251, %v250, %v247
  %s253 = scalar_lea.vmem %s0, 271
  %s254 = smov 192
  %v255 = vld [vmem:[%s253] ss:$16 sm:%s254]
  %vm256 = vcmask 1047558
  %v257 = vsel %vm256, %v255, %v252
  %258 = vrot.lane.b32.xlu0 %v257, 112
  %v259 = vpop.permute.xlu0 %258
  %vm260 = vcmask 1048448
  %s261 = scalar_lea.vmem %s1, 40
  %262 = vst.msk [vmem:[%s261] sm:$0xff] %vm260, %v259
  %s263 = scalar_lea.vmem %s0, 527
  %s264 = smov 3
  %v265 = vld [vmem:[%s263] ss:$16 sm:%s264]
  %s266 = scalar_lea.vmem %s0, 527
  %s267 = smov 12
  %v268 = vld [vmem:[%s266] ss:$16 sm:%s267]
  %vm269 = vcmask 1043458
  %v270 = vsel %vm269, %v268, %v265
  %s271 = scalar_lea.vmem %s0, 527
  %s272 = smov 48
  %v273 = vld [vmem:[%s271] ss:$16 sm:%s272]
  %vm274 = vcmask 1045508
  %v275 = vsel %vm274, %v273, %v270
  %s276 = scalar_lea.vmem %s0, 527
  %s277 = smov 192
  %v278 = vld [vmem:[%s276] ss:$16 sm:%s277]
  %vm279 = vcmask 1047558
  %v280 = vsel %vm279, %v278, %v275
  %281 = vrot.lane.b32.xlu0 %v280, 112
  %v282 = vpop.permute.xlu0 %281
  %vm283 = vcmask 1048448
  %s284 = scalar_lea.vmem %s1, 72
  %285 = vst.msk [vmem:[%s284] sm:$0xff] %vm283, %v282
  %s286 = scalar_lea.vmem %s0, 135
  %s287 = smov 3
  %v288 = vld [vmem:[%s286] ss:$16 sm:%s287]
  %s289 = scalar_lea.vmem %s0, 135
  %s290 = smov 12
  %v291 = vld [vmem:[%s289] ss:$16 sm:%s290]
  %vm292 = vcmask 1043458
  %v293 = vsel %vm292, %v291, %v288
  %s294 = scalar_lea.vmem %s0, 135
  %s295 = smov 48
  %v296 = vld [vmem:[%s294] ss:$16 sm:%s295]
  %vm297 = vcmask 1045508
  %v298 = vsel %vm297, %v296, %v293
  %s299 = scalar_lea.vmem %s0, 135
  %s300 = smov 192
  %v301 = vld [vmem:[%s299] ss:$16 sm:%s300]
  %vm302 = vcmask 1047558
  %v303 = vsel %vm302, %v301, %v298
  %304 = vrot.lane.b32.xlu0 %v303, 112
  %v305 = vpop.permute.xlu0 %304
  %vm306 = vcmask 1048448
  %s307 = scalar_lea.vmem %s1, 16
  %308 = vst.msk [vmem:[%s307] sm:$0xff] %vm306, %v305
  %s309 = scalar_lea.vmem %s0, 391
  %s310 = smov 3
  %v311 = vld [vmem:[%s309] ss:$16 sm:%s310]
  %s312 = scalar_lea.vmem %s0, 391
  %s313 = smov 12
  %v314 = vld [vmem:[%s312] ss:$16 sm:%s313]
  %vm315 = vcmask 1043458
  %v316 = vsel %vm315, %v314, %v311
  %s317 = scalar_lea.vmem %s0, 391
  %s318 = smov 48
  %v319 = vld [vmem:[%s317] ss:$16 sm:%s318]
  %vm320 = vcmask 1045508
  %v321 = vsel %vm320, %v319, %v316
  %s322 = scalar_lea.vmem %s0, 391
  %s323 = smov 192
  %v324 = vld [vmem:[%s322] ss:$16 sm:%s323]
  %vm325 = vcmask 1047558
  %v326 = vsel %vm325, %v324, %v321
  %327 = vrot.lane.b32.xlu0 %v326, 112
  %v328 = vpop.permute.xlu0 %327
  %vm329 = vcmask 1048448
  %s330 = scalar_lea.vmem %s1, 48
  %331 = vst.msk [vmem:[%s330] sm:$0xff] %vm329, %v328
  %s332 = scalar_lea.vmem %s0, 143
  %s333 = smov 3
  %v334 = vld [vmem:[%s332] ss:$16 sm:%s333]
  %s335 = scalar_lea.vmem %s0, 143
  %s336 = smov 12
  %v337 = vld [vmem:[%s335] ss:$16 sm:%s336]
  %vm338 = vcmask 1043458
  %v339 = vsel %vm338, %v337, %v334
  %s340 = scalar_lea.vmem %s0, 143
  %s341 = smov 48
  %v342 = vld [vmem:[%s340] ss:$16 sm:%s341]
  %vm343 = vcmask 1045508
  %v344 = vsel %vm343, %v342, %v339
  %s345 = scalar_lea.vmem %s0, 143
  %s346 = smov 192
  %v347 = vld [vmem:[%s345] ss:$16 sm:%s346]
  %vm348 = vcmask 1047558
  %v349 = vsel %vm348, %v347, %v344
  %350 = vrot.lane.b32.xlu0 %v349, 112
  %v351 = vpop.permute.xlu0 %350
  %vm352 = vcmask 1048448
  %s353 = scalar_lea.vmem %s1, 24
  %354 = vst.msk [vmem:[%s353] sm:$0xff] %vm352, %v351
  %s355 = scalar_lea.vmem %s0, 399
  %s356 = smov 3
  %v357 = vld [vmem:[%s355] ss:$16 sm:%s356]
  %s358 = scalar_lea.vmem %s0, 399
  %s359 = smov 12
  %v360 = vld [vmem:[%s358] ss:$16 sm:%s359]
  %vm361 = vcmask 1043458
  %v362 = vsel %vm361, %v360, %v357
  %s363 = scalar_lea.vmem %s0, 399
  %s364 = smov 48
  %v365 = vld [vmem:[%s363] ss:$16 sm:%s364]
  %vm366 = vcmask 1045508
  %v367 = vsel %vm366, %v365, %v362
  %s368 = scalar_lea.vmem %s0, 399
  %s369 = smov 192
  %v370 = vld [vmem:[%s368] ss:$16 sm:%s369]
  %vm371 = vcmask 1047558
  %v372 = vsel %vm371, %v370, %v367
  %373 = vrot.lane.b32.xlu0 %v372, 112
  %v374 = vpop.permute.xlu0 %373
  %vm375 = vcmask 1048448
  %s376 = scalar_lea.vmem %s1, 56
  %377 = vst.msk [vmem:[%s376] sm:$0xff] %vm375, %v374
  %s378 = scalar_lea.vmem %s0, 6
  %s379 = smov 3
  %v380 = vld [vmem:[%s378] ss:$16 sm:%s379]
  %s381 = scalar_lea.vmem %s0, 6
  %s382 = smov 12
  %v383 = vld [vmem:[%s381] ss:$16 sm:%s382]
  %vm384 = vcmask 1043458
  %v385 = vsel %vm384, %v383, %v380
  %s386 = scalar_lea.vmem %s0, 6
  %s387 = smov 48
  %v388 = vld [vmem:[%s386] ss:$16 sm:%s387]
  %vm389 = vcmask 1045508
  %v390 = vsel %vm389, %v388, %v385
  %s391 = scalar_lea.vmem %s0, 6
  %s392 = smov 192
  %v393 = vld [vmem:[%s391] ss:$16 sm:%s392]
  %vm394 = vcmask 1047558
  %v395 = vsel %vm394, %v393, %v390
  %396 = vrot.lane.b32.xlu0 %v395, 96
  %v397 = vpop.permute.xlu0 %396
  %vm398 = vcmask 917248
  %399 = vst.msk [vmem:[%s1] sm:$0xff] %vm398, %v397
  %s400 = scalar_lea.vmem %s0, 262
  %s401 = smov 3
  %v402 = vld [vmem:[%s400] ss:$16 sm:%s401]
  %s403 = scalar_lea.vmem %s0, 262
  %s404 = smov 12
  %v405 = vld [vmem:[%s403] ss:$16 sm:%s404]
  %vm406 = vcmask 1043458
  %v407 = vsel %vm406, %v405, %v402
  %s408 = scalar_lea.vmem %s0, 262
  %s409 = smov 48
  %v410 = vld [vmem:[%s408] ss:$16 sm:%s409]
  %vm411 = vcmask 1045508
  %v412 = vsel %vm411, %v410, %v407
  %s413 = scalar_lea.vmem %s0, 262
  %s414 = smov 192
  %v415 = vld [vmem:[%s413] ss:$16 sm:%s414]
  %vm416 = vcmask 1047558
  %v417 = vsel %vm416, %v415, %v412
  %418 = vrot.lane.b32.xlu0 %v417, 96
  %v419 = vpop.permute.xlu0 %418
  %vm420 = vcmask 917248
  %s421 = scalar_lea.vmem %s1, 32
  %422 = vst.msk [vmem:[%s421] sm:$0xff] %vm420, %v419
  %s423 = scalar_lea.vmem %s0, 518
  %s424 = smov 3
  %v425 = vld [vmem:[%s423] ss:$16 sm:%s424]
  %s426 = scalar_lea.vmem %s0, 518
  %s427 = smov 12
  %v428 = vld [vmem:[%s426] ss:$16 sm:%s427]
  %vm429 = vcmask 1043458
  %v430 = vsel %vm429, %v428, %v425
  %s431 = scalar_lea.vmem %s0, 518
  %s432 = smov 48
  %v433 = vld [vmem:[%s431] ss:$16 sm:%s432]
  %vm434 = vcmask 1045508
  %v435 = vsel %vm434, %v433, %v430
  %s436 = scalar_lea.vmem %s0, 518
  %s437 = smov 192
  %v438 = vld [vmem:[%s436] ss:$16 sm:%s437]
  %vm439 = vcmask 1047558
  %v440 = vsel %vm439, %v438, %v435
  %441 = vrot.lane.b32.xlu0 %v440, 96
  %v442 = vpop.permute.xlu0 %441
  %vm443 = vcmask 917248
  %s444 = scalar_lea.vmem %s1, 64
  %445 = vst.msk [vmem:[%s444] sm:$0xff] %vm443, %v442
  %s446 = scalar_lea.vmem %s0, 14
  %s447 = smov 3
  %v448 = vld [vmem:[%s446] ss:$16 sm:%s447]
  %s449 = scalar_lea.vmem %s0, 14
  %s450 = smov 12
  %v451 = vld [vmem:[%s449] ss:$16 sm:%s450]
  %vm452 = vcmask 1043458
  %v453 = vsel %vm452, %v451, %v448
  %s454 = scalar_lea.vmem %s0, 14
  %s455 = smov 48
  %v456 = vld [vmem:[%s454] ss:$16 sm:%s455]
  %vm457 = vcmask 1045508
  %v458 = vsel %vm457, %v456, %v453
  %s459 = scalar_lea.vmem %s0, 14
  %s460 = smov 192
  %v461 = vld [vmem:[%s459] ss:$16 sm:%s460]
  %vm462 = vcmask 1047558
  %v463 = vsel %vm462, %v461, %v458
  %464 = vrot.lane.b32.xlu0 %v463, 96
  %v465 = vpop.permute.xlu0 %464
  %vm466 = vcmask 917248
  %s467 = scalar_lea.vmem %s1, 8
  %468 = vst.msk [vmem:[%s467] sm:$0xff] %vm466, %v465
  %s469 = scalar_lea.vmem %s0, 270
  %s470 = smov 3
  %v471 = vld [vmem:[%s469] ss:$16 sm:%s470]
  %s472 = scalar_lea.vmem %s0, 270
  %s473 = smov 12
  %v474 = vld [vmem:[%s472] ss:$16 sm:%s473]
  %vm475 = vcmask 1043458
  %v476 = vsel %vm475, %v474, %v471
  %s477 = scalar_lea.vmem %s0, 270
  %s478 = smov 48
  %v479 = vld [vmem:[%s477] ss:$16 sm:%s478]
  %vm480 = vcmask 1045508
  %v481 = vsel %vm480, %v479, %v476
  %s482 = scalar_lea.vmem %s0, 270
  %s483 = smov 192
  %v484 = vld [vmem:[%s482] ss:$16 sm:%s483]
  %vm485 = vcmask 1047558
  %v486 = vsel %vm485, %v484, %v481
  %487 = vrot.lane.b32.xlu0 %v486, 96
  %v488 = vpop.permute.xlu0 %487
  %vm489 = vcmask 917248
  %s490 = scalar_lea.vmem %s1, 40
  %491 = vst.msk [vmem:[%s490] sm:$0xff] %vm489, %v488
  %s492 = scalar_lea.vmem %s0, 526
  %s493 = smov 3
  %v494 = vld [vmem:[%s492] ss:$16 sm:%s493]
  %s495 = scalar_lea.vmem %s0, 526
  %s496 = smov 12
  %v497 = vld [vmem:[%s495] ss:$16 sm:%s496]
  %vm498 = vcmask 1043458
  %v499 = vsel %vm498, %v497, %v494
  %s500 = scalar_lea.vmem %s0, 526
  %s501 = smov 48
  %v502 = vld [vmem:[%s500] ss:$16 sm:%s501]
  %vm503 = vcmask 1045508
  %v504 = vsel %vm503, %v502, %v499
  %s505 = scalar_lea.vmem %s0, 526
  %s506 = smov 192
  %v507 = vld [vmem:[%s505] ss:$16 sm:%s506]
  %vm508 = vcmask 1047558
  %v509 = vsel %vm508, %v507, %v504
  %510 = vrot.lane.b32.xlu0 %v509, 96
  %v511 = vpop.permute.xlu0 %510
  %vm512 = vcmask 917248
  %s513 = scalar_lea.vmem %s1, 72
  %514 = vst.msk [vmem:[%s513] sm:$0xff] %vm512, %v511
  %s515 = scalar_lea.vmem %s0, 134
  %s516 = smov 3
  %v517 = vld [vmem:[%s515] ss:$16 sm:%s516]
  %s518 = scalar_lea.vmem %s0, 134
  %s519 = smov 12
  %v520 = vld [vmem:[%s518] ss:$16 sm:%s519]
  %vm521 = vcmask 1043458
  %v522 = vsel %vm521, %v520, %v517
  %s523 = scalar_lea.vmem %s0, 134
  %s524 = smov 48
  %v525 = vld [vmem:[%s523] ss:$16 sm:%s524]
  %vm526 = vcmask 1045508
  %v527 = vsel %vm526, %v525, %v522
  %s528 = scalar_lea.vmem %s0, 134
  %s529 = smov 192
  %v530 = vld [vmem:[%s528] ss:$16 sm:%s529]
  %vm531 = vcmask 1047558
  %v532 = vsel %vm531, %v530, %v527
  %533 = vrot.lane.b32.xlu0 %v532, 96
  %v534 = vpop.permute.xlu0 %533
  %vm535 = vcmask 917248
  %s536 = scalar_lea.vmem %s1, 16
  %537 = vst.msk [vmem:[%s536] sm:$0xff] %vm535, %v534
  %s538 = scalar_lea.vmem %s0, 390
  %s539 = smov 3
  %v540 = vld [vmem:[%s538] ss:$16 sm:%s539]
  %s541 = scalar_lea.vmem %s0, 390
  %s542 = smov 12
  %v543 = vld [vmem:[%s541] ss:$16 sm:%s542]
  %vm544 = vcmask 1043458
  %v545 = vsel %vm544, %v543, %v540
  %s546 = scalar_lea.vmem %s0, 390
  %s547 = smov 48
  %v548 = vld [vmem:[%s546] ss:$16 sm:%s547]
  %vm549 = vcmask 1045508
  %v550 = vsel %vm549, %v548, %v545
  %s551 = scalar_lea.vmem %s0, 390
  %s552 = smov 192
  %v553 = vld [vmem:[%s551] ss:$16 sm:%s552]
  %vm554 = vcmask 1047558
  %v555 = vsel %vm554, %v553, %v550
  %556 = vrot.lane.b32.xlu0 %v555, 96
  %v557 = vpop.permute.xlu0 %556
  %vm558 = vcmask 917248
  %s559 = scalar_lea.vmem %s1, 48
  %560 = vst.msk [vmem:[%s559] sm:$0xff] %vm558, %v557
  %s561 = scalar_lea.vmem %s0, 142
  %s562 = smov 3
  %v563 = vld [vmem:[%s561] ss:$16 sm:%s562]
  %s564 = scalar_lea.vmem %s0, 142
  %s565 = smov 12
  %v566 = vld [vmem:[%s564] ss:$16 sm:%s565]
  %vm567 = vcmask 1043458
  %v568 = vsel %vm567, %v566, %v563
  %s569 = scalar_lea.vmem %s0, 142
  %s570 = smov 48
  %v571 = vld [vmem:[%s569] ss:$16 sm:%s570]
  %vm572 = vcmask 1045508
  %v573 = vsel %vm572, %v571, %v568
  %s574 = scalar_lea.vmem %s0, 142
  %s575 = smov 192
  %v576 = vld [vmem:[%s574] ss:$16 sm:%s575]
  %vm577 = vcmask 1047558
  %v578 = vsel %vm577, %v576, %v573
  %579 = vrot.lane.b32.xlu0 %v578, 96
  %v580 = vpop.permute.xlu0 %579
  %vm581 = vcmask 917248
  %s582 = scalar_lea.vmem %s1, 24
  %583 = vst.msk [vmem:[%s582] sm:$0xff] %vm581, %v580
  %s584 = scalar_lea.vmem %s0, 398
  %s585 = smov 3
  %v586 = vld [vmem:[%s584] ss:$16 sm:%s585]
  %s587 = scalar_lea.vmem %s0, 398
  %s588 = smov 12
  %v589 = vld [vmem:[%s587] ss:$16 sm:%s588]
  %vm590 = vcmask 1043458
  %v591 = vsel %vm590, %v589, %v586
  %s592 = scalar_lea.vmem %s0, 398
  %s593 = smov 48
  %v594 = vld [vmem:[%s592] ss:$16 sm:%s593]
  %vm595 = vcmask 1045508
  %v596 = vsel %vm595, %v594, %v591
  %s597 = scalar_lea.vmem %s0, 398
  %s598 = smov 192
  %v599 = vld [vmem:[%s597] ss:$16 sm:%s598]
  %vm600 = vcmask 1047558
  %v601 = vsel %vm600, %v599, %v596
  %602 = vrot.lane.b32.xlu0 %v601, 96
  %v603 = vpop.permute.xlu0 %602
  %vm604 = vcmask 917248
  %s605 = scalar_lea.vmem %s1, 56
  %606 = vst.msk [vmem:[%s605] sm:$0xff] %vm604, %v603
  %s607 = scalar_lea.vmem %s0, 5
  %s608 = smov 3
  %v609 = vld [vmem:[%s607] ss:$16 sm:%s608]
  %s610 = scalar_lea.vmem %s0, 5
  %s611 = smov 12
  %v612 = vld [vmem:[%s610] ss:$16 sm:%s611]
  %vm613 = vcmask 1043458
  %v614 = vsel %vm613, %v612, %v609
  %s615 = scalar_lea.vmem %s0, 5
  %s616 = smov 48
  %v617 = vld [vmem:[%s615] ss:$16 sm:%s616]
  %vm618 = vcmask 1045508
  %v619 = vsel %vm618, %v617, %v614
  %s620 = scalar_lea.vmem %s0, 5
  %s621 = smov 192
  %v622 = vld [vmem:[%s620] ss:$16 sm:%s621]
  %vm623 = vcmask 1047558
  %v624 = vsel %vm623, %v622, %v619
  %625 = vrot.lane.b32.xlu0 %v624, 80
  %v626 = vpop.permute.xlu0 %625
  %vm627 = vcmask 786048
  %628 = vst.msk [vmem:[%s1] sm:$0xff] %vm627, %v626
  %s629 = scalar_lea.vmem %s0, 261
  %s630 = smov 3
  %v631 = vld [vmem:[%s629] ss:$16 sm:%s630]
  %s632 = scalar_lea.vmem %s0, 261
  %s633 = smov 12
  %v634 = vld [vmem:[%s632] ss:$16 sm:%s633]
  %vm635 = vcmask 1043458
  %v636 = vsel %vm635, %v634, %v631
  %s637 = scalar_lea.vmem %s0, 261
  %s638 = smov 48
  %v639 = vld [vmem:[%s637] ss:$16 sm:%s638]
  %vm640 = vcmask 1045508
  %v641 = vsel %vm640, %v639, %v636
  %s642 = scalar_lea.vmem %s0, 261
  %s643 = smov 192
  %v644 = vld [vmem:[%s642] ss:$16 sm:%s643]
  %vm645 = vcmask 1047558
  %v646 = vsel %vm645, %v644, %v641
  %647 = vrot.lane.b32.xlu0 %v646, 80
  %v648 = vpop.permute.xlu0 %647
  %vm649 = vcmask 786048
  %s650 = scalar_lea.vmem %s1, 32
  %651 = vst.msk [vmem:[%s650] sm:$0xff] %vm649, %v648
  %s652 = scalar_lea.vmem %s0, 517
  %s653 = smov 3
  %v654 = vld [vmem:[%s652] ss:$16 sm:%s653]
  %s655 = scalar_lea.vmem %s0, 517
  %s656 = smov 12
  %v657 = vld [vmem:[%s655] ss:$16 sm:%s656]
  %vm658 = vcmask 1043458
  %v659 = vsel %vm658, %v657, %v654
  %s660 = scalar_lea.vmem %s0, 517
  %s661 = smov 48
  %v662 = vld [vmem:[%s660] ss:$16 sm:%s661]
  %vm663 = vcmask 1045508
  %v664 = vsel %vm663, %v662, %v659
  %s665 = scalar_lea.vmem %s0, 517
  %s666 = smov 192
  %v667 = vld [vmem:[%s665] ss:$16 sm:%s666]
  %vm668 = vcmask 1047558
  %v669 = vsel %vm668, %v667, %v664
  %670 = vrot.lane.b32.xlu0 %v669, 80
  %v671 = vpop.permute.xlu0 %670
  %vm672 = vcmask 786048
  %s673 = scalar_lea.vmem %s1, 64
  %674 = vst.msk [vmem:[%s673] sm:$0xff] %vm672, %v671
  %s675 = scalar_lea.vmem %s0, 13
  %s676 = smov 3
  %v677 = vld [vmem:[%s675] ss:$16 sm:%s676]
  %s678 = scalar_lea.vmem %s0, 13
  %s679 = smov 12
  %v680 = vld [vmem:[%s678] ss:$16 sm:%s679]
  %vm681 = vcmask 1043458
  %v682 = vsel %vm681, %v680, %v677
  %s683 = scalar_lea.vmem %s0, 13
  %s684 = smov 48
  %v685 = vld [vmem:[%s683] ss:$16 sm:%s684]
  %vm686 = vcmask 1045508
  %v687 = vsel %vm686, %v685, %v682
  %s688 = scalar_lea.vmem %s0, 13
  %s689 = smov 192
  %v690 = vld [vmem:[%s688] ss:$16 sm:%s689]
  %vm691 = vcmask 1047558
  %v692 = vsel %vm691, %v690, %v687
  %693 = vrot.lane.b32.xlu0 %v692, 80
  %v694 = vpop.permute.xlu0 %693
  %vm695 = vcmask 786048
  %s696 = scalar_lea.vmem %s1, 8
  %697 = vst.msk [vmem:[%s696] sm:$0xff] %vm695, %v694
  %s698 = scalar_lea.vmem %s0, 269
  %s699 = smov 3
  %v700 = vld [vmem:[%s698] ss:$16 sm:%s699]
  %s701 = scalar_lea.vmem %s0, 269
  %s702 = smov 12
  %v703 = vld [vmem:[%s701] ss:$16 sm:%s702]
  %vm704 = vcmask 1043458
  %v705 = vsel %vm704, %v703, %v700
  %s706 = scalar_lea.vmem %s0, 269
  %s707 = smov 48
  %v708 = vld [vmem:[%s706] ss:$16 sm:%s707]
  %vm709 = vcmask 1045508
  %v710 = vsel %vm709, %v708, %v705
  %s711 = scalar_lea.vmem %s0, 269
  %s712 = smov 192
  %v713 = vld [vmem:[%s711] ss:$16 sm:%s712]
  %vm714 = vcmask 1047558
  %v715 = vsel %vm714, %v713, %v710
  %716 = vrot.lane.b32.xlu0 %v715, 80
  %v717 = vpop.permute.xlu0 %716
  %vm718 = vcmask 786048
  %s719 = scalar_lea.vmem %s1, 40
  %720 = vst.msk [vmem:[%s719] sm:$0xff] %vm718, %v717
  %s721 = scalar_lea.vmem %s0, 525
  %s722 = smov 3
  %v723 = vld [vmem:[%s721] ss:$16 sm:%s722]
  %s724 = scalar_lea.vmem %s0, 525
  %s725 = smov 12
  %v726 = vld [vmem:[%s724] ss:$16 sm:%s725]
  %vm727 = vcmask 1043458
  %v728 = vsel %vm727, %v726, %v723
  %s729 = scalar_lea.vmem %s0, 525
  %s730 = smov 48
  %v731 = vld [vmem:[%s729] ss:$16 sm:%s730]
  %vm732 = vcmask 1045508
  %v733 = vsel %vm732, %v731, %v728
  %s734 = scalar_lea.vmem %s0, 525
  %s735 = smov 192
  %v736 = vld [vmem:[%s734] ss:$16 sm:%s735]
  %vm737 = vcmask 1047558
  %v738 = vsel %vm737, %v736, %v733
  %739 = vrot.lane.b32.xlu0 %v738, 80
  %v740 = vpop.permute.xlu0 %739
  %vm741 = vcmask 786048
  %s742 = scalar_lea.vmem %s1, 72
  %743 = vst.msk [vmem:[%s742] sm:$0xff] %vm741, %v740
  %s744 = scalar_lea.vmem %s0, 133
  %s745 = smov 3
  %v746 = vld [vmem:[%s744] ss:$16 sm:%s745]
  %s747 = scalar_lea.vmem %s0, 133
  %s748 = smov 12
  %v749 = vld [vmem:[%s747] ss:$16 sm:%s748]
  %vm750 = vcmask 1043458
  %v751 = vsel %vm750, %v749, %v746
  %s752 = scalar_lea.vmem %s0, 133
  %s753 = smov 48
  %v754 = vld [vmem:[%s752] ss:$16 sm:%s753]
  %vm755 = vcmask 1045508
  %v756 = vsel %vm755, %v754, %v751
  %s757 = scalar_lea.vmem %s0, 133
  %s758 = smov 192
  %v759 = vld [vmem:[%s757] ss:$16 sm:%s758]
  %vm760 = vcmask 1047558
  %v761 = vsel %vm760, %v759, %v756
  %762 = vrot.lane.b32.xlu0 %v761, 80
  %v763 = vpop.permute.xlu0 %762
  %vm764 = vcmask 786048
  %s765 = scalar_lea.vmem %s1, 16
  %766 = vst.msk [vmem:[%s765] sm:$0xff] %vm764, %v763
  %s767 = scalar_lea.vmem %s0, 389
  %s768 = smov 3
  %v769 = vld [vmem:[%s767] ss:$16 sm:%s768]
  %s770 = scalar_lea.vmem %s0, 389
  %s771 = smov 12
  %v772 = vld [vmem:[%s770] ss:$16 sm:%s771]
  %vm773 = vcmask 1043458
  %v774 = vsel %vm773, %v772, %v769
  %s775 = scalar_lea.vmem %s0, 389
  %s776 = smov 48
  %v777 = vld [vmem:[%s775] ss:$16 sm:%s776]
  %vm778 = vcmask 1045508
  %v779 = vsel %vm778, %v777, %v774
  %s780 = scalar_lea.vmem %s0, 389
  %s781 = smov 192
  %v782 = vld [vmem:[%s780] ss:$16 sm:%s781]
  %vm783 = vcmask 1047558
  %v784 = vsel %vm783, %v782, %v779
  %785 = vrot.lane.b32.xlu0 %v784, 80
  %v786 = vpop.permute.xlu0 %785
  %vm787 = vcmask 786048
  %s788 = scalar_lea.vmem %s1, 48
  %789 = vst.msk [vmem:[%s788] sm:$0xff] %vm787, %v786
  %s790 = scalar_lea.vmem %s0, 141
  %s791 = smov 3
  %v792 = vld [vmem:[%s790] ss:$16 sm:%s791]
  %s793 = scalar_lea.vmem %s0, 141
  %s794 = smov 12
  %v795 = vld [vmem:[%s793] ss:$16 sm:%s794]
  %vm796 = vcmask 1043458
  %v797 = vsel %vm796, %v795, %v792
  %s798 = scalar_lea.vmem %s0, 141
  %s799 = smov 48
  %v800 = vld [vmem:[%s798] ss:$16 sm:%s799]
  %vm801 = vcmask 1045508
  %v802 = vsel %vm801, %v800, %v797
  %s803 = scalar_lea.vmem %s0, 141
  %s804 = smov 192
  %v805 = vld [vmem:[%s803] ss:$16 sm:%s804]
  %vm806 = vcmask 1047558
  %v807 = vsel %vm806, %v805, %v802
  %808 = vrot.lane.b32.xlu0 %v807, 80
  %v809 = vpop.permute.xlu0 %808
  %vm810 = vcmask 786048
  %s811 = scalar_lea.vmem %s1, 24
  %812 = vst.msk [vmem:[%s811] sm:$0xff] %vm810, %v809
  %s813 = scalar_lea.vmem %s0, 397
  %s814 = smov 3
  %v815 = vld [vmem:[%s813] ss:$16 sm:%s814]
  %s816 = scalar_lea.vmem %s0, 397
  %s817 = smov 12
  %v818 = vld [vmem:[%s816] ss:$16 sm:%s817]
  %vm819 = vcmask 1043458
  %v820 = vsel %vm819, %v818, %v815
  %s821 = scalar_lea.vmem %s0, 397
  %s822 = smov 48
  %v823 = vld [vmem:[%s821] ss:$16 sm:%s822]
  %vm824 = vcmask 1045508
  %v825 = vsel %vm824, %v823, %v820
  %s826 = scalar_lea.vmem %s0, 397
  %s827 = smov 192
  %v828 = vld [vmem:[%s826] ss:$16 sm:%s827]
  %vm829 = vcmask 1047558
  %v830 = vsel %vm829, %v828, %v825
  %831 = vrot.lane.b32.xlu0 %v830, 80
  %v832 = vpop.permute.xlu0 %831
  %vm833 = vcmask 786048
  %s834 = scalar_lea.vmem %s1, 56
  %835 = vst.msk [vmem:[%s834] sm:$0xff] %vm833, %v832
  %s836 = scalar_lea.vmem %s0, 4
  %s837 = smov 3
  %v838 = vld [vmem:[%s836] ss:$16 sm:%s837]
  %s839 = scalar_lea.vmem %s0, 4
  %s840 = smov 12
  %v841 = vld [vmem:[%s839] ss:$16 sm:%s840]
  %vm842 = vcmask 1043458
  %v843 = vsel %vm842, %v841, %v838
  %s844 = scalar_lea.vmem %s0, 4
  %s845 = smov 48
  %v846 = vld [vmem:[%s844] ss:$16 sm:%s845]
  %vm847 = vcmask 1045508
  %v848 = vsel %vm847, %v846, %v843
  %s849 = scalar_lea.vmem %s0, 4
  %s850 = smov 192
  %v851 = vld [vmem:[%s849] ss:$16 sm:%s850]
  %vm852 = vcmask 1047558
  %v853 = vsel %vm852, %v851, %v848
  %854 = vrot.lane.b32.xlu0 %v853, 64
  %v855 = vpop.permute.xlu0 %854
  %vm856 = vcmask 654848
  %857 = vst.msk [vmem:[%s1] sm:$0xff] %vm856, %v855
  %s858 = scalar_lea.vmem %s0, 260
  %s859 = smov 3
  %v860 = vld [vmem:[%s858] ss:$16 sm:%s859]
  %s861 = scalar_lea.vmem %s0, 260
  %s862 = smov 12
  %v863 = vld [vmem:[%s861] ss:$16 sm:%s862]
  %vm864 = vcmask 1043458
  %v865 = vsel %vm864, %v863, %v860
  %s866 = scalar_lea.vmem %s0, 260
  %s867 = smov 48
  %v868 = vld [vmem:[%s866] ss:$16 sm:%s867]
  %vm869 = vcmask 1045508
  %v870 = vsel %vm869, %v868, %v865
  %s871 = scalar_lea.vmem %s0, 260
  %s872 = smov 192
  %v873 = vld [vmem:[%s871] ss:$16 sm:%s872]
  %vm874 = vcmask 1047558
  %v875 = vsel %vm874, %v873, %v870
  %876 = vrot.lane.b32.xlu0 %v875, 64
  %v877 = vpop.permute.xlu0 %876
  %vm878 = vcmask 654848
  %s879 = scalar_lea.vmem %s1, 32
  %880 = vst.msk [vmem:[%s879] sm:$0xff] %vm878, %v877
  %s881 = scalar_lea.vmem %s0, 516
  %s882 = smov 3
  %v883 = vld [vmem:[%s881] ss:$16 sm:%s882]
  %s884 = scalar_lea.vmem %s0, 516
  %s885 = smov 12
  %v886 = vld [vmem:[%s884] ss:$16 sm:%s885]
  %vm887 = vcmask 1043458
  %v888 = vsel %vm887, %v886, %v883
  %s889 = scalar_lea.vmem %s0, 516
  %s890 = smov 48
  %v891 = vld [vmem:[%s889] ss:$16 sm:%s890]
  %vm892 = vcmask 1045508
  %v893 = vsel %vm892, %v891, %v888
  %s894 = scalar_lea.vmem %s0, 516
  %s895 = smov 192
  %v896 = vld [vmem:[%s894] ss:$16 sm:%s895]
  %vm897 = vcmask 1047558
  %v898 = vsel %vm897, %v896, %v893
  %899 = vrot.lane.b32.xlu0 %v898, 64
  %v900 = vpop.permute.xlu0 %899
  %vm901 = vcmask 654848
  %s902 = scalar_lea.vmem %s1, 64
  %903 = vst.msk [vmem:[%s902] sm:$0xff] %vm901, %v900
  %s904 = scalar_lea.vmem %s0, 12
  %s905 = smov 3
  %v906 = vld [vmem:[%s904] ss:$16 sm:%s905]
  %s907 = scalar_lea.vmem %s0, 12
  %s908 = smov 12
  %v909 = vld [vmem:[%s907] ss:$16 sm:%s908]
  %vm910 = vcmask 1043458
  %v911 = vsel %vm910, %v909, %v906
  %s912 = scalar_lea.vmem %s0, 12
  %s913 = smov 48
  %v914 = vld [vmem:[%s912] ss:$16 sm:%s913]
  %vm915 = vcmask 1045508
  %v916 = vsel %vm915, %v914, %v911
  %s917 = scalar_lea.vmem %s0, 12
  %s918 = smov 192
  %v919 = vld [vmem:[%s917] ss:$16 sm:%s918]
  %vm920 = vcmask 1047558
  %v921 = vsel %vm920, %v919, %v916
  %922 = vrot.lane.b32.xlu0 %v921, 64
  %v923 = vpop.permute.xlu0 %922
  %vm924 = vcmask 654848
  %s925 = scalar_lea.vmem %s1, 8
  %926 = vst.msk [vmem:[%s925] sm:$0xff] %vm924, %v923
  %s927 = scalar_lea.vmem %s0, 268
  %s928 = smov 3
  %v929 = vld [vmem:[%s927] ss:$16 sm:%s928]
  %s930 = scalar_lea.vmem %s0, 268
  %s931 = smov 12
  %v932 = vld [vmem:[%s930] ss:$16 sm:%s931]
  %vm933 = vcmask 1043458
  %v934 = vsel %vm933, %v932, %v929
  %s935 = scalar_lea.vmem %s0, 268
  %s936 = smov 48
  %v937 = vld [vmem:[%s935] ss:$16 sm:%s936]
  %vm938 = vcmask 1045508
  %v939 = vsel %vm938, %v937, %v934
  %s940 = scalar_lea.vmem %s0, 268
  %s941 = smov 192
  %v942 = vld [vmem:[%s940] ss:$16 sm:%s941]
  %vm943 = vcmask 1047558
  %v944 = vsel %vm943, %v942, %v939
  %945 = vrot.lane.b32.xlu0 %v944, 64
  %v946 = vpop.permute.xlu0 %945
  %vm947 = vcmask 654848
  %s948 = scalar_lea.vmem %s1, 40
  %949 = vst.msk [vmem:[%s948] sm:$0xff] %vm947, %v946
  %s950 = scalar_lea.vmem %s0, 524
  %s951 = smov 3
  %v952 = vld [vmem:[%s950] ss:$16 sm:%s951]
  %s953 = scalar_lea.vmem %s0, 524
  %s954 = smov 12
  %v955 = vld [vmem:[%s953] ss:$16 sm:%s954]
  %vm956 = vcmask 1043458
  %v957 = vsel %vm956, %v955, %v952
  %s958 = scalar_lea.vmem %s0, 524
  %s959 = smov 48
  %v960 = vld [vmem:[%s958] ss:$16 sm:%s959]
  %vm961 = vcmask 1045508
  %v962 = vsel %vm961, %v960, %v957
  %s963 = scalar_lea.vmem %s0, 524
  %s964 = smov 192
  %v965 = vld [vmem:[%s963] ss:$16 sm:%s964]
  %vm966 = vcmask 1047558
  %v967 = vsel %vm966, %v965, %v962
  %968 = vrot.lane.b32.xlu0 %v967, 64
  %v969 = vpop.permute.xlu0 %968
  %vm970 = vcmask 654848
  %s971 = scalar_lea.vmem %s1, 72
  %972 = vst.msk [vmem:[%s971] sm:$0xff] %vm970, %v969
  %s973 = scalar_lea.vmem %s0, 132
  %s974 = smov 3
  %v975 = vld [vmem:[%s973] ss:$16 sm:%s974]
  %s976 = scalar_lea.vmem %s0, 132
  %s977 = smov 12
  %v978 = vld [vmem:[%s976] ss:$16 sm:%s977]
  %vm979 = vcmask 1043458
  %v980 = vsel %vm979, %v978, %v975
  %s981 = scalar_lea.vmem %s0, 132
  %s982 = smov 48
  %v983 = vld [vmem:[%s981] ss:$16 sm:%s982]
  %vm984 = vcmask 1045508
  %v985 = vsel %vm984, %v983, %v980
  %s986 = scalar_lea.vmem %s0, 132
  %s987 = smov 192
  %v988 = vld [vmem:[%s986] ss:$16 sm:%s987]
  %vm989 = vcmask 1047558
  %v990 = vsel %vm989, %v988, %v985
  %991 = vrot.lane.b32.xlu0 %v990, 64
  %v992 = vpop.permute.xlu0 %991
  %vm993 = vcmask 654848
  %s994 = scalar_lea.vmem %s1, 16
  %995 = vst.msk [vmem:[%s994] sm:$0xff] %vm993, %v992
  %s996 = scalar_lea.vmem %s0, 388
  %s997 = smov 3
  %v998 = vld [vmem:[%s996] ss:$16 sm:%s997]
  %s999 = scalar_lea.vmem %s0, 388
  %s1000 = smov 12
  %v1001 = vld [vmem:[%s999] ss:$16 sm:%s1000]
  %vm1002 = vcmask 1043458
  %v1003 = vsel %vm1002, %v1001, %v998
  %s1004 = scalar_lea.vmem %s0, 388
  %s1005 = smov 48
  %v1006 = vld [vmem:[%s1004] ss:$16 sm:%s1005]
  %vm1007 = vcmask 1045508
  %v1008 = vsel %vm1007, %v1006, %v1003
  %s1009 = scalar_lea.vmem %s0, 388
  %s1010 = smov 192
  %v1011 = vld [vmem:[%s1009] ss:$16 sm:%s1010]
  %vm1012 = vcmask 1047558
  %v1013 = vsel %vm1012, %v1011, %v1008
  %1014 = vrot.lane.b32.xlu0 %v1013, 64
  %v1015 = vpop.permute.xlu0 %1014
  %vm1016 = vcmask 654848
  %s1017 = scalar_lea.vmem %s1, 48
  %1018 = vst.msk [vmem:[%s1017] sm:$0xff] %vm1016, %v1015
  %s1019 = scalar_lea.vmem %s0, 140
  %s1020 = smov 3
  %v1021 = vld [vmem:[%s1019] ss:$16 sm:%s1020]
  %s1022 = scalar_lea.vmem %s0, 140
  %s1023 = smov 12
  %v1024 = vld [vmem:[%s1022] ss:$16 sm:%s1023]
  %vm1025 = vcmask 1043458
  %v1026 = vsel %vm1025, %v1024, %v1021
  %s1027 = scalar_lea.vmem %s0, 140
  %s1028 = smov 48
  %v1029 = vld [vmem:[%s1027] ss:$16 sm:%s1028]
  %vm1030 = vcmask 1045508
  %v1031 = vsel %vm1030, %v1029, %v1026
  %s1032 = scalar_lea.vmem %s0, 140
  %s1033 = smov 192
  %v1034 = vld [vmem:[%s1032] ss:$16 sm:%s1033]
  %vm1035 = vcmask 1047558
  %v1036 = vsel %vm1035, %v1034, %v1031
  %1037 = vrot.lane.b32.xlu0 %v1036, 64
  %v1038 = vpop.permute.xlu0 %1037
  %vm1039 = vcmask 654848
  %s1040 = scalar_lea.vmem %s1, 24
  %1041 = vst.msk [vmem:[%s1040] sm:$0xff] %vm1039, %v1038
  %s1042 = scalar_lea.vmem %s0, 396
  %s1043 = smov 3
  %v1044 = vld [vmem:[%s1042] ss:$16 sm:%s1043]
  %s1045 = scalar_lea.vmem %s0, 396
  %s1046 = smov 12
  %v1047 = vld [vmem:[%s1045] ss:$16 sm:%s1046]
  %vm1048 = vcmask 1043458
  %v1049 = vsel %vm1048, %v1047, %v1044
  %s1050 = scalar_lea.vmem %s0, 396
  %s1051 = smov 48
  %v1052 = vld [vmem:[%s1050] ss:$16 sm:%s1051]
  %vm1053 = vcmask 1045508
  %v1054 = vsel %vm1053, %v1052, %v1049
  %s1055 = scalar_lea.vmem %s0, 396
  %s1056 = smov 192
  %v1057 = vld [vmem:[%s1055] ss:$16 sm:%s1056]
  %vm1058 = vcmask 1047558
  %v1059 = vsel %vm1058, %v1057, %v1054
  %1060 = vrot.lane.b32.xlu0 %v1059, 64
  %v1061 = vpop.permute.xlu0 %1060
  %vm1062 = vcmask 654848
  %s1063 = scalar_lea.vmem %s1, 56
  %1064 = vst.msk [vmem:[%s1063] sm:$0xff] %vm1062, %v1061
  %s1065 = scalar_lea.vmem %s0, 3
  %s1066 = smov 3
  %v1067 = vld [vmem:[%s1065] ss:$16 sm:%s1066]
  %s1068 = scalar_lea.vmem %s0, 3
  %s1069 = smov 12
  %v1070 = vld [vmem:[%s1068] ss:$16 sm:%s1069]
  %vm1071 = vcmask 1043458
  %v1072 = vsel %vm1071, %v1070, %v1067
  %s1073 = scalar_lea.vmem %s0, 3
  %s1074 = smov 48
  %v1075 = vld [vmem:[%s1073] ss:$16 sm:%s1074]
  %vm1076 = vcmask 1045508
  %v1077 = vsel %vm1076, %v1075, %v1072
  %s1078 = scalar_lea.vmem %s0, 3
  %s1079 = smov 192
  %v1080 = vld [vmem:[%s1078] ss:$16 sm:%s1079]
  %vm1081 = vcmask 1047558
  %v1082 = vsel %vm1081, %v1080, %v1077
  %1083 = vrot.lane.b32.xlu0 %v1082, 48
  %v1084 = vpop.permute.xlu0 %1083
  %vm1085 = vcmask 523648
  %1086 = vst.msk [vmem:[%s1] sm:$0xff] %vm1085, %v1084
  %s1087 = scalar_lea.vmem %s0, 259
  %s1088 = smov 3
  %v1089 = vld [vmem:[%s1087] ss:$16 sm:%s1088]
  %s1090 = scalar_lea.vmem %s0, 259
  %s1091 = smov 12
  %v1092 = vld [vmem:[%s1090] ss:$16 sm:%s1091]
  %vm1093 = vcmask 1043458
  %v1094 = vsel %vm1093, %v1092, %v1089
  %s1095 = scalar_lea.vmem %s0, 259
  %s1096 = smov 48
  %v1097 = vld [vmem:[%s1095] ss:$16 sm:%s1096]
  %vm1098 = vcmask 1045508
  %v1099 = vsel %vm1098, %v1097, %v1094
  %s1100 = scalar_lea.vmem %s0, 259
  %s1101 = smov 192
  %v1102 = vld [vmem:[%s1100] ss:$16 sm:%s1101]
  %vm1103 = vcmask 1047558
  %v1104 = vsel %vm1103, %v1102, %v1099
  %1105 = vrot.lane.b32.xlu0 %v1104, 48
  %v1106 = vpop.permute.xlu0 %1105
  %vm1107 = vcmask 523648
  %s1108 = scalar_lea.vmem %s1, 32
  %1109 = vst.msk [vmem:[%s1108] sm:$0xff] %vm1107, %v1106
  %s1110 = scalar_lea.vmem %s0, 515
  %s1111 = smov 3
  %v1112 = vld [vmem:[%s1110] ss:$16 sm:%s1111]
  %s1113 = scalar_lea.vmem %s0, 515
  %s1114 = smov 12
  %v1115 = vld [vmem:[%s1113] ss:$16 sm:%s1114]
  %vm1116 = vcmask 1043458
  %v1117 = vsel %vm1116, %v1115, %v1112
  %s1118 = scalar_lea.vmem %s0, 515
  %s1119 = smov 48
  %v1120 = vld [vmem:[%s1118] ss:$16 sm:%s1119]
  %vm1121 = vcmask 1045508
  %v1122 = vsel %vm1121, %v1120, %v1117
  %s1123 = scalar_lea.vmem %s0, 515
  %s1124 = smov 192
  %v1125 = vld [vmem:[%s1123] ss:$16 sm:%s1124]
  %vm1126 = vcmask 1047558
  %v1127 = vsel %vm1126, %v1125, %v1122
  %1128 = vrot.lane.b32.xlu0 %v1127, 48
  %v1129 = vpop.permute.xlu0 %1128
  %vm1130 = vcmask 523648
  %s1131 = scalar_lea.vmem %s1, 64
  %1132 = vst.msk [vmem:[%s1131] sm:$0xff] %vm1130, %v1129
  %s1133 = scalar_lea.vmem %s0, 11
  %s1134 = smov 3
  %v1135 = vld [vmem:[%s1133] ss:$16 sm:%s1134]
  %s1136 = scalar_lea.vmem %s0, 11
  %s1137 = smov 12
  %v1138 = vld [vmem:[%s1136] ss:$16 sm:%s1137]
  %vm1139 = vcmask 1043458
  %v1140 = vsel %vm1139, %v1138, %v1135
  %s1141 = scalar_lea.vmem %s0, 11
  %s1142 = smov 48
  %v1143 = vld [vmem:[%s1141] ss:$16 sm:%s1142]
  %vm1144 = vcmask 1045508
  %v1145 = vsel %vm1144, %v1143, %v1140
  %s1146 = scalar_lea.vmem %s0, 11
  %s1147 = smov 192
  %v1148 = vld [vmem:[%s1146] ss:$16 sm:%s1147]
  %vm1149 = vcmask 1047558
  %v1150 = vsel %vm1149, %v1148, %v1145
  %1151 = vrot.lane.b32.xlu0 %v1150, 48
  %v1152 = vpop.permute.xlu0 %1151
  %vm1153 = vcmask 523648
  %s1154 = scalar_lea.vmem %s1, 8
  %1155 = vst.msk [vmem:[%s1154] sm:$0xff] %vm1153, %v1152
  %s1156 = scalar_lea.vmem %s0, 267
  %s1157 = smov 3
  %v1158 = vld [vmem:[%s1156] ss:$16 sm:%s1157]
  %s1159 = scalar_lea.vmem %s0, 267
  %s1160 = smov 12
  %v1161 = vld [vmem:[%s1159] ss:$16 sm:%s1160]
  %vm1162 = vcmask 1043458
  %v1163 = vsel %vm1162, %v1161, %v1158
  %s1164 = scalar_lea.vmem %s0, 267
  %s1165 = smov 48
  %v1166 = vld [vmem:[%s1164] ss:$16 sm:%s1165]
  %vm1167 = vcmask 1045508
  %v1168 = vsel %vm1167, %v1166, %v1163
  %s1169 = scalar_lea.vmem %s0, 267
  %s1170 = smov 192
  %v1171 = vld [vmem:[%s1169] ss:$16 sm:%s1170]
  %vm1172 = vcmask 1047558
  %v1173 = vsel %vm1172, %v1171, %v1168
  %1174 = vrot.lane.b32.xlu0 %v1173, 48
  %v1175 = vpop.permute.xlu0 %1174
  %vm1176 = vcmask 523648
  %s1177 = scalar_lea.vmem %s1, 40
  %1178 = vst.msk [vmem:[%s1177] sm:$0xff] %vm1176, %v1175
  %s1179 = scalar_lea.vmem %s0, 523
  %s1180 = smov 3
  %v1181 = vld [vmem:[%s1179] ss:$16 sm:%s1180]
  %s1182 = scalar_lea.vmem %s0, 523
  %s1183 = smov 12
  %v1184 = vld [vmem:[%s1182] ss:$16 sm:%s1183]
  %vm1185 = vcmask 1043458
  %v1186 = vsel %vm1185, %v1184, %v1181
  %s1187 = scalar_lea.vmem %s0, 523
  %s1188 = smov 48
  %v1189 = vld [vmem:[%s1187] ss:$16 sm:%s1188]
  %vm1190 = vcmask 1045508
  %v1191 = vsel %vm1190, %v1189, %v1186
  %s1192 = scalar_lea.vmem %s0, 523
  %s1193 = smov 192
  %v1194 = vld [vmem:[%s1192] ss:$16 sm:%s1193]
  %vm1195 = vcmask 1047558
  %v1196 = vsel %vm1195, %v1194, %v1191
  %1197 = vrot.lane.b32.xlu0 %v1196, 48
  %v1198 = vpop.permute.xlu0 %1197
  %vm1199 = vcmask 523648
  %s1200 = scalar_lea.vmem %s1, 72
  %1201 = vst.msk [vmem:[%s1200] sm:$0xff] %vm1199, %v1198
  %s1202 = scalar_lea.vmem %s0, 131
  %s1203 = smov 3
  %v1204 = vld [vmem:[%s1202] ss:$16 sm:%s1203]
  %s1205 = scalar_lea.vmem %s0, 131
  %s1206 = smov 12
  %v1207 = vld [vmem:[%s1205] ss:$16 sm:%s1206]
  %vm1208 = vcmask 1043458
  %v1209 = vsel %vm1208, %v1207, %v1204
  %s1210 = scalar_lea.vmem %s0, 131
  %s1211 = smov 48
  %v1212 = vld [vmem:[%s1210] ss:$16 sm:%s1211]
  %vm1213 = vcmask 1045508
  %v1214 = vsel %vm1213, %v1212, %v1209
  %s1215 = scalar_lea.vmem %s0, 131
  %s1216 = smov 192
  %v1217 = vld [vmem:[%s1215] ss:$16 sm:%s1216]
  %vm1218 = vcmask 1047558
  %v1219 = vsel %vm1218, %v1217, %v1214
  %1220 = vrot.lane.b32.xlu0 %v1219, 48
  %v1221 = vpop.permute.xlu0 %1220
  %vm1222 = vcmask 523648
  %s1223 = scalar_lea.vmem %s1, 16
  %1224 = vst.msk [vmem:[%s1223] sm:$0xff] %vm1222, %v1221
  %s1225 = scalar_lea.vmem %s0, 387
  %s1226 = smov 3
  %v1227 = vld [vmem:[%s1225] ss:$16 sm:%s1226]
  %s1228 = scalar_lea.vmem %s0, 387
  %s1229 = smov 12
  %v1230 = vld [vmem:[%s1228] ss:$16 sm:%s1229]
  %vm1231 = vcmask 1043458
  %v1232 = vsel %vm1231, %v1230, %v1227
  %s1233 = scalar_lea.vmem %s0, 387
  %s1234 = smov 48
  %v1235 = vld [vmem:[%s1233] ss:$16 sm:%s1234]
  %vm1236 = vcmask 1045508
  %v1237 = vsel %vm1236, %v1235, %v1232
  %s1238 = scalar_lea.vmem %s0, 387
  %s1239 = smov 192
  %v1240 = vld [vmem:[%s1238] ss:$16 sm:%s1239]
  %vm1241 = vcmask 1047558
  %v1242 = vsel %vm1241, %v1240, %v1237
  %1243 = vrot.lane.b32.xlu0 %v1242, 48
  %v1244 = vpop.permute.xlu0 %1243
  %vm1245 = vcmask 523648
  %s1246 = scalar_lea.vmem %s1, 48
  %1247 = vst.msk [vmem:[%s1246] sm:$0xff] %vm1245, %v1244
  %s1248 = scalar_lea.vmem %s0, 139
  %s1249 = smov 3
  %v1250 = vld [vmem:[%s1248] ss:$16 sm:%s1249]
  %s1251 = scalar_lea.vmem %s0, 139
  %s1252 = smov 12
  %v1253 = vld [vmem:[%s1251] ss:$16 sm:%s1252]
  %vm1254 = vcmask 1043458
  %v1255 = vsel %vm1254, %v1253, %v1250
  %s1256 = scalar_lea.vmem %s0, 139
  %s1257 = smov 48
  %v1258 = vld [vmem:[%s1256] ss:$16 sm:%s1257]
  %vm1259 = vcmask 1045508
  %v1260 = vsel %vm1259, %v1258, %v1255
  %s1261 = scalar_lea.vmem %s0, 139
  %s1262 = smov 192
  %v1263 = vld [vmem:[%s1261] ss:$16 sm:%s1262]
  %vm1264 = vcmask 1047558
  %v1265 = vsel %vm1264, %v1263, %v1260
  %1266 = vrot.lane.b32.xlu0 %v1265, 48
  %v1267 = vpop.permute.xlu0 %1266
  %vm1268 = vcmask 523648
  %s1269 = scalar_lea.vmem %s1, 24
  %1270 = vst.msk [vmem:[%s1269] sm:$0xff] %vm1268, %v1267
  %s1271 = scalar_lea.vmem %s0, 395
  %s1272 = smov 3
  %v1273 = vld [vmem:[%s1271] ss:$16 sm:%s1272]
  %s1274 = scalar_lea.vmem %s0, 395
  %s1275 = smov 12
  %v1276 = vld [vmem:[%s1274] ss:$16 sm:%s1275]
  %vm1277 = vcmask 1043458
  %v1278 = vsel %vm1277, %v1276, %v1273
  %s1279 = scalar_lea.vmem %s0, 395
  %s1280 = smov 48
  %v1281 = vld [vmem:[%s1279] ss:$16 sm:%s1280]
  %vm1282 = vcmask 1045508
  %v1283 = vsel %vm1282, %v1281, %v1278
  %s1284 = scalar_lea.vmem %s0, 395
  %s1285 = smov 192
  %v1286 = vld [vmem:[%s1284] ss:$16 sm:%s1285]
  %vm1287 = vcmask 1047558
  %v1288 = vsel %vm1287, %v1286, %v1283
  %1289 = vrot.lane.b32.xlu0 %v1288, 48
  %v1290 = vpop.permute.xlu0 %1289
  %vm1291 = vcmask 523648
  %s1292 = scalar_lea.vmem %s1, 56
  %1293 = vst.msk [vmem:[%s1292] sm:$0xff] %vm1291, %v1290
  %s1294 = scalar_lea.vmem %s0, 2
  %s1295 = smov 3
  %v1296 = vld [vmem:[%s1294] ss:$16 sm:%s1295]
  %s1297 = scalar_lea.vmem %s0, 2
  %s1298 = smov 12
  %v1299 = vld [vmem:[%s1297] ss:$16 sm:%s1298]
  %vm1300 = vcmask 1043458
  %v1301 = vsel %vm1300, %v1299, %v1296
  %s1302 = scalar_lea.vmem %s0, 2
  %s1303 = smov 48
  %v1304 = vld [vmem:[%s1302] ss:$16 sm:%s1303]
  %vm1305 = vcmask 1045508
  %v1306 = vsel %vm1305, %v1304, %v1301
  %s1307 = scalar_lea.vmem %s0, 2
  %s1308 = smov 192
  %v1309 = vld [vmem:[%s1307] ss:$16 sm:%s1308]
  %vm1310 = vcmask 1047558
  %v1311 = vsel %vm1310, %v1309, %v1306
  %1312 = vrot.lane.b32.xlu0 %v1311, 32
  %v1313 = vpop.permute.xlu0 %1312
  %vm1314 = vcmask 392448
  %1315 = vst.msk [vmem:[%s1] sm:$0xff] %vm1314, %v1313
  %s1316 = scalar_lea.vmem %s0, 258
  %s1317 = smov 3
  %v1318 = vld [vmem:[%s1316] ss:$16 sm:%s1317]
  %s1319 = scalar_lea.vmem %s0, 258
  %s1320 = smov 12
  %v1321 = vld [vmem:[%s1319] ss:$16 sm:%s1320]
  %vm1322 = vcmask 1043458
  %v1323 = vsel %vm1322, %v1321, %v1318
  %s1324 = scalar_lea.vmem %s0, 258
  %s1325 = smov 48
  %v1326 = vld [vmem:[%s1324] ss:$16 sm:%s1325]
  %vm1327 = vcmask 1045508
  %v1328 = vsel %vm1327, %v1326, %v1323
  %s1329 = scalar_lea.vmem %s0, 258
  %s1330 = smov 192
  %v1331 = vld [vmem:[%s1329] ss:$16 sm:%s1330]
  %vm1332 = vcmask 1047558
  %v1333 = vsel %vm1332, %v1331, %v1328
  %1334 = vrot.lane.b32.xlu0 %v1333, 32
  %v1335 = vpop.permute.xlu0 %1334
  %vm1336 = vcmask 392448
  %s1337 = scalar_lea.vmem %s1, 32
  %1338 = vst.msk [vmem:[%s1337] sm:$0xff] %vm1336, %v1335
  %s1339 = scalar_lea.vmem %s0, 514
  %s1340 = smov 3
  %v1341 = vld [vmem:[%s1339] ss:$16 sm:%s1340]
  %s1342 = scalar_lea.vmem %s0, 514
  %s1343 = smov 12
  %v1344 = vld [vmem:[%s1342] ss:$16 sm:%s1343]
  %vm1345 = vcmask 1043458
  %v1346 = vsel %vm1345, %v1344, %v1341
  %s1347 = scalar_lea.vmem %s0, 514
  %s1348 = smov 48
  %v1349 = vld [vmem:[%s1347] ss:$16 sm:%s1348]
  %vm1350 = vcmask 1045508
  %v1351 = vsel %vm1350, %v1349, %v1346
  %s1352 = scalar_lea.vmem %s0, 514
  %s1353 = smov 192
  %v1354 = vld [vmem:[%s1352] ss:$16 sm:%s1353]
  %vm1355 = vcmask 1047558
  %v1356 = vsel %vm1355, %v1354, %v1351
  %1357 = vrot.lane.b32.xlu0 %v1356, 32
  %v1358 = vpop.permute.xlu0 %1357
  %vm1359 = vcmask 392448
  %s1360 = scalar_lea.vmem %s1, 64
  %1361 = vst.msk [vmem:[%s1360] sm:$0xff] %vm1359, %v1358
  %s1362 = scalar_lea.vmem %s0, 10
  %s1363 = smov 3
  %v1364 = vld [vmem:[%s1362] ss:$16 sm:%s1363]
  %s1365 = scalar_lea.vmem %s0, 10
  %s1366 = smov 12
  %v1367 = vld [vmem:[%s1365] ss:$16 sm:%s1366]
  %vm1368 = vcmask 1043458
  %v1369 = vsel %vm1368, %v1367, %v1364
  %s1370 = scalar_lea.vmem %s0, 10
  %s1371 = smov 48
  %v1372 = vld [vmem:[%s1370] ss:$16 sm:%s1371]
  %vm1373 = vcmask 1045508
  %v1374 = vsel %vm1373, %v1372, %v1369
  %s1375 = scalar_lea.vmem %s0, 10
  %s1376 = smov 192
  %v1377 = vld [vmem:[%s1375] ss:$16 sm:%s1376]
  %vm1378 = vcmask 1047558
  %v1379 = vsel %vm1378, %v1377, %v1374
  %1380 = vrot.lane.b32.xlu0 %v1379, 32
  %v1381 = vpop.permute.xlu0 %1380
  %vm1382 = vcmask 392448
  %s1383 = scalar_lea.vmem %s1, 8
  %1384 = vst.msk [vmem:[%s1383] sm:$0xff] %vm1382, %v1381
  %s1385 = scalar_lea.vmem %s0, 266
  %s1386 = smov 3
  %v1387 = vld [vmem:[%s1385] ss:$16 sm:%s1386]
  %s1388 = scalar_lea.vmem %s0, 266
  %s1389 = smov 12
  %v1390 = vld [vmem:[%s1388] ss:$16 sm:%s1389]
  %vm1391 = vcmask 1043458
  %v1392 = vsel %vm1391, %v1390, %v1387
  %s1393 = scalar_lea.vmem %s0, 266
  %s1394 = smov 48
  %v1395 = vld [vmem:[%s1393] ss:$16 sm:%s1394]
  %vm1396 = vcmask 1045508
  %v1397 = vsel %vm1396, %v1395, %v1392
  %s1398 = scalar_lea.vmem %s0, 266
  %s1399 = smov 192
  %v1400 = vld [vmem:[%s1398] ss:$16 sm:%s1399]
  %vm1401 = vcmask 1047558
  %v1402 = vsel %vm1401, %v1400, %v1397
  %1403 = vrot.lane.b32.xlu0 %v1402, 32
  %v1404 = vpop.permute.xlu0 %1403
  %vm1405 = vcmask 392448
  %s1406 = scalar_lea.vmem %s1, 40
  %1407 = vst.msk [vmem:[%s1406] sm:$0xff] %vm1405, %v1404
  %s1408 = scalar_lea.vmem %s0, 522
  %s1409 = smov 3
  %v1410 = vld [vmem:[%s1408] ss:$16 sm:%s1409]
  %s1411 = scalar_lea.vmem %s0, 522
  %s1412 = smov 12
  %v1413 = vld [vmem:[%s1411] ss:$16 sm:%s1412]
  %vm1414 = vcmask 1043458
  %v1415 = vsel %vm1414, %v1413, %v1410
  %s1416 = scalar_lea.vmem %s0, 522
  %s1417 = smov 48
  %v1418 = vld [vmem:[%s1416] ss:$16 sm:%s1417]
  %vm1419 = vcmask 1045508
  %v1420 = vsel %vm1419, %v1418, %v1415
  %s1421 = scalar_lea.vmem %s0, 522
  %s1422 = smov 192
  %v1423 = vld [vmem:[%s1421] ss:$16 sm:%s1422]
  %vm1424 = vcmask 1047558
  %v1425 = vsel %vm1424, %v1423, %v1420
  %1426 = vrot.lane.b32.xlu0 %v1425, 32
  %v1427 = vpop.permute.xlu0 %1426
  %vm1428 = vcmask 392448
  %s1429 = scalar_lea.vmem %s1, 72
  %1430 = vst.msk [vmem:[%s1429] sm:$0xff] %vm1428, %v1427
  %s1431 = scalar_lea.vmem %s0, 130
  %s1432 = smov 3
  %v1433 = vld [vmem:[%s1431] ss:$16 sm:%s1432]
  %s1434 = scalar_lea.vmem %s0, 130
  %s1435 = smov 12
  %v1436 = vld [vmem:[%s1434] ss:$16 sm:%s1435]
  %vm1437 = vcmask 1043458
  %v1438 = vsel %vm1437, %v1436, %v1433
  %s1439 = scalar_lea.vmem %s0, 130
  %s1440 = smov 48
  %v1441 = vld [vmem:[%s1439] ss:$16 sm:%s1440]
  %vm1442 = vcmask 1045508
  %v1443 = vsel %vm1442, %v1441, %v1438
  %s1444 = scalar_lea.vmem %s0, 130
  %s1445 = smov 192
  %v1446 = vld [vmem:[%s1444] ss:$16 sm:%s1445]
  %vm1447 = vcmask 1047558
  %v1448 = vsel %vm1447, %v1446, %v1443
  %1449 = vrot.lane.b32.xlu0 %v1448, 32
  %v1450 = vpop.permute.xlu0 %1449
  %vm1451 = vcmask 392448
  %s1452 = scalar_lea.vmem %s1, 16
  %1453 = vst.msk [vmem:[%s1452] sm:$0xff] %vm1451, %v1450
  %s1454 = scalar_lea.vmem %s0, 386
  %s1455 = smov 3
  %v1456 = vld [vmem:[%s1454] ss:$16 sm:%s1455]
  %s1457 = scalar_lea.vmem %s0, 386
  %s1458 = smov 12
  %v1459 = vld [vmem:[%s1457] ss:$16 sm:%s1458]
  %vm1460 = vcmask 1043458
  %v1461 = vsel %vm1460, %v1459, %v1456
  %s1462 = scalar_lea.vmem %s0, 386
  %s1463 = smov 48
  %v1464 = vld [vmem:[%s1462] ss:$16 sm:%s1463]
  %vm1465 = vcmask 1045508
  %v1466 = vsel %vm1465, %v1464, %v1461
  %s1467 = scalar_lea.vmem %s0, 386
  %s1468 = smov 192
  %v1469 = vld [vmem:[%s1467] ss:$16 sm:%s1468]
  %vm1470 = vcmask 1047558
  %v1471 = vsel %vm1470, %v1469, %v1466
  %1472 = vrot.lane.b32.xlu0 %v1471, 32
  %v1473 = vpop.permute.xlu0 %1472
  %vm1474 = vcmask 392448
  %s1475 = scalar_lea.vmem %s1, 48
  %1476 = vst.msk [vmem:[%s1475] sm:$0xff] %vm1474, %v1473
  %s1477 = scalar_lea.vmem %s0, 138
  %s1478 = smov 3
  %v1479 = vld [vmem:[%s1477] ss:$16 sm:%s1478]
  %s1480 = scalar_lea.vmem %s0, 138
  %s1481 = smov 12
  %v1482 = vld [vmem:[%s1480] ss:$16 sm:%s1481]
  %vm1483 = vcmask 1043458
  %v1484 = vsel %vm1483, %v1482, %v1479
  %s1485 = scalar_lea.vmem %s0, 138
  %s1486 = smov 48
  %v1487 = vld [vmem:[%s1485] ss:$16 sm:%s1486]
  %vm1488 = vcmask 1045508
  %v1489 = vsel %vm1488, %v1487, %v1484
  %s1490 = scalar_lea.vmem %s0, 138
  %s1491 = smov 192
  %v1492 = vld [vmem:[%s1490] ss:$16 sm:%s1491]
  %vm1493 = vcmask 1047558
  %v1494 = vsel %vm1493, %v1492, %v1489
  %1495 = vrot.lane.b32.xlu0 %v1494, 32
  %v1496 = vpop.permute.xlu0 %1495
  %vm1497 = vcmask 392448
  %s1498 = scalar_lea.vmem %s1, 24
  %1499 = vst.msk [vmem:[%s1498] sm:$0xff] %vm1497, %v1496
  %s1500 = scalar_lea.vmem %s0, 394
  %s1501 = smov 3
  %v1502 = vld [vmem:[%s1500] ss:$16 sm:%s1501]
  %s1503 = scalar_lea.vmem %s0, 394
  %s1504 = smov 12
  %v1505 = vld [vmem:[%s1503] ss:$16 sm:%s1504]
  %vm1506 = vcmask 1043458
  %v1507 = vsel %vm1506, %v1505, %v1502
  %s1508 = scalar_lea.vmem %s0, 394
  %s1509 = smov 48
  %v1510 = vld [vmem:[%s1508] ss:$16 sm:%s1509]
  %vm1511 = vcmask 1045508
  %v1512 = vsel %vm1511, %v1510, %v1507
  %s1513 = scalar_lea.vmem %s0, 394
  %s1514 = smov 192
  %v1515 = vld [vmem:[%s1513] ss:$16 sm:%s1514]
  %vm1516 = vcmask 1047558
  %v1517 = vsel %vm1516, %v1515, %v1512
  %1518 = vrot.lane.b32.xlu0 %v1517, 32
  %v1519 = vpop.permute.xlu0 %1518
  %vm1520 = vcmask 392448
  %s1521 = scalar_lea.vmem %s1, 56
  %1522 = vst.msk [vmem:[%s1521] sm:$0xff] %vm1520, %v1519
  %s1523 = scalar_lea.vmem %s0, 1
  %s1524 = smov 3
  %v1525 = vld [vmem:[%s1523] ss:$16 sm:%s1524]
  %s1526 = scalar_lea.vmem %s0, 1
  %s1527 = smov 12
  %v1528 = vld [vmem:[%s1526] ss:$16 sm:%s1527]
  %vm1529 = vcmask 1043458
  %v1530 = vsel %vm1529, %v1528, %v1525
  %s1531 = scalar_lea.vmem %s0, 1
  %s1532 = smov 48
  %v1533 = vld [vmem:[%s1531] ss:$16 sm:%s1532]
  %vm1534 = vcmask 1045508
  %v1535 = vsel %vm1534, %v1533, %v1530
  %s1536 = scalar_lea.vmem %s0, 1
  %s1537 = smov 192
  %v1538 = vld [vmem:[%s1536] ss:$16 sm:%s1537]
  %vm1539 = vcmask 1047558
  %v1540 = vsel %vm1539, %v1538, %v1535
  %1541 = vrot.lane.b32.xlu0 %v1540, 16
  %v1542 = vpop.permute.xlu0 %1541
  %vm1543 = vcmask 261248
  %1544 = vst.msk [vmem:[%s1] sm:$0xff] %vm1543, %v1542
  %s1545 = scalar_lea.vmem %s0, 257
  %s1546 = smov 3
  %v1547 = vld [vmem:[%s1545] ss:$16 sm:%s1546]
  %s1548 = scalar_lea.vmem %s0, 257
  %s1549 = smov 12
  %v1550 = vld [vmem:[%s1548] ss:$16 sm:%s1549]
  %vm1551 = vcmask 1043458
  %v1552 = vsel %vm1551, %v1550, %v1547
  %s1553 = scalar_lea.vmem %s0, 257
  %s1554 = smov 48
  %v1555 = vld [vmem:[%s1553] ss:$16 sm:%s1554]
  %vm1556 = vcmask 1045508
  %v1557 = vsel %vm1556, %v1555, %v1552
  %s1558 = scalar_lea.vmem %s0, 257
  %s1559 = smov 192
  %v1560 = vld [vmem:[%s1558] ss:$16 sm:%s1559]
  %vm1561 = vcmask 1047558
  %v1562 = vsel %vm1561, %v1560, %v1557
  %1563 = vrot.lane.b32.xlu0 %v1562, 16
  %v1564 = vpop.permute.xlu0 %1563
  %vm1565 = vcmask 261248
  %s1566 = scalar_lea.vmem %s1, 32
  %1567 = vst.msk [vmem:[%s1566] sm:$0xff] %vm1565, %v1564
  %s1568 = scalar_lea.vmem %s0, 513
  %s1569 = smov 3
  %v1570 = vld [vmem:[%s1568] ss:$16 sm:%s1569]
  %s1571 = scalar_lea.vmem %s0, 513
  %s1572 = smov 12
  %v1573 = vld [vmem:[%s1571] ss:$16 sm:%s1572]
  %vm1574 = vcmask 1043458
  %v1575 = vsel %vm1574, %v1573, %v1570
  %s1576 = scalar_lea.vmem %s0, 513
  %s1577 = smov 48
  %v1578 = vld [vmem:[%s1576] ss:$16 sm:%s1577]
  %vm1579 = vcmask 1045508
  %v1580 = vsel %vm1579, %v1578, %v1575
  %s1581 = scalar_lea.vmem %s0, 513
  %s1582 = smov 192
  %v1583 = vld [vmem:[%s1581] ss:$16 sm:%s1582]
  %vm1584 = vcmask 1047558
  %v1585 = vsel %vm1584, %v1583, %v1580
  %1586 = vrot.lane.b32.xlu0 %v1585, 16
  %v1587 = vpop.permute.xlu0 %1586
  %vm1588 = vcmask 261248
  %s1589 = scalar_lea.vmem %s1, 64
  %1590 = vst.msk [vmem:[%s1589] sm:$0xff] %vm1588, %v1587
  %s1591 = scalar_lea.vmem %s0, 9
  %s1592 = smov 3
  %v1593 = vld [vmem:[%s1591] ss:$16 sm:%s1592]
  %s1594 = scalar_lea.vmem %s0, 9
  %s1595 = smov 12
  %v1596 = vld [vmem:[%s1594] ss:$16 sm:%s1595]
  %vm1597 = vcmask 1043458
  %v1598 = vsel %vm1597, %v1596, %v1593
  %s1599 = scalar_lea.vmem %s0, 9
  %s1600 = smov 48
  %v1601 = vld [vmem:[%s1599] ss:$16 sm:%s1600]
  %vm1602 = vcmask 1045508
  %v1603 = vsel %vm1602, %v1601, %v1598
  %s1604 = scalar_lea.vmem %s0, 9
  %s1605 = smov 192
  %v1606 = vld [vmem:[%s1604] ss:$16 sm:%s1605]
  %vm1607 = vcmask 1047558
  %v1608 = vsel %vm1607, %v1606, %v1603
  %1609 = vrot.lane.b32.xlu0 %v1608, 16
  %v1610 = vpop.permute.xlu0 %1609
  %vm1611 = vcmask 261248
  %s1612 = scalar_lea.vmem %s1, 8
  %1613 = vst.msk [vmem:[%s1612] sm:$0xff] %vm1611, %v1610
  %s1614 = scalar_lea.vmem %s0, 265
  %s1615 = smov 3
  %v1616 = vld [vmem:[%s1614] ss:$16 sm:%s1615]
  %s1617 = scalar_lea.vmem %s0, 265
  %s1618 = smov 12
  %v1619 = vld [vmem:[%s1617] ss:$16 sm:%s1618]
  %vm1620 = vcmask 1043458
  %v1621 = vsel %vm1620, %v1619, %v1616
  %s1622 = scalar_lea.vmem %s0, 265
  %s1623 = smov 48
  %v1624 = vld [vmem:[%s1622] ss:$16 sm:%s1623]
  %vm1625 = vcmask 1045508
  %v1626 = vsel %vm1625, %v1624, %v1621
  %s1627 = scalar_lea.vmem %s0, 265
  %s1628 = smov 192
  %v1629 = vld [vmem:[%s1627] ss:$16 sm:%s1628]
  %vm1630 = vcmask 1047558
  %v1631 = vsel %vm1630, %v1629, %v1626
  %1632 = vrot.lane.b32.xlu0 %v1631, 16
  %v1633 = vpop.permute.xlu0 %1632
  %vm1634 = vcmask 261248
  %s1635 = scalar_lea.vmem %s1, 40
  %1636 = vst.msk [vmem:[%s1635] sm:$0xff] %vm1634, %v1633
  %s1637 = scalar_lea.vmem %s0, 521
  %s1638 = smov 3
  %v1639 = vld [vmem:[%s1637] ss:$16 sm:%s1638]
  %s1640 = scalar_lea.vmem %s0, 521
  %s1641 = smov 12
  %v1642 = vld [vmem:[%s1640] ss:$16 sm:%s1641]
  %vm1643 = vcmask 1043458
  %v1644 = vsel %vm1643, %v1642, %v1639
  %s1645 = scalar_lea.vmem %s0, 521
  %s1646 = smov 48
  %v1647 = vld [vmem:[%s1645] ss:$16 sm:%s1646]
  %vm1648 = vcmask 1045508
  %v1649 = vsel %vm1648, %v1647, %v1644
  %s1650 = scalar_lea.vmem %s0, 521
  %s1651 = smov 192
  %v1652 = vld [vmem:[%s1650] ss:$16 sm:%s1651]
  %vm1653 = vcmask 1047558
  %v1654 = vsel %vm1653, %v1652, %v1649
  %1655 = vrot.lane.b32.xlu0 %v1654, 16
  %v1656 = vpop.permute.xlu0 %1655
  %vm1657 = vcmask 261248
  %s1658 = scalar_lea.vmem %s1, 72
  %1659 = vst.msk [vmem:[%s1658] sm:$0xff] %vm1657, %v1656
  %s1660 = scalar_lea.vmem %s0, 129
  %s1661 = smov 3
  %v1662 = vld [vmem:[%s1660] ss:$16 sm:%s1661]
  %s1663 = scalar_lea.vmem %s0, 129
  %s1664 = smov 12
  %v1665 = vld [vmem:[%s1663] ss:$16 sm:%s1664]
  %vm1666 = vcmask 1043458
  %v1667 = vsel %vm1666, %v1665, %v1662
  %s1668 = scalar_lea.vmem %s0, 129
  %s1669 = smov 48
  %v1670 = vld [vmem:[%s1668] ss:$16 sm:%s1669]
  %vm1671 = vcmask 1045508
  %v1672 = vsel %vm1671, %v1670, %v1667
  %s1673 = scalar_lea.vmem %s0, 129
  %s1674 = smov 192
  %v1675 = vld [vmem:[%s1673] ss:$16 sm:%s1674]
  %vm1676 = vcmask 1047558
  %v1677 = vsel %vm1676, %v1675, %v1672
  %1678 = vrot.lane.b32.xlu0 %v1677, 16
  %v1679 = vpop.permute.xlu0 %1678
  %vm1680 = vcmask 261248
  %s1681 = scalar_lea.vmem %s1, 16
  %1682 = vst.msk [vmem:[%s1681] sm:$0xff] %vm1680, %v1679
  %s1683 = scalar_lea.vmem %s0, 385
  %s1684 = smov 3
  %v1685 = vld [vmem:[%s1683] ss:$16 sm:%s1684]
  %s1686 = scalar_lea.vmem %s0, 385
  %s1687 = smov 12
  %v1688 = vld [vmem:[%s1686] ss:$16 sm:%s1687]
  %vm1689 = vcmask 1043458
  %v1690 = vsel %vm1689, %v1688, %v1685
  %s1691 = scalar_lea.vmem %s0, 385
  %s1692 = smov 48
  %v1693 = vld [vmem:[%s1691] ss:$16 sm:%s1692]
  %vm1694 = vcmask 1045508
  %v1695 = vsel %vm1694, %v1693, %v1690
  %s1696 = scalar_lea.vmem %s0, 385
  %s1697 = smov 192
  %v1698 = vld [vmem:[%s1696] ss:$16 sm:%s1697]
  %vm1699 = vcmask 1047558
  %v1700 = vsel %vm1699, %v1698, %v1695
  %1701 = vrot.lane.b32.xlu0 %v1700, 16
  %v1702 = vpop.permute.xlu0 %1701
  %vm1703 = vcmask 261248
  %s1704 = scalar_lea.vmem %s1, 48
  %1705 = vst.msk [vmem:[%s1704] sm:$0xff] %vm1703, %v1702
  %s1706 = scalar_lea.vmem %s0, 137
  %s1707 = smov 3
  %v1708 = vld [vmem:[%s1706] ss:$16 sm:%s1707]
  %s1709 = scalar_lea.vmem %s0, 137
  %s1710 = smov 12
  %v1711 = vld [vmem:[%s1709] ss:$16 sm:%s1710]
  %vm1712 = vcmask 1043458
  %v1713 = vsel %vm1712, %v1711, %v1708
  %s1714 = scalar_lea.vmem %s0, 137
  %s1715 = smov 48
  %v1716 = vld [vmem:[%s1714] ss:$16 sm:%s1715]
  %vm1717 = vcmask 1045508
  %v1718 = vsel %vm1717, %v1716, %v1713
  %s1719 = scalar_lea.vmem %s0, 137
  %s1720 = smov 192
  %v1721 = vld [vmem:[%s1719] ss:$16 sm:%s1720]
  %vm1722 = vcmask 1047558
  %v1723 = vsel %vm1722, %v1721, %v1718
  %1724 = vrot.lane.b32.xlu0 %v1723, 16
  %v1725 = vpop.permute.xlu0 %1724
  %vm1726 = vcmask 261248
  %s1727 = scalar_lea.vmem %s1, 24
  %1728 = vst.msk [vmem:[%s1727] sm:$0xff] %vm1726, %v1725
  %s1729 = scalar_lea.vmem %s0, 393
  %s1730 = smov 3
  %v1731 = vld [vmem:[%s1729] ss:$16 sm:%s1730]
  %s1732 = scalar_lea.vmem %s0, 393
  %s1733 = smov 12
  %v1734 = vld [vmem:[%s1732] ss:$16 sm:%s1733]
  %vm1735 = vcmask 1043458
  %v1736 = vsel %vm1735, %v1734, %v1731
  %s1737 = scalar_lea.vmem %s0, 393
  %s1738 = smov 48
  %v1739 = vld [vmem:[%s1737] ss:$16 sm:%s1738]
  %vm1740 = vcmask 1045508
  %v1741 = vsel %vm1740, %v1739, %v1736
  %s1742 = scalar_lea.vmem %s0, 393
  %s1743 = smov 192
  %v1744 = vld [vmem:[%s1742] ss:$16 sm:%s1743]
  %vm1745 = vcmask 1047558
  %v1746 = vsel %vm1745, %v1744, %v1741
  %1747 = vrot.lane.b32.xlu0 %v1746, 16
  %v1748 = vpop.permute.xlu0 %1747
  %vm1749 = vcmask 261248
  %s1750 = scalar_lea.vmem %s1, 56
  %1751 = vst.msk [vmem:[%s1750] sm:$0xff] %vm1749, %v1748

// kernel: base_model2_forward.1
$region0: #{base_model2_forward.1}
  #allocation0 [shape = 'u32[]', space=smem, size = 0x4, offset = 0x4, fixed_abs, tag = 'smem constant byte address 0x4 - core index']
  #allocation1 [shape = 'u32[72,128]{1,0:T(1,128)}', space=vmem, size = 0x9000, scoped, tag = 'internal scratch']
  %s0 = inlined_call_operand.vmem [shape: f32[16,8,256], index: 0, kind: input, shape index: {}]
  %s1 = inlined_call_operand.vmem [shape: f32[16,5,8,1], index: 1, kind: input, shape index: {}]
  %s2 = inlined_call_operand.vmem [shape: f32[5,8,256], index: 2, kind: input, shape index: {}]
  %s3 = inlined_call_operand.vmem [shape: s32[16,1], index: 3, kind: input, shape index: {}]
  %s4 = inlined_call_operand.vmem [shape: s32[2,1], index: 4, kind: input, shape index: {}]
  %s5 = inlined_call_operand.vmem [shape: s32[2,1], index: 5, kind: input, shape index: {}]
  %s6 = inlined_call_operand.vmem [shape: f32[512,128], index: 6, kind: input, shape index: {}]
  %s7 = inlined_call_operand.hbm [shape: f32[2,10], index: 7, kind: output, shape index: {}]
  %s8 = sld [smem:[#allocation0]]
  $region38: #{base_model2_forward.1} parent=0
    _
  %s10 = ssub.s32 1, %s8
  %s11 = scalar_select 0, %s10, %s8
  $region1: #{base_model2_forward.1} parent=0
    #allocation2 [shape = 'u8[1024]{0}', space=vmem, size = 0x400, scoped, tag = 'output window, operand 0, single buffered']
    #allocation3 [shape = 's32[1]{0}', space=sflag, size = 0x4, scoped, tag = 'scoped memory for base_model2_forward.1']
    %12 = vsyncpa [#allocation3], 0
    // Predicated region
    $region2: #{base_model2_forward.1} parent=1 // pred_check
      _
    $region3: #{base_model2_forward.1} parent=1 // pred_check_branch
      %14 = sbr.rel (0) target = $region5
    $region4: #{base_model2_forward.1} parent=1 // pred_region
      _
    $region5: #{base_model2_forward.1} parent=1 // pred_fallthru
      _
    // Predicated region
    $region6: #{base_model2_forward.1} parent=1 // pred_check
      _
    $region7: #{base_model2_forward.1} parent=1 // pred_check_branch
      %16 = sbr.rel (0) target = $region9
    $region8: #{base_model2_forward.1} parent=1 // pred_region
      _
    $region9: #{base_model2_forward.1} parent=1 // pred_fallthru
      _
    // Predicated region
    $region10: #{base_model2_forward.1} parent=1 // pred_check
      _
    $region11: #{base_model2_forward.1} parent=1 // pred_check_branch
      %18 = sbr.rel (0) target = $region13
    $region12: #{base_model2_forward.1} parent=1 // pred_region
      _
    $region13: #{base_model2_forward.1} parent=1 // pred_fallthru
      _
    // Predicated region
    $region14: #{base_model2_forward.1} parent=1 // pred_check
      _
    $region15: #{base_model2_forward.1} parent=1 // pred_check_branch
      %20 = sbr.rel (0) target = $region17
    $region16: #{base_model2_forward.1} parent=1 // pred_region
      _
    $region17: #{base_model2_forward.1} parent=1 // pred_fallthru
      _
    // Predicated region
    $region18: #{base_model2_forward.1} parent=1 // pred_check
      _
    $region19: #{base_model2_forward.1} parent=1 // pred_check_branch
      %22 = sbr.rel (0) target = $region21
    $region20: #{base_model2_forward.1} parent=1 // pred_region
      _
    $region21: #{base_model2_forward.1} parent=1 // pred_fallthru
      _
    // Predicated region
    $region22: #{base_model2_forward.1} parent=1 // pred_check
      _
    $region23: #{base_model2_forward.1} parent=1 // pred_check_branch
      %24 = sbr.rel (0) target = $region25
    $region24: #{base_model2_forward.1} parent=1 // pred_region
      _
    $region25: #{base_model2_forward.1} parent=1 // pred_fallthru
      _
    // Predicated region
    $region26: #{base_model2_forward.1} parent=1 // pred_check
      _
    $region27: #{base_model2_forward.1} parent=1 // pred_check_branch
      %26 = sbr.rel (0) target = $region29
    $region28: #{base_model2_forward.1} parent=1 // pred_region
      _
    $region29: #{base_model2_forward.1} parent=1 // pred_fallthru
      _
    %v27 = vld [vmem:[%s0] sm:$0xff]
    %v28 = vld [vmem:[%s0 + $0x8] sm:$0xff]
    %v29 = vld [vmem:[%s1] sm:$0xff]
    %v30 = vld [vmem:[%s1 + $0x8] sm:$0xff]
    %v31 = vld [vmem:[%s1 + $0x10] sm:$0xff]
    %v32 = vld [vmem:[%s1 + $0x18] sm:$0xff]
    %v33 = vld [vmem:[%s1 + $0x20] sm:$0xff]
    %35 = vset.pattern.permute.xlu0 0
    %36 = vperm.xlu0 %35, %v29
    %v37 = vpop.permute.xlu0 %36
    %40 = vset.pattern.permute.xlu0 0
    %41 = vperm.xlu0 %40, %v30
    %v42 = vpop.permute.xlu0 %41
    %45 = vset.pattern.permute.xlu0 0
    %46 = vperm.xlu0 %45, %v31
    %v47 = vpop.permute.xlu0 %46
    %50 = vset.pattern.permute.xlu0 0
    %51 = vperm.xlu0 %50, %v32
    %v52 = vpop.permute.xlu0 %51
    %55 = vset.pattern.permute.xlu0 0
    %56 = vperm.xlu0 %55, %v33
    %v57 = vpop.permute.xlu0 %56
    %v59 = vadd.f32 %v27, %v37
    %v60 = vadd.f32 %v28, %v37
    %v61 = vadd.f32 %v27, %v42
    %v62 = vadd.f32 %v28, %v42
    %v63 = vadd.f32 %v27, %v47
    %v64 = vadd.f32 %v28, %v47
    %v65 = vadd.f32 %v27, %v52
    %v66 = vadd.f32 %v28, %v52
    %v67 = vadd.f32 %v27, %v57
    %v68 = vadd.f32 %v28, %v57
    %v69 = vmax.f32 %v59, -1e+30
    %v70 = vmax.f32 %v60, -1e+30
    %v71 = vmax.f32 %v61, -1e+30
    %v72 = vmax.f32 %v62, -1e+30
    %v73 = vmax.f32 %v63, -1e+30
    %v74 = vmax.f32 %v64, -1e+30
    %v75 = vmax.f32 %v65, -1e+30
    %v76 = vmax.f32 %v66, -1e+30
    %v77 = vmax.f32 %v67, -1e+30
    %v78 = vmax.f32 %v68, -1e+30
    %s79 = scalar_lea.vmem %s0, 16
    %v80 = vld [vmem:[%s79] sm:$0xff]
    %v81 = vld [vmem:[%s79 + $0x8] sm:$0xff]
    %s82 = scalar_lea.vmem %s1, 40
    %v83 = vld [vmem:[%s82] sm:$0xff]
    %v84 = vld [vmem:[%s82 + $0x8] sm:$0xff]
    %v85 = vld [vmem:[%s82 + $0x10] sm:$0xff]
    %v86 = vld [vmem:[%s82 + $0x18] sm:$0xff]
    %v87 = vld [vmem:[%s82 + $0x20] sm:$0xff]
    %89 = vset.pattern.permute.xlu0 0
    %90 = vperm.xlu0 %89, %v83
    %v91 = vpop.permute.xlu0 %90
    %94 = vset.pattern.permute.xlu0 0
    %95 = vperm.xlu0 %94, %v84
    %v96 = vpop.permute.xlu0 %95
    %99 = vset.pattern.permute.xlu0 0
    %100 = vperm.xlu0 %99, %v85
    %v101 = vpop.permute.xlu0 %100
    %104 = vset.pattern.permute.xlu0 0
    %105 = vperm.xlu0 %104, %v86
    %v106 = vpop.permute.xlu0 %105
    %109 = vset.pattern.permute.xlu0 0
    %110 = vperm.xlu0 %109, %v87
    %v111 = vpop.permute.xlu0 %110
    %v113 = vadd.f32 %v80, %v91
    %v114 = vadd.f32 %v81, %v91
    %v115 = vadd.f32 %v80, %v96
    %v116 = vadd.f32 %v81, %v96
    %v117 = vadd.f32 %v80, %v101
    %v118 = vadd.f32 %v81, %v101
    %v119 = vadd.f32 %v80, %v106
    %v120 = vadd.f32 %v81, %v106
    %v121 = vadd.f32 %v80, %v111
    %v122 = vadd.f32 %v81, %v111
    %v123 = vmax.f32 %v69, %v113
    %v124 = vmax.f32 %v70, %v114
    %v125 = vmax.f32 %v71, %v115
    %v126 = vmax.f32 %v72, %v116
    %v127 = vmax.f32 %v73, %v117
    %v128 = vmax.f32 %v74, %v118
    %v129 = vmax.f32 %v75, %v119
    %v130 = vmax.f32 %v76, %v120
    %v131 = vmax.f32 %v77, %v121
    %v132 = vmax.f32 %v78, %v122
    %s133 = scalar_lea.vmem %s0, 32
    %v134 = vld [vmem:[%s133] sm:$0xff]
    %v135 = vld [vmem:[%s133 + $0x8] sm:$0xff]
    %s136 = scalar_lea.vmem %s1, 80
    %v137 = vld [vmem:[%s136] sm:$0xff]
    %v138 = vld [vmem:[%s136 + $0x8] sm:$0xff]
    %v139 = vld [vmem:[%s136 + $0x10] sm:$0xff]
    %v140 = vld [vmem:[%s136 + $0x18] sm:$0xff]
    %v141 = vld [vmem:[%s136 + $0x20] sm:$0xff]
    %143 = vset.pattern.permute.xlu0 0
    %144 = vperm.xlu0 %143, %v137
    %v145 = vpop.permute.xlu0 %144
    %148 = vset.pattern.permute.xlu0 0
    %149 = vperm.xlu0 %148, %v138
    %v150 = vpop.permute.xlu0 %149
    %153 = vset.pattern.permute.xlu0 0
    %154 = vperm.xlu0 %153, %v139
    %v155 = vpop.permute.xlu0 %154
    %158 = vset.pattern.permute.xlu0 0
    %159 = vperm.xlu0 %158, %v140
    %v160 = vpop.permute.xlu0 %159
    %163 = vset.pattern.permute.xlu0 0
    %164 = vperm.xlu0 %163, %v141
    %v165 = vpop.permute.xlu0 %164
    %v167 = vadd.f32 %v134, %v145
    %v168 = vadd.f32 %v135, %v145
    %v169 = vadd.f32 %v134, %v150
    %v170 = vadd.f32 %v135, %v150
    %v171 = vadd.f32 %v134, %v155
    %v172 = vadd.f32 %v135, %v155
    %v173 = vadd.f32 %v134, %v160
    %v174 = vadd.f32 %v135, %v160
    %v175 = vadd.f32 %v134, %v165
    %v176 = vadd.f32 %v135, %v165
    %v177 = vmax.f32 %v123, %v167
    %v178 = vmax.f32 %v124, %v168
    %v179 = vmax.f32 %v125, %v169
    %v180 = vmax.f32 %v126, %v170
    %v181 = vmax.f32 %v127, %v171
    %v182 = vmax.f32 %v128, %v172
    %v183 = vmax.f32 %v129, %v173
    %v184 = vmax.f32 %v130, %v174
    %v185 = vmax.f32 %v131, %v175
    %v186 = vmax.f32 %v132, %v176
    %s187 = scalar_lea.vmem %s0, 48
    %v188 = vld [vmem:[%s187] sm:$0xff]
    %v189 = vld [vmem:[%s187 + $0x8] sm:$0xff]
    %s190 = scalar_lea.vmem %s1, 120
    %v191 = vld [vmem:[%s190] sm:$0xff]
    %v192 = vld [vmem:[%s190 + $0x8] sm:$0xff]
    %v193 = vld [vmem:[%s190 + $0x10] sm:$0xff]
    %v194 = vld [vmem:[%s190 + $0x18] sm:$0xff]
    %v195 = vld [vmem:[%s190 + $0x20] sm:$0xff]
    %197 = vset.pattern.permute.xlu0 0
    %198 = vperm.xlu0 %197, %v191
    %v199 = vpop.permute.xlu0 %198
    %202 = vset.pattern.permute.xlu0 0
    %203 = vperm.xlu0 %202, %v192
    %v204 = vpop.permute.xlu0 %203
    %207 = vset.pattern.permute.xlu0 0
    %208 = vperm.xlu0 %207, %v193
    %v209 = vpop.permute.xlu0 %208
    %212 = vset.pattern.permute.xlu0 0
    %213 = vperm.xlu0 %212, %v194
    %v214 = vpop.permute.xlu0 %213
    %217 = vset.pattern.permute.xlu0 0
    %218 = vperm.xlu0 %217, %v195
    %v219 = vpop.permute.xlu0 %218
    %v221 = vadd.f32 %v188, %v199
    %v222 = vadd.f32 %v189, %v199
    %v223 = vadd.f32 %v188, %v204
    %v224 = vadd.f32 %v189, %v204
    %v225 = vadd.f32 %v188, %v209
    %v226 = vadd.f32 %v189, %v209
    %v227 = vadd.f32 %v188, %v214
    %v228 = vadd.f32 %v189, %v214
    %v229 = vadd.f32 %v188, %v219
    %v230 = vadd.f32 %v189, %v219
    %v231 = vmax.f32 %v177, %v221
    %v232 = vmax.f32 %v178, %v222
    %v233 = vmax.f32 %v179, %v223
    %v234 = vmax.f32 %v180, %v224
    %v235 = vmax.f32 %v181, %v225
    %v236 = vmax.f32 %v182, %v226
    %v237 = vmax.f32 %v183, %v227
    %v238 = vmax.f32 %v184, %v228
    %v239 = vmax.f32 %v185, %v229
    %v240 = vmax.f32 %v186, %v230
    %s241 = scalar_lea.vmem %s0, 64
    %v242 = vld [vmem:[%s241] sm:$0xff]
    %v243 = vld [vmem:[%s241 + $0x8] sm:$0xff]
    %s244 = scalar_lea.vmem %s1, 160
    %v245 = vld [vmem:[%s244] sm:$0xff]
    %v246 = vld [vmem:[%s244 + $0x8] sm:$0xff]
    %v247 = vld [vmem:[%s244 + $0x10] sm:$0xff]
    %v248 = vld [vmem:[%s244 + $0x18] sm:$0xff]
    %v249 = vld [vmem:[%s244 + $0x20] sm:$0xff]
    %251 = vset.pattern.permute.xlu0 0
    %252 = vperm.xlu0 %251, %v245
    %v253 = vpop.permute.xlu0 %252
    %256 = vset.pattern.permute.xlu0 0
    %257 = vperm.xlu0 %256, %v246
    %v258 = vpop.permute.xlu0 %257
    %261 = vset.pattern.permute.xlu0 0
    %262 = vperm.xlu0 %261, %v247
    %v263 = vpop.permute.xlu0 %262
    %266 = vset.pattern.permute.xlu0 0
    %267 = vperm.xlu0 %266, %v248
    %v268 = vpop.permute.xlu0 %267
    %271 = vset.pattern.permute.xlu0 0
    %272 = vperm.xlu0 %271, %v249
    %v273 = vpop.permute.xlu0 %272
    %v275 = vadd.f32 %v242, %v253
    %v276 = vadd.f32 %v243, %v253
    %v277 = vadd.f32 %v242, %v258
    %v278 = vadd.f32 %v243, %v258
    %v279 = vadd.f32 %v242, %v263
    %v280 = vadd.f32 %v243, %v263
    %v281 = vadd.f32 %v242, %v268
    %v282 = vadd.f32 %v243, %v268
    %v283 = vadd.f32 %v242, %v273
    %v284 = vadd.f32 %v243, %v273
    %v285 = vmax.f32 %v231, %v275
    %v286 = vmax.f32 %v232, %v276
    %v287 = vmax.f32 %v233, %v277
    %v288 = vmax.f32 %v234, %v278
    %v289 = vmax.f32 %v235, %v279
    %v290 = vmax.f32 %v236, %v280
    %v291 = vmax.f32 %v237, %v281
    %v292 = vmax.f32 %v238, %v282
    %v293 = vmax.f32 %v239, %v283
    %v294 = vmax.f32 %v240, %v284
    %s295 = scalar_lea.vmem %s0, 80
    %v296 = vld [vmem:[%s295] sm:$0xff]
    %v297 = vld [vmem:[%s295 + $0x8] sm:$0xff]
    %s298 = scalar_lea.vmem %s1, 200
    %v299 = vld [vmem:[%s298] sm:$0xff]
    %v300 = vld [vmem:[%s298 + $0x8] sm:$0xff]
    %v301 = vld [vmem:[%s298 + $0x10] sm:$0xff]
    %v302 = vld [vmem:[%s298 + $0x18] sm:$0xff]
    %v303 = vld [vmem:[%s298 + $0x20] sm:$0xff]
    %305 = vset.pattern.permute.xlu0 0
    %306 = vperm.xlu0 %305, %v299
    %v307 = vpop.permute.xlu0 %306
    %310 = vset.pattern.permute.xlu0 0
    %311 = vperm.xlu0 %310, %v300
    %v312 = vpop.permute.xlu0 %311
    %315 = vset.pattern.permute.xlu0 0
    %316 = vperm.xlu0 %315, %v301
    %v317 = vpop.permute.xlu0 %316
    %320 = vset.pattern.permute.xlu0 0
    %321 = vperm.xlu0 %320, %v302
    %v322 = vpop.permute.xlu0 %321
    %325 = vset.pattern.permute.xlu0 0
    %326 = vperm.xlu0 %325, %v303
    %v327 = vpop.permute.xlu0 %326
    %v329 = vadd.f32 %v296, %v307
    %v330 = vadd.f32 %v297, %v307
    %v331 = vadd.f32 %v296, %v312
    %v332 = vadd.f32 %v297, %v312
    %v333 = vadd.f32 %v296, %v317
    %v334 = vadd.f32 %v297, %v317
    %v335 = vadd.f32 %v296, %v322
    %v336 = vadd.f32 %v297, %v322
    %v337 = vadd.f32 %v296, %v327
    %v338 = vadd.f32 %v297, %v327
    %v339 = vmax.f32 %v285, %v329
    %v340 = vmax.f32 %v286, %v330
    %v341 = vmax.f32 %v287, %v331
    %v342 = vmax.f32 %v288, %v332
    %v343 = vmax.f32 %v289, %v333
    %v344 = vmax.f32 %v290, %v334
    %v345 = vmax.f32 %v291, %v335
    %v346 = vmax.f32 %v292, %v336
    %v347 = vmax.f32 %v293, %v337
    %v348 = vmax.f32 %v294, %v338
    %s349 = scalar_lea.vmem %s0, 96
    %v350 = vld [vmem:[%s349] sm:$0xff]
    %v351 = vld [vmem:[%s349 + $0x8] sm:$0xff]
    %s352 = scalar_lea.vmem %s1, 240
    %v353 = vld [vmem:[%s352] sm:$0xff]
    %v354 = vld [vmem:[%s352 + $0x8] sm:$0xff]
    %v355 = vld [vmem:[%s352 + $0x10] sm:$0xff]
    %v356 = vld [vmem:[%s352 + $0x18] sm:$0xff]
    %v357 = vld [vmem:[%s352 + $0x20] sm:$0xff]
    %359 = vset.pattern.permute.xlu0 0
    %360 = vperm.xlu0 %359, %v353
    %v361 = vpop.permute.xlu0 %360
    %364 = vset.pattern.permute.xlu0 0
    %365 = vperm.xlu0 %364, %v354
    %v366 = vpop.permute.xlu0 %365
    %369 = vset.pattern.permute.xlu0 0
    %370 = vperm.xlu0 %369, %v355
    %v371 = vpop.permute.xlu0 %370
    %374 = vset.pattern.permute.xlu0 0
    %375 = vperm.xlu0 %374, %v356
    %v376 = vpop.permute.xlu0 %375
    %379 = vset.pattern.permute.xlu0 0
    %380 = vperm.xlu0 %379, %v357
    %v381 = vpop.permute.xlu0 %380
    %v383 = vadd.f32 %v350, %v361
    %v384 = vadd.f32 %v351, %v361
    %v385 = vadd.f32 %v350, %v366
    %v386 = vadd.f32 %v351, %v366
    %v387 = vadd.f32 %v350, %v371
    %v388 = vadd.f32 %v351, %v371
    %v389 = vadd.f32 %v350, %v376
    %v390 = vadd.f32 %v351, %v376
    %v391 = vadd.f32 %v350, %v381
    %v392 = vadd.f32 %v351, %v381
    %v393 = vmax.f32 %v339, %v383
    %v394 = vmax.f32 %v340, %v384
    %v395 = vmax.f32 %v341, %v385
    %v396 = vmax.f32 %v342, %v386
    %v397 = vmax.f32 %v343, %v387
    %v398 = vmax.f32 %v344, %v388
    %v399 = vmax.f32 %v345, %v389
    %v400 = vmax.f32 %v346, %v390
    %v401 = vmax.f32 %v347, %v391
    %v402 = vmax.f32 %v348, %v392
    %s403 = scalar_lea.vmem %s0, 112
    %v404 = vld [vmem:[%s403] sm:$0xff]
    %v405 = vld [vmem:[%s403 + $0x8] sm:$0xff]
    %s406 = scalar_lea.vmem %s1, 280
    %v407 = vld [vmem:[%s406] sm:$0xff]
    %v408 = vld [vmem:[%s406 + $0x8] sm:$0xff]
    %v409 = vld [vmem:[%s406 + $0x10] sm:$0xff]
    %v410 = vld [vmem:[%s406 + $0x18] sm:$0xff]
    %v411 = vld [vmem:[%s406 + $0x20] sm:$0xff]
    %413 = vset.pattern.permute.xlu0 0
    %414 = vperm.xlu0 %413, %v407
    %v415 = vpop.permute.xlu0 %414
    %418 = vset.pattern.permute.xlu0 0
    %419 = vperm.xlu0 %418, %v408
    %v420 = vpop.permute.xlu0 %419
    %423 = vset.pattern.permute.xlu0 0
    %424 = vperm.xlu0 %423, %v409
    %v425 = vpop.permute.xlu0 %424
    %428 = vset.pattern.permute.xlu0 0
    %429 = vperm.xlu0 %428, %v410
    %v430 = vpop.permute.xlu0 %429
    %433 = vset.pattern.permute.xlu0 0
    %434 = vperm.xlu0 %433, %v411
    %v435 = vpop.permute.xlu0 %434
    %v437 = vadd.f32 %v404, %v415
    %v438 = vadd.f32 %v405, %v415
    %v439 = vadd.f32 %v404, %v420
    %v440 = vadd.f32 %v405, %v420
    %v441 = vadd.f32 %v404, %v425
    %v442 = vadd.f32 %v405, %v425
    %v443 = vadd.f32 %v404, %v430
    %v444 = vadd.f32 %v405, %v430
    %v445 = vadd.f32 %v404, %v435
    %v446 = vadd.f32 %v405, %v435
    %v447 = vmax.f32 %v393, %v437
    %v448 = vmax.f32 %v394, %v438
    %v449 = vmax.f32 %v395, %v439
    %v450 = vmax.f32 %v396, %v440
    %v451 = vmax.f32 %v397, %v441
    %v452 = vmax.f32 %v398, %v442
    %v453 = vmax.f32 %v399, %v443
    %v454 = vmax.f32 %v400, %v444
    %v455 = vmax.f32 %v401, %v445
    %v456 = vmax.f32 %v402, %v446
    %s457 = scalar_lea.vmem %s0, 128
    %v458 = vld [vmem:[%s457] sm:$0xff]
    %v459 = vld [vmem:[%s457 + $0x8] sm:$0xff]
    %s460 = scalar_lea.vmem %s1, 320
    %v461 = vld [vmem:[%s460] sm:$0xff]
    %v462 = vld [vmem:[%s460 + $0x8] sm:$0xff]
    %v463 = vld [vmem:[%s460 + $0x10] sm:$0xff]
    %v464 = vld [vmem:[%s460 + $0x18] sm:$0xff]
    %v465 = vld [vmem:[%s460 + $0x20] sm:$0xff]
    %467 = vset.pattern.permute.xlu0 0
    %468 = vperm.xlu0 %467, %v461
    %v469 = vpop.permute.xlu0 %468
    %472 = vset.pattern.permute.xlu0 0
    %473 = vperm.xlu0 %472, %v462
    %v474 = vpop.permute.xlu0 %473
    %477 = vset.pattern.permute.xlu0 0
    %478 = vperm.xlu0 %477, %v463
    %v479 = vpop.permute.xlu0 %478
    %482 = vset.pattern.permute.xlu0 0
    %483 = vperm.xlu0 %482, %v464
    %v484 = vpop.permute.xlu0 %483
    %487 = vset.pattern.permute.xlu0 0
    %488 = vperm.xlu0 %487, %v465
    %v489 = vpop.permute.xlu0 %488
    %v491 = vadd.f32 %v458, %v469
    %v492 = vadd.f32 %v459, %v469
    %v493 = vadd.f32 %v458, %v474
    %v494 = vadd.f32 %v459, %v474
    %v495 = vadd.f32 %v458, %v479
    %v496 = vadd.f32 %v459, %v479
    %v497 = vadd.f32 %v458, %v484
    %v498 = vadd.f32 %v459, %v484
    %v499 = vadd.f32 %v458, %v489
    %v500 = vadd.f32 %v459, %v489
    %v501 = vmax.f32 %v447, %v491
    %v502 = vmax.f32 %v448, %v492
    %v503 = vmax.f32 %v449, %v493
    %v504 = vmax.f32 %v450, %v494
    %v505 = vmax.f32 %v451, %v495
    %v506 = vmax.f32 %v452, %v496
    %v507 = vmax.f32 %v453, %v497
    %v508 = vmax.f32 %v454, %v498
    %v509 = vmax.f32 %v455, %v499
    %v510 = vmax.f32 %v456, %v500
    %s511 = scalar_lea.vmem %s0, 144
    %v512 = vld [vmem:[%s511] sm:$0xff]
    %v513 = vld [vmem:[%s511 + $0x8] sm:$0xff]
    %s514 = scalar_lea.vmem %s1, 360
    %v515 = vld [vmem:[%s514] sm:$0xff]
    %v516 = vld [vmem:[%s514 + $0x8] sm:$0xff]
    %v517 = vld [vmem:[%s514 + $0x10] sm:$0xff]
    %v518 = vld [vmem:[%s514 + $0x18] sm:$0xff]
    %v519 = vld [vmem:[%s514 + $0x20] sm:$0xff]
    %521 = vset.pattern.permute.xlu0 0
    %522 = vperm.xlu0 %521, %v515
    %v523 = vpop.permute.xlu0 %522
    %526 = vset.pattern.permute.xlu0 0
    %527 = vperm.xlu0 %526, %v516
    %v528 = vpop.permute.xlu0 %527
    %531 = vset.pattern.permute.xlu0 0
    %532 = vperm.xlu0 %531, %v517
    %v533 = vpop.permute.xlu0 %532
    %536 = vset.pattern.permute.xlu0 0
    %537 = vperm.xlu0 %536, %v518
    %v538 = vpop.permute.xlu0 %537
    %541 = vset.pattern.permute.xlu0 0
    %542 = vperm.xlu0 %541, %v519
    %v543 = vpop.permute.xlu0 %542
    %v545 = vadd.f32 %v512, %v523
    %v546 = vadd.f32 %v513, %v523
    %v547 = vadd.f32 %v512, %v528
    %v548 = vadd.f32 %v513, %v528
    %v549 = vadd.f32 %v512, %v533
    %v550 = vadd.f32 %v513, %v533
    %v551 = vadd.f32 %v512, %v538
    %v552 = vadd.f32 %v513, %v538
    %v553 = vadd.f32 %v512, %v543
    %v554 = vadd.f32 %v513, %v543
    %v555 = vmax.f32 %v501, %v545
    %v556 = vmax.f32 %v502, %v546
    %v557 = vmax.f32 %v503, %v547
    %v558 = vmax.f32 %v504, %v548
    %v559 = vmax.f32 %v505, %v549
    %v560 = vmax.f32 %v506, %v550
    %v561 = vmax.f32 %v507, %v551
    %v562 = vmax.f32 %v508, %v552
    %v563 = vmax.f32 %v509, %v553
    %v564 = vmax.f32 %v510, %v554
    %s565 = scalar_lea.vmem %s0, 160
    %v566 = vld [vmem:[%s565] sm:$0xff]
    %v567 = vld [vmem:[%s565 + $0x8] sm:$0xff]
    %s568 = scalar_lea.vmem %s1, 400
    %v569 = vld [vmem:[%s568] sm:$0xff]
    %v570 = vld [vmem:[%s568 + $0x8] sm:$0xff]
    %v571 = vld [vmem:[%s568 + $0x10] sm:$0xff]
    %v572 = vld [vmem:[%s568 + $0x18] sm:$0xff]
    %v573 = vld [vmem:[%s568 + $0x20] sm:$0xff]
    %575 = vset.pattern.permute.xlu0 0
    %576 = vperm.xlu0 %575, %v569
    %v577 = vpop.permute.xlu0 %576
    %580 = vset.pattern.permute.xlu0 0
    %581 = vperm.xlu0 %580, %v570
    %v582 = vpop.permute.xlu0 %581
    %585 = vset.pattern.permute.xlu0 0
    %586 = vperm.xlu0 %585, %v571
    %v587 = vpop.permute.xlu0 %586
    %590 = vset.pattern.permute.xlu0 0
    %591 = vperm.xlu0 %590, %v572
    %v592 = vpop.permute.xlu0 %591
    %595 = vset.pattern.permute.xlu0 0
    %596 = vperm.xlu0 %595, %v573
    %v597 = vpop.permute.xlu0 %596
    %v599 = vadd.f32 %v566, %v577
    %v600 = vadd.f32 %v567, %v577
    %v601 = vadd.f32 %v566, %v582
    %v602 = vadd.f32 %v567, %v582
    %v603 = vadd.f32 %v566, %v587
    %v604 = vadd.f32 %v567, %v587
    %v605 = vadd.f32 %v566, %v592
    %v606 = vadd.f32 %v567, %v592
    %v607 = vadd.f32 %v566, %v597
    %v608 = vadd.f32 %v567, %v597
    %v609 = vmax.f32 %v555, %v599
    %v610 = vmax.f32 %v556, %v600
    %v611 = vmax.f32 %v557, %v601
    %v612 = vmax.f32 %v558, %v602
    %v613 = vmax.f32 %v559, %v603
    %v614 = vmax.f32 %v560, %v604
    %v615 = vmax.f32 %v561, %v605
    %v616 = vmax.f32 %v562, %v606
    %v617 = vmax.f32 %v563, %v607
    %v618 = vmax.f32 %v564, %v608
    %s619 = scalar_lea.vmem %s0, 176
    %v620 = vld [vmem:[%s619] sm:$0xff]
    %v621 = vld [vmem:[%s619 + $0x8] sm:$0xff]
    %s622 = scalar_lea.vmem %s1, 440
    %v623 = vld [vmem:[%s622] sm:$0xff]
    %v624 = vld [vmem:[%s622 + $0x8] sm:$0xff]
    %v625 = vld [vmem:[%s622 + $0x10] sm:$0xff]
    %v626 = vld [vmem:[%s622 + $0x18] sm:$0xff]
    %v627 = vld [vmem:[%s622 + $0x20] sm:$0xff]
    %629 = vset.pattern.permute.xlu0 0
    %630 = vperm.xlu0 %629, %v623
    %v631 = vpop.permute.xlu0 %630
    %634 = vset.pattern.permute.xlu0 0
    %635 = vperm.xlu0 %634, %v624
    %v636 = vpop.permute.xlu0 %635
    %639 = vset.pattern.permute.xlu0 0
    %640 = vperm.xlu0 %639, %v625
    %v641 = vpop.permute.xlu0 %640
    %644 = vset.pattern.permute.xlu0 0
    %645 = vperm.xlu0 %644, %v626
    %v646 = vpop.permute.xlu0 %645
    %649 = vset.pattern.permute.xlu0 0
    %650 = vperm.xlu0 %649, %v627
    %v651 = vpop.permute.xlu0 %650
    %v653 = vadd.f32 %v620, %v631
    %v654 = vadd.f32 %v621, %v631
    %v655 = vadd.f32 %v620, %v636
    %v656 = vadd.f32 %v621, %v636
    %v657 = vadd.f32 %v620, %v641
    %v658 = vadd.f32 %v621, %v641
    %v659 = vadd.f32 %v620, %v646
    %v660 = vadd.f32 %v621, %v646
    %v661 = vadd.f32 %v620, %v651
    %v662 = vadd.f32 %v621, %v651
    %v663 = vmax.f32 %v609, %v653
    %v664 = vmax.f32 %v610, %v654
    %v665 = vmax.f32 %v611, %v655
    %v666 = vmax.f32 %v612, %v656
    %v667 = vmax.f32 %v613, %v657
    %v668 = vmax.f32 %v614, %v658
    %v669 = vmax.f32 %v615, %v659
    %v670 = vmax.f32 %v616, %v660
    %v671 = vmax.f32 %v617, %v661
    %v672 = vmax.f32 %v618, %v662
    %s673 = scalar_lea.vmem %s0, 192
    %v674 = vld [vmem:[%s673] sm:$0xff]
    %v675 = vld [vmem:[%s673 + $0x8] sm:$0xff]
    %s676 = scalar_lea.vmem %s1, 480
    %v677 = vld [vmem:[%s676] sm:$0xff]
    %v678 = vld [vmem:[%s676 + $0x8] sm:$0xff]
    %v679 = vld [vmem:[%s676 + $0x10] sm:$0xff]
    %v680 = vld [vmem:[%s676 + $0x18] sm:$0xff]
    %v681 = vld [vmem:[%s676 + $0x20] sm:$0xff]
    %683 = vset.pattern.permute.xlu0 0
    %684 = vperm.xlu0 %683, %v677
    %v685 = vpop.permute.xlu0 %684
    %688 = vset.pattern.permute.xlu0 0
    %689 = vperm.xlu0 %688, %v678
    %v690 = vpop.permute.xlu0 %689
    %693 = vset.pattern.permute.xlu0 0
    %694 = vperm.xlu0 %693, %v679
    %v695 = vpop.permute.xlu0 %694
    %698 = vset.pattern.permute.xlu0 0
    %699 = vperm.xlu0 %698, %v680
    %v700 = vpop.permute.xlu0 %699
    %703 = vset.pattern.permute.xlu0 0
    %704 = vperm.xlu0 %703, %v681
    %v705 = vpop.permute.xlu0 %704
    %v707 = vadd.f32 %v674, %v685
    %v708 = vadd.f32 %v675, %v685
    %v709 = vadd.f32 %v674, %v690
    %v710 = vadd.f32 %v675, %v690
    %v711 = vadd.f32 %v674, %v695
    %v712 = vadd.f32 %v675, %v695
    %v713 = vadd.f32 %v674, %v700
    %v714 = vadd.f32 %v675, %v700
    %v715 = vadd.f32 %v674, %v705
    %v716 = vadd.f32 %v675, %v705
    %v717 = vmax.f32 %v663, %v707
    %v718 = vmax.f32 %v664, %v708
    %v719 = vmax.f32 %v665, %v709
    %v720 = vmax.f32 %v666, %v710
    %v721 = vmax.f32 %v667, %v711
    %v722 = vmax.f32 %v668, %v712
    %v723 = vmax.f32 %v669, %v713
    %v724 = vmax.f32 %v670, %v714
    %v725 = vmax.f32 %v671, %v715
    %v726 = vmax.f32 %v672, %v716
    %s727 = scalar_lea.vmem %s0, 208
    %v728 = vld [vmem:[%s727] sm:$0xff]
    %v729 = vld [vmem:[%s727 + $0x8] sm:$0xff]
    %s730 = scalar_lea.vmem %s1, 520
    %v731 = vld [vmem:[%s730] sm:$0xff]
    %v732 = vld [vmem:[%s730 + $0x8] sm:$0xff]
    %v733 = vld [vmem:[%s730 + $0x10] sm:$0xff]
    %v734 = vld [vmem:[%s730 + $0x18] sm:$0xff]
    %v735 = vld [vmem:[%s730 + $0x20] sm:$0xff]
    %737 = vset.pattern.permute.xlu0 0
    %738 = vperm.xlu0 %737, %v731
    %v739 = vpop.permute.xlu0 %738
    %742 = vset.pattern.permute.xlu0 0
    %743 = vperm.xlu0 %742, %v732
    %v744 = vpop.permute.xlu0 %743
    %747 = vset.pattern.permute.xlu0 0
    %748 = vperm.xlu0 %747, %v733
    %v749 = vpop.permute.xlu0 %748
    %752 = vset.pattern.permute.xlu0 0
    %753 = vperm.xlu0 %752, %v734
    %v754 = vpop.permute.xlu0 %753
    %757 = vset.pattern.permute.xlu0 0
    %758 = vperm.xlu0 %757, %v735
    %v759 = vpop.permute.xlu0 %758
    %v761 = vadd.f32 %v728, %v739
    %v762 = vadd.f32 %v729, %v739
    %v763 = vadd.f32 %v728, %v744
    %v764 = vadd.f32 %v729, %v744
    %v765 = vadd.f32 %v728, %v749
    %v766 = vadd.f32 %v729, %v749
    %v767 = vadd.f32 %v728, %v754
    %v768 = vadd.f32 %v729, %v754
    %v769 = vadd.f32 %v728, %v759
    %v770 = vadd.f32 %v729, %v759
    %v771 = vmax.f32 %v717, %v761
    %v772 = vmax.f32 %v718, %v762
    %v773 = vmax.f32 %v719, %v763
    %v774 = vmax.f32 %v720, %v764
    %v775 = vmax.f32 %v721, %v765
    %v776 = vmax.f32 %v722, %v766
    %v777 = vmax.f32 %v723, %v767
    %v778 = vmax.f32 %v724, %v768
    %v779 = vmax.f32 %v725, %v769
    %v780 = vmax.f32 %v726, %v770
    %s781 = scalar_lea.vmem %s0, 224
    %v782 = vld [vmem:[%s781] sm:$0xff]
    %v783 = vld [vmem:[%s781 + $0x8] sm:$0xff]
    %s784 = scalar_lea.vmem %s1, 560
    %v785 = vld [vmem:[%s784] sm:$0xff]
    %v786 = vld [vmem:[%s784 + $0x8] sm:$0xff]
    %v787 = vld [vmem:[%s784 + $0x10] sm:$0xff]
    %v788 = vld [vmem:[%s784 + $0x18] sm:$0xff]
    %v789 = vld [vmem:[%s784 + $0x20] sm:$0xff]
    %791 = vset.pattern.permute.xlu0 0
    %792 = vperm.xlu0 %791, %v785
    %v793 = vpop.permute.xlu0 %792
    %796 = vset.pattern.permute.xlu0 0
    %797 = vperm.xlu0 %796, %v786
    %v798 = vpop.permute.xlu0 %797
    %801 = vset.pattern.permute.xlu0 0
    %802 = vperm.xlu0 %801, %v787
    %v803 = vpop.permute.xlu0 %802
    %806 = vset.pattern.permute.xlu0 0
    %807 = vperm.xlu0 %806, %v788
    %v808 = vpop.permute.xlu0 %807
    %811 = vset.pattern.permute.xlu0 0
    %812 = vperm.xlu0 %811, %v789
    %v813 = vpop.permute.xlu0 %812
    %v815 = vadd.f32 %v782, %v793
    %v816 = vadd.f32 %v783, %v793
    %v817 = vadd.f32 %v782, %v798
    %v818 = vadd.f32 %v783, %v798
    %v819 = vadd.f32 %v782, %v803
    %v820 = vadd.f32 %v783, %v803
    %v821 = vadd.f32 %v782, %v808
    %v822 = vadd.f32 %v783, %v808
    %v823 = vadd.f32 %v782, %v813
    %v824 = vadd.f32 %v783, %v813
    %v825 = vmax.f32 %v771, %v815
    %v826 = vmax.f32 %v772, %v816
    %v827 = vmax.f32 %v773, %v817
    %v828 = vmax.f32 %v774, %v818
    %v829 = vmax.f32 %v775, %v819
    %v830 = vmax.f32 %v776, %v820
    %v831 = vmax.f32 %v777, %v821
    %v832 = vmax.f32 %v778, %v822
    %v833 = vmax.f32 %v779, %v823
    %v834 = vmax.f32 %v780, %v824
    %s835 = scalar_lea.vmem %s0, 240
    %v836 = vld [vmem:[%s835] sm:$0xff]
    %v837 = vld [vmem:[%s835 + $0x8] sm:$0xff]
    %s838 = scalar_lea.vmem %s1, 600
    %v839 = vld [vmem:[%s838] sm:$0xff]
    %v840 = vld [vmem:[%s838 + $0x8] sm:$0xff]
    %v841 = vld [vmem:[%s838 + $0x10] sm:$0xff]
    %v842 = vld [vmem:[%s838 + $0x18] sm:$0xff]
    %v843 = vld [vmem:[%s838 + $0x20] sm:$0xff]
    %845 = vset.pattern.permute.xlu0 0
    %846 = vperm.xlu0 %845, %v839
    %v847 = vpop.permute.xlu0 %846
    %850 = vset.pattern.permute.xlu0 0
    %851 = vperm.xlu0 %850, %v840
    %v852 = vpop.permute.xlu0 %851
    %855 = vset.pattern.permute.xlu0 0
    %856 = vperm.xlu0 %855, %v841
    %v857 = vpop.permute.xlu0 %856
    %860 = vset.pattern.permute.xlu0 0
    %861 = vperm.xlu0 %860, %v842
    %v862 = vpop.permute.xlu0 %861
    %865 = vset.pattern.permute.xlu0 0
    %866 = vperm.xlu0 %865, %v843
    %v867 = vpop.permute.xlu0 %866
    %v869 = vadd.f32 %v836, %v847
    %v870 = vadd.f32 %v837, %v847
    %v871 = vadd.f32 %v836, %v852
    %v872 = vadd.f32 %v837, %v852
    %v873 = vadd.f32 %v836, %v857
    %v874 = vadd.f32 %v837, %v857
    %v875 = vadd.f32 %v836, %v862
    %v876 = vadd.f32 %v837, %v862
    %v877 = vadd.f32 %v836, %v867
    %v878 = vadd.f32 %v837, %v867
    %v879 = vmax.f32 %v825, %v869
    %v880 = vmax.f32 %v826, %v870
    %v881 = vmax.f32 %v827, %v871
    %v882 = vmax.f32 %v828, %v872
    %v883 = vmax.f32 %v829, %v873
    %v884 = vmax.f32 %v830, %v874
    %v885 = vmax.f32 %v831, %v875
    %v886 = vmax.f32 %v832, %v876
    %v887 = vmax.f32 %v833, %v877
    %v888 = vmax.f32 %v834, %v878
    %v889 = vld [vmem:[%s2] sm:$0xff]
    %v890 = vld [vmem:[%s2 + $0x8] sm:$0xff]
    %v891 = vadd.f32 %v879, %v889
    %v892 = vadd.f32 %v880, %v890
    %v893 = vadd.f32 %v881, %v889
    %v894 = vadd.f32 %v882, %v890
    %v895 = vadd.f32 %v883, %v889
    %v896 = vadd.f32 %v884, %v890
    %v897 = vadd.f32 %v885, %v889
    %v898 = vadd.f32 %v886, %v890
    %v899 = vadd.f32 %v887, %v889
    %v900 = vadd.f32 %v888, %v890
    %901 = vrot.lane.b32.xlu0 %v891, 1
    %v902 = vpop.permute.xlu0 %901
    %903 = vrot.lane.b32.xlu0 %v893, 1
    %v904 = vpop.permute.xlu0 %903
    %905 = vrot.lane.b32.xlu0 %v895, 1
    %v906 = vpop.permute.xlu0 %905
    %907 = vrot.lane.b32.xlu0 %v897, 1
    %v908 = vpop.permute.xlu0 %907
    %909 = vrot.lane.b32.xlu0 %v899, 1
    %v910 = vpop.permute.xlu0 %909
    %911 = vrot.lane.b32.xlu0 %v892, 1
    %v912 = vpop.permute.xlu0 %911
    %913 = vrot.lane.b32.xlu0 %v894, 1
    %v914 = vpop.permute.xlu0 %913
    %915 = vrot.lane.b32.xlu0 %v896, 1
    %v916 = vpop.permute.xlu0 %915
    %917 = vrot.lane.b32.xlu0 %v898, 1
    %v918 = vpop.permute.xlu0 %917
    %919 = vrot.lane.b32.xlu0 %v900, 1
    %v920 = vpop.permute.xlu0 %919
    %v921 = vlaneseq
    %v922 = vand.u32 %v921, 127
    %vm923 = vcmp.lt.s32.totalorder %v922, 1
    %v924 = vsel %vm923, %v902, %v912
    %v925 = vsel %vm923, %v904, %v914
    %v926 = vsel %vm923, %v906, %v916
    %v927 = vsel %vm923, %v908, %v918
    %v928 = vsel %vm923, %v910, %v920
    %v929 = vsel %vm923, %v912, %v902
    %v930 = vsel %vm923, %v914, %v904
    %v931 = vsel %vm923, %v916, %v906
    %v932 = vsel %vm923, %v918, %v908
    %v933 = vsel %vm923, %v920, %v910
    %v934 = vmax.f32 %v891, %v929
    %v935 = vmax.f32 %v892, %v924
    %v936 = vmax.f32 %v893, %v930
    %v937 = vmax.f32 %v894, %v925
    %v938 = vmax.f32 %v895, %v931
    %v939 = vmax.f32 %v896, %v926
    %v940 = vmax.f32 %v897, %v932
    %v941 = vmax.f32 %v898, %v927
    %v942 = vmax.f32 %v899, %v933
    %v943 = vmax.f32 %v900, %v928
    %944 = vrot.lane.b32.xlu0 %v934, 2
    %v945 = vpop.permute.xlu0 %944
    %946 = vrot.lane.b32.xlu0 %v936, 2
    %v947 = vpop.permute.xlu0 %946
    %948 = vrot.lane.b32.xlu0 %v938, 2
    %v949 = vpop.permute.xlu0 %948
    %950 = vrot.lane.b32.xlu0 %v940, 2
    %v951 = vpop.permute.xlu0 %950
    %952 = vrot.lane.b32.xlu0 %v942, 2
    %v953 = vpop.permute.xlu0 %952
    %954 = vrot.lane.b32.xlu0 %v935, 2
    %v955 = vpop.permute.xlu0 %954
    %956 = vrot.lane.b32.xlu0 %v937, 2
    %v957 = vpop.permute.xlu0 %956
    %958 = vrot.lane.b32.xlu0 %v939, 2
    %v959 = vpop.permute.xlu0 %958
    %960 = vrot.lane.b32.xlu0 %v941, 2
    %v961 = vpop.permute.xlu0 %960
    %962 = vrot.lane.b32.xlu0 %v943, 2
    %v963 = vpop.permute.xlu0 %962
    %vm964 = vcmp.lt.s32.totalorder %v922, 2
    %v965 = vsel %vm964, %v945, %v955
    %v966 = vsel %vm964, %v947, %v957
    %v967 = vsel %vm964, %v949, %v959
    %v968 = vsel %vm964, %v951, %v961
    %v969 = vsel %vm964, %v953, %v963
    %v970 = vsel %vm964, %v955, %v945
    %v971 = vsel %vm964, %v957, %v947
    %v972 = vsel %vm964, %v959, %v949
    %v973 = vsel %vm964, %v961, %v951
    %v974 = vsel %vm964, %v963, %v953
    %v975 = vmax.f32 %v934, %v970
    %v976 = vmax.f32 %v935, %v965
    %v977 = vmax.f32 %v936, %v971
    %v978 = vmax.f32 %v937, %v966
    %v979 = vmax.f32 %v938, %v972
    %v980 = vmax.f32 %v939, %v967
    %v981 = vmax.f32 %v940, %v973
    %v982 = vmax.f32 %v941, %v968
    %v983 = vmax.f32 %v942, %v974
    %v984 = vmax.f32 %v943, %v969
    %985 = vrot.lane.b32.xlu0 %v975, 4
    %v986 = vpop.permute.xlu0 %985
    %987 = vrot.lane.b32.xlu0 %v977, 4
    %v988 = vpop.permute.xlu0 %987
    %989 = vrot.lane.b32.xlu0 %v979, 4
    %v990 = vpop.permute.xlu0 %989
    %991 = vrot.lane.b32.xlu0 %v981, 4
    %v992 = vpop.permute.xlu0 %991
    %993 = vrot.lane.b32.xlu0 %v983, 4
    %v994 = vpop.permute.xlu0 %993
    %995 = vrot.lane.b32.xlu0 %v976, 4
    %v996 = vpop.permute.xlu0 %995
    %997 = vrot.lane.b32.xlu0 %v978, 4
    %v998 = vpop.permute.xlu0 %997
    %999 = vrot.lane.b32.xlu0 %v980, 4
    %v1000 = vpop.permute.xlu0 %999
    %1001 = vrot.lane.b32.xlu0 %v982, 4
    %v1002 = vpop.permute.xlu0 %1001
    %1003 = vrot.lane.b32.xlu0 %v984, 4
    %v1004 = vpop.permute.xlu0 %1003
    %vm1005 = vcmp.lt.s32.totalorder %v922, 4
    %v1006 = vsel %vm1005, %v986, %v996
    %v1007 = vsel %vm1005, %v988, %v998
    %v1008 = vsel %vm1005, %v990, %v1000
    %v1009 = vsel %vm1005, %v992, %v1002
    %v1010 = vsel %vm1005, %v994, %v1004
    %v1011 = vsel %vm1005, %v996, %v986
    %v1012 = vsel %vm1005, %v998, %v988
    %v1013 = vsel %vm1005, %v1000, %v990
    %v1014 = vsel %vm1005, %v1002, %v992
    %v1015 = vsel %vm1005, %v1004, %v994
    %v1016 = vmax.f32 %v975, %v1011
    %v1017 = vmax.f32 %v976, %v1006
    %v1018 = vmax.f32 %v977, %v1012
    %v1019 = vmax.f32 %v978, %v1007
    %v1020 = vmax.f32 %v979, %v1013
    %v1021 = vmax.f32 %v980, %v1008
    %v1022 = vmax.f32 %v981, %v1014
    %v1023 = vmax.f32 %v982, %v1009
    %v1024 = vmax.f32 %v983, %v1015
    %v1025 = vmax.f32 %v984, %v1010
    %1026 = vrot.lane.b32.xlu0 %v1016, 8
    %v1027 = vpop.permute.xlu0 %1026
    %1028 = vrot.lane.b32.xlu0 %v1018, 8
    %v1029 = vpop.permute.xlu0 %1028
    %1030 = vrot.lane.b32.xlu0 %v1020, 8
    %v1031 = vpop.permute.xlu0 %1030
    %1032 = vrot.lane.b32.xlu0 %v1022, 8
    %v1033 = vpop.permute.xlu0 %1032
    %1034 = vrot.lane.b32.xlu0 %v1024, 8
    %v1035 = vpop.permute.xlu0 %1034
    %1036 = vrot.lane.b32.xlu0 %v1017, 8
    %v1037 = vpop.permute.xlu0 %1036
    %1038 = vrot.lane.b32.xlu0 %v1019, 8
    %v1039 = vpop.permute.xlu0 %1038
    %1040 = vrot.lane.b32.xlu0 %v1021, 8
    %v1041 = vpop.permute.xlu0 %1040
    %1042 = vrot.lane.b32.xlu0 %v1023, 8
    %v1043 = vpop.permute.xlu0 %1042
    %1044 = vrot.lane.b32.xlu0 %v1025, 8
    %v1045 = vpop.permute.xlu0 %1044
    %vm1046 = vcmp.lt.s32.totalorder %v922, 8
    %v1047 = vsel %vm1046, %v1027, %v1037
    %v1048 = vsel %vm1046, %v1029, %v1039
    %v1049 = vsel %vm1046, %v1031, %v1041
    %v1050 = vsel %vm1046, %v1033, %v1043
    %v1051 = vsel %vm1046, %v1035, %v1045
    %v1052 = vsel %vm1046, %v1037, %v1027
    %v1053 = vsel %vm1046, %v1039, %v1029
    %v1054 = vsel %vm1046, %v1041, %v1031
    %v1055 = vsel %vm1046, %v1043, %v1033
    %v1056 = vsel %vm1046, %v1045, %v1035
    %v1057 = vmax.f32 %v1016, %v1052
    %v1058 = vmax.f32 %v1017, %v1047
    %v1059 = vmax.f32 %v1018, %v1053
    %v1060 = vmax.f32 %v1019, %v1048
    %v1061 = vmax.f32 %v1020, %v1054
    %v1062 = vmax.f32 %v1021, %v1049
    %v1063 = vmax.f32 %v1022, %v1055
    %v1064 = vmax.f32 %v1023, %v1050
    %v1065 = vmax.f32 %v1024, %v1056
    %v1066 = vmax.f32 %v1025, %v1051
    %v1067 = vadd.f32 %v1057, 0.0
    %v1068 = vadd.f32 %v1058, 0.0
    %v1069 = vadd.f32 %v1059, 0.0
    %v1070 = vadd.f32 %v1060, 0.0
    %v1071 = vadd.f32 %v1061, 0.0
    %v1072 = vadd.f32 %v1062, 0.0
    %v1073 = vadd.f32 %v1063, 0.0
    %v1074 = vadd.f32 %v1064, 0.0
    %v1075 = vadd.f32 %v1065, 0.0
    %v1076 = vadd.f32 %v1066, 0.0
    %s1077 = scalar_lea.vmem %s2, 16
    %v1078 = vld [vmem:[%s1077] sm:$0xff]
    %v1079 = vld [vmem:[%s1077 + $0x8] sm:$0xff]
    %v1080 = vadd.f32 %v879, %v1078
    %v1081 = vadd.f32 %v880, %v1079
    %v1082 = vadd.f32 %v881, %v1078
    %v1083 = vadd.f32 %v882, %v1079
    %v1084 = vadd.f32 %v883, %v1078
    %v1085 = vadd.f32 %v884, %v1079
    %v1086 = vadd.f32 %v885, %v1078
    %v1087 = vadd.f32 %v886, %v1079
    %v1088 = vadd.f32 %v887, %v1078
    %v1089 = vadd.f32 %v888, %v1079
    %1090 = vrot.lane.b32.xlu0 %v1080, 1
    %v1091 = vpop.permute.xlu0 %1090
    %1092 = vrot.lane.b32.xlu0 %v1082, 1
    %v1093 = vpop.permute.xlu0 %1092
    %1094 = vrot.lane.b32.xlu0 %v1084, 1
    %v1095 = vpop.permute.xlu0 %1094
    %1096 = vrot.lane.b32.xlu0 %v1086, 1
    %v1097 = vpop.permute.xlu0 %1096
    %1098 = vrot.lane.b32.xlu0 %v1088, 1
    %v1099 = vpop.permute.xlu0 %1098
    %1100 = vrot.lane.b32.xlu0 %v1081, 1
    %v1101 = vpop.permute.xlu0 %1100
    %1102 = vrot.lane.b32.xlu0 %v1083, 1
    %v1103 = vpop.permute.xlu0 %1102
    %1104 = vrot.lane.b32.xlu0 %v1085, 1
    %v1105 = vpop.permute.xlu0 %1104
    %1106 = vrot.lane.b32.xlu0 %v1087, 1
    %v1107 = vpop.permute.xlu0 %1106
    %1108 = vrot.lane.b32.xlu0 %v1089, 1
    %v1109 = vpop.permute.xlu0 %1108
    %v1110 = vsel %vm923, %v1091, %v1101
    %v1111 = vsel %vm923, %v1093, %v1103
    %v1112 = vsel %vm923, %v1095, %v1105
    %v1113 = vsel %vm923, %v1097, %v1107
    %v1114 = vsel %vm923, %v1099, %v1109
    %v1115 = vsel %vm923, %v1101, %v1091
    %v1116 = vsel %vm923, %v1103, %v1093
    %v1117 = vsel %vm923, %v1105, %v1095
    %v1118 = vsel %vm923, %v1107, %v1097
    %v1119 = vsel %vm923, %v1109, %v1099
    %v1120 = vmax.f32 %v1080, %v1115
    %v1121 = vmax.f32 %v1081, %v1110
    %v1122 = vmax.f32 %v1082, %v1116
    %v1123 = vmax.f32 %v1083, %v1111
    %v1124 = vmax.f32 %v1084, %v1117
    %v1125 = vmax.f32 %v1085, %v1112
    %v1126 = vmax.f32 %v1086, %v1118
    %v1127 = vmax.f32 %v1087, %v1113
    %v1128 = vmax.f32 %v1088, %v1119
    %v1129 = vmax.f32 %v1089, %v1114
    %1130 = vrot.lane.b32.xlu0 %v1120, 2
    %v1131 = vpop.permute.xlu0 %1130
    %1132 = vrot.lane.b32.xlu0 %v1122, 2
    %v1133 = vpop.permute.xlu0 %1132
    %1134 = vrot.lane.b32.xlu0 %v1124, 2
    %v1135 = vpop.permute.xlu0 %1134
    %1136 = vrot.lane.b32.xlu0 %v1126, 2
    %v1137 = vpop.permute.xlu0 %1136
    %1138 = vrot.lane.b32.xlu0 %v1128, 2
    %v1139 = vpop.permute.xlu0 %1138
    %1140 = vrot.lane.b32.xlu0 %v1121, 2
    %v1141 = vpop.permute.xlu0 %1140
    %1142 = vrot.lane.b32.xlu0 %v1123, 2
    %v1143 = vpop.permute.xlu0 %1142
    %1144 = vrot.lane.b32.xlu0 %v1125, 2
    %v1145 = vpop.permute.xlu0 %1144
    %1146 = vrot.lane.b32.xlu0 %v1127, 2
    %v1147 = vpop.permute.xlu0 %1146
    %1148 = vrot.lane.b32.xlu0 %v1129, 2
    %v1149 = vpop.permute.xlu0 %1148
    %v1150 = vsel %vm964, %v1131, %v1141
    %v1151 = vsel %vm964, %v1133, %v1143
    %v1152 = vsel %vm964, %v1135, %v1145
    %v1153 = vsel %vm964, %v1137, %v1147
    %v1154 = vsel %vm964, %v1139, %v1149
    %v1155 = vsel %vm964, %v1141, %v1131
    %v1156 = vsel %vm964, %v1143, %v1133
    %v1157 = vsel %vm964, %v1145, %v1135
    %v1158 = vsel %vm964, %v1147, %v1137
    %v1159 = vsel %vm964, %v1149, %v1139
    %v1160 = vmax.f32 %v1120, %v1155
    %v1161 = vmax.f32 %v1121, %v1150
    %v1162 = vmax.f32 %v1122, %v1156
    %v1163 = vmax.f32 %v1123, %v1151
    %v1164 = vmax.f32 %v1124, %v1157
    %v1165 = vmax.f32 %v1125, %v1152
    %v1166 = vmax.f32 %v1126, %v1158
    %v1167 = vmax.f32 %v1127, %v1153
    %v1168 = vmax.f32 %v1128, %v1159
    %v1169 = vmax.f32 %v1129, %v1154
    %1170 = vrot.lane.b32.xlu0 %v1160, 4
    %v1171 = vpop.permute.xlu0 %1170
    %1172 = vrot.lane.b32.xlu0 %v1162, 4
    %v1173 = vpop.permute.xlu0 %1172
    %1174 = vrot.lane.b32.xlu0 %v1164, 4
    %v1175 = vpop.permute.xlu0 %1174
    %1176 = vrot.lane.b32.xlu0 %v1166, 4
    %v1177 = vpop.permute.xlu0 %1176
    %1178 = vrot.lane.b32.xlu0 %v1168, 4
    %v1179 = vpop.permute.xlu0 %1178
    %1180 = vrot.lane.b32.xlu0 %v1161, 4
    %v1181 = vpop.permute.xlu0 %1180
    %1182 = vrot.lane.b32.xlu0 %v1163, 4
    %v1183 = vpop.permute.xlu0 %1182
    %1184 = vrot.lane.b32.xlu0 %v1165, 4
    %v1185 = vpop.permute.xlu0 %1184
    %1186 = vrot.lane.b32.xlu0 %v1167, 4
    %v1187 = vpop.permute.xlu0 %1186
    %1188 = vrot.lane.b32.xlu0 %v1169, 4
    %v1189 = vpop.permute.xlu0 %1188
    %v1190 = vsel %vm1005, %v1171, %v1181
    %v1191 = vsel %vm1005, %v1173, %v1183
    %v1192 = vsel %vm1005, %v1175, %v1185
    %v1193 = vsel %vm1005, %v1177, %v1187
    %v1194 = vsel %vm1005, %v1179, %v1189
    %v1195 = vsel %vm1005, %v1181, %v1171
    %v1196 = vsel %vm1005, %v1183, %v1173
    %v1197 = vsel %vm1005, %v1185, %v1175
    %v1198 = vsel %vm1005, %v1187, %v1177
    %v1199 = vsel %vm1005, %v1189, %v1179
    %v1200 = vmax.f32 %v1160, %v1195
    %v1201 = vmax.f32 %v1161, %v1190
    %v1202 = vmax.f32 %v1162, %v1196
    %v1203 = vmax.f32 %v1163, %v1191
    %v1204 = vmax.f32 %v1164, %v1197
    %v1205 = vmax.f32 %v1165, %v1192
    %v1206 = vmax.f32 %v1166, %v1198
    %v1207 = vmax.f32 %v1167, %v1193
    %v1208 = vmax.f32 %v1168, %v1199
    %v1209 = vmax.f32 %v1169, %v1194
    %1210 = vrot.lane.b32.xlu0 %v1200, 8
    %v1211 = vpop.permute.xlu0 %1210
    %1212 = vrot.lane.b32.xlu0 %v1202, 8
    %v1213 = vpop.permute.xlu0 %1212
    %1214 = vrot.lane.b32.xlu0 %v1204, 8
    %v1215 = vpop.permute.xlu0 %1214
    %1216 = vrot.lane.b32.xlu0 %v1206, 8
    %v1217 = vpop.permute.xlu0 %1216
    %1218 = vrot.lane.b32.xlu0 %v1208, 8
    %v1219 = vpop.permute.xlu0 %1218
    %1220 = vrot.lane.b32.xlu0 %v1201, 8
    %v1221 = vpop.permute.xlu0 %1220
    %1222 = vrot.lane.b32.xlu0 %v1203, 8
    %v1223 = vpop.permute.xlu0 %1222
    %1224 = vrot.lane.b32.xlu0 %v1205, 8
    %v1225 = vpop.permute.xlu0 %1224
    %1226 = vrot.lane.b32.xlu0 %v1207, 8
    %v1227 = vpop.permute.xlu0 %1226
    %1228 = vrot.lane.b32.xlu0 %v1209, 8
    %v1229 = vpop.permute.xlu0 %1228
    %v1230 = vsel %vm1046, %v1211, %v1221
    %v1231 = vsel %vm1046, %v1213, %v1223
    %v1232 = vsel %vm1046, %v1215, %v1225
    %v1233 = vsel %vm1046, %v1217, %v1227
    %v1234 = vsel %vm1046, %v1219, %v1229
    %v1235 = vsel %vm1046, %v1221, %v1211
    %v1236 = vsel %vm1046, %v1223, %v1213
    %v1237 = vsel %vm1046, %v1225, %v1215
    %v1238 = vsel %vm1046, %v1227, %v1217
    %v1239 = vsel %vm1046, %v1229, %v1219
    %v1240 = vmax.f32 %v1200, %v1235
    %v1241 = vmax.f32 %v1201, %v1230
    %v1242 = vmax.f32 %v1202, %v1236
    %v1243 = vmax.f32 %v1203, %v1231
    %v1244 = vmax.f32 %v1204, %v1237
    %v1245 = vmax.f32 %v1205, %v1232
    %v1246 = vmax.f32 %v1206, %v1238
    %v1247 = vmax.f32 %v1207, %v1233
    %v1248 = vmax.f32 %v1208, %v1239
    %v1249 = vmax.f32 %v1209, %v1234
    %v1250 = vadd.f32 %v1067, %v1240
    %v1251 = vadd.f32 %v1068, %v1241
    %v1252 = vadd.f32 %v1069, %v1242
    %v1253 = vadd.f32 %v1070, %v1243
    %v1254 = vadd.f32 %v1071, %v1244
    %v1255 = vadd.f32 %v1072, %v1245
    %v1256 = vadd.f32 %v1073, %v1246
    %v1257 = vadd.f32 %v1074, %v1247
    %v1258 = vadd.f32 %v1075, %v1248
    %v1259 = vadd.f32 %v1076, %v1249
    %s1260 = scalar_lea.vmem %s2, 32
    %v1261 = vld [vmem:[%s1260] sm:$0xff]
    %v1262 = vld [vmem:[%s1260 + $0x8] sm:$0xff]
    %v1263 = vadd.f32 %v879, %v1261
    %v1264 = vadd.f32 %v880, %v1262
    %v1265 = vadd.f32 %v881, %v1261
    %v1266 = vadd.f32 %v882, %v1262
    %v1267 = vadd.f32 %v883, %v1261
    %v1268 = vadd.f32 %v884, %v1262
    %v1269 = vadd.f32 %v885, %v1261
    %v1270 = vadd.f32 %v886, %v1262
    %v1271 = vadd.f32 %v887, %v1261
    %v1272 = vadd.f32 %v888, %v1262
    %1273 = vrot.lane.b32.xlu0 %v1263, 1
    %v1274 = vpop.permute.xlu0 %1273
    %1275 = vrot.lane.b32.xlu0 %v1265, 1
    %v1276 = vpop.permute.xlu0 %1275
    %1277 = vrot.lane.b32.xlu0 %v1267, 1
    %v1278 = vpop.permute.xlu0 %1277
    %1279 = vrot.lane.b32.xlu0 %v1269, 1
    %v1280 = vpop.permute.xlu0 %1279
    %1281 = vrot.lane.b32.xlu0 %v1271, 1
    %v1282 = vpop.permute.xlu0 %1281
    %1283 = vrot.lane.b32.xlu0 %v1264, 1
    %v1284 = vpop.permute.xlu0 %1283
    %1285 = vrot.lane.b32.xlu0 %v1266, 1
    %v1286 = vpop.permute.xlu0 %1285
    %1287 = vrot.lane.b32.xlu0 %v1268, 1
    %v1288 = vpop.permute.xlu0 %1287
    %1289 = vrot.lane.b32.xlu0 %v1270, 1
    %v1290 = vpop.permute.xlu0 %1289
    %1291 = vrot.lane.b32.xlu0 %v1272, 1
    %v1292 = vpop.permute.xlu0 %1291
    %v1293 = vsel %vm923, %v1274, %v1284
    %v1294 = vsel %vm923, %v1276, %v1286
    %v1295 = vsel %vm923, %v1278, %v1288
    %v1296 = vsel %vm923, %v1280, %v1290
    %v1297 = vsel %vm923, %v1282, %v1292
    %v1298 = vsel %vm923, %v1284, %v1274
    %v1299 = vsel %vm923, %v1286, %v1276
    %v1300 = vsel %vm923, %v1288, %v1278
    %v1301 = vsel %vm923, %v1290, %v1280
    %v1302 = vsel %vm923, %v1292, %v1282
    %v1303 = vmax.f32 %v1263, %v1298
    %v1304 = vmax.f32 %v1264, %v1293
    %v1305 = vmax.f32 %v1265, %v1299
    %v1306 = vmax.f32 %v1266, %v1294
    %v1307 = vmax.f32 %v1267, %v1300
    %v1308 = vmax.f32 %v1268, %v1295
    %v1309 = vmax.f32 %v1269, %v1301
    %v1310 = vmax.f32 %v1270, %v1296
    %v1311 = vmax.f32 %v1271, %v1302
    %v1312 = vmax.f32 %v1272, %v1297
    %1313 = vrot.lane.b32.xlu0 %v1303, 2
    %v1314 = vpop.permute.xlu0 %1313
    %1315 = vrot.lane.b32.xlu0 %v1305, 2
    %v1316 = vpop.permute.xlu0 %1315
    %1317 = vrot.lane.b32.xlu0 %v1307, 2
    %v1318 = vpop.permute.xlu0 %1317
    %1319 = vrot.lane.b32.xlu0 %v1309, 2
    %v1320 = vpop.permute.xlu0 %1319
    %1321 = vrot.lane.b32.xlu0 %v1311, 2
    %v1322 = vpop.permute.xlu0 %1321
    %1323 = vrot.lane.b32.xlu0 %v1304, 2
    %v1324 = vpop.permute.xlu0 %1323
    %1325 = vrot.lane.b32.xlu0 %v1306, 2
    %v1326 = vpop.permute.xlu0 %1325
    %1327 = vrot.lane.b32.xlu0 %v1308, 2
    %v1328 = vpop.permute.xlu0 %1327
    %1329 = vrot.lane.b32.xlu0 %v1310, 2
    %v1330 = vpop.permute.xlu0 %1329
    %1331 = vrot.lane.b32.xlu0 %v1312, 2
    %v1332 = vpop.permute.xlu0 %1331
    %v1333 = vsel %vm964, %v1314, %v1324
    %v1334 = vsel %vm964, %v1316, %v1326
    %v1335 = vsel %vm964, %v1318, %v1328
    %v1336 = vsel %vm964, %v1320, %v1330
    %v1337 = vsel %vm964, %v1322, %v1332
    %v1338 = vsel %vm964, %v1324, %v1314
    %v1339 = vsel %vm964, %v1326, %v1316
    %v1340 = vsel %vm964, %v1328, %v1318
    %v1341 = vsel %vm964, %v1330, %v1320
    %v1342 = vsel %vm964, %v1332, %v1322
    %v1343 = vmax.f32 %v1303, %v1338
    %v1344 = vmax.f32 %v1304, %v1333
    %v1345 = vmax.f32 %v1305, %v1339
    %v1346 = vmax.f32 %v1306, %v1334
    %v1347 = vmax.f32 %v1307, %v1340
    %v1348 = vmax.f32 %v1308, %v1335
    %v1349 = vmax.f32 %v1309, %v1341
    %v1350 = vmax.f32 %v1310, %v1336
    %v1351 = vmax.f32 %v1311, %v1342
    %v1352 = vmax.f32 %v1312, %v1337
    %1353 = vrot.lane.b32.xlu0 %v1343, 4
    %v1354 = vpop.permute.xlu0 %1353
    %1355 = vrot.lane.b32.xlu0 %v1345, 4
    %v1356 = vpop.permute.xlu0 %1355
    %1357 = vrot.lane.b32.xlu0 %v1347, 4
    %v1358 = vpop.permute.xlu0 %1357
    %1359 = vrot.lane.b32.xlu0 %v1349, 4
    %v1360 = vpop.permute.xlu0 %1359
    %1361 = vrot.lane.b32.xlu0 %v1351, 4
    %v1362 = vpop.permute.xlu0 %1361
    %1363 = vrot.lane.b32.xlu0 %v1344, 4
    %v1364 = vpop.permute.xlu0 %1363
    %1365 = vrot.lane.b32.xlu0 %v1346, 4
    %v1366 = vpop.permute.xlu0 %1365
    %1367 = vrot.lane.b32.xlu0 %v1348, 4
    %v1368 = vpop.permute.xlu0 %1367
    %1369 = vrot.lane.b32.xlu0 %v1350, 4
    %v1370 = vpop.permute.xlu0 %1369
    %1371 = vrot.lane.b32.xlu0 %v1352, 4
    %v1372 = vpop.permute.xlu0 %1371
    %v1373 = vsel %vm1005, %v1354, %v1364
    %v1374 = vsel %vm1005, %v1356, %v1366
    %v1375 = vsel %vm1005, %v1358, %v1368
    %v1376 = vsel %vm1005, %v1360, %v1370
    %v1377 = vsel %vm1005, %v1362, %v1372
    %v1378 = vsel %vm1005, %v1364, %v1354
    %v1379 = vsel %vm1005, %v1366, %v1356
    %v1380 = vsel %vm1005, %v1368, %v1358
    %v1381 = vsel %vm1005, %v1370, %v1360
    %v1382 = vsel %vm1005, %v1372, %v1362
    %v1383 = vmax.f32 %v1343, %v1378
    %v1384 = vmax.f32 %v1344, %v1373
    %v1385 = vmax.f32 %v1345, %v1379
    %v1386 = vmax.f32 %v1346, %v1374
    %v1387 = vmax.f32 %v1347, %v1380
    %v1388 = vmax.f32 %v1348, %v1375
    %v1389 = vmax.f32 %v1349, %v1381
    %v1390 = vmax.f32 %v1350, %v1376
    %v1391 = vmax.f32 %v1351, %v1382
    %v1392 = vmax.f32 %v1352, %v1377
    %1393 = vrot.lane.b32.xlu0 %v1383, 8
    %v1394 = vpop.permute.xlu0 %1393
    %1395 = vrot.lane.b32.xlu0 %v1385, 8
    %v1396 = vpop.permute.xlu0 %1395
    %1397 = vrot.lane.b32.xlu0 %v1387, 8
    %v1398 = vpop.permute.xlu0 %1397
    %1399 = vrot.lane.b32.xlu0 %v1389, 8
    %v1400 = vpop.permute.xlu0 %1399
    %1401 = vrot.lane.b32.xlu0 %v1391, 8
    %v1402 = vpop.permute.xlu0 %1401
    %1403 = vrot.lane.b32.xlu0 %v1384, 8
    %v1404 = vpop.permute.xlu0 %1403
    %1405 = vrot.lane.b32.xlu0 %v1386, 8
    %v1406 = vpop.permute.xlu0 %1405
    %1407 = vrot.lane.b32.xlu0 %v1388, 8
    %v1408 = vpop.permute.xlu0 %1407
    %1409 = vrot.lane.b32.xlu0 %v1390, 8
    %v1410 = vpop.permute.xlu0 %1409
    %1411 = vrot.lane.b32.xlu0 %v1392, 8
    %v1412 = vpop.permute.xlu0 %1411
    %v1413 = vsel %vm1046, %v1394, %v1404
    %v1414 = vsel %vm1046, %v1396, %v1406
    %v1415 = vsel %vm1046, %v1398, %v1408
    %v1416 = vsel %vm1046, %v1400, %v1410
    %v1417 = vsel %vm1046, %v1402, %v1412
    %v1418 = vsel %vm1046, %v1404, %v1394
    %v1419 = vsel %vm1046, %v1406, %v1396
    %v1420 = vsel %vm1046, %v1408, %v1398
    %v1421 = vsel %vm1046, %v1410, %v1400
    %v1422 = vsel %vm1046, %v1412, %v1402
    %v1423 = vmax.f32 %v1383, %v1418
    %v1424 = vmax.f32 %v1384, %v1413
    %v1425 = vmax.f32 %v1385, %v1419
    %v1426 = vmax.f32 %v1386, %v1414
    %v1427 = vmax.f32 %v1387, %v1420
    %v1428 = vmax.f32 %v1388, %v1415
    %v1429 = vmax.f32 %v1389, %v1421
    %v1430 = vmax.f32 %v1390, %v1416
    %v1431 = vmax.f32 %v1391, %v1422
    %v1432 = vmax.f32 %v1392, %v1417
    %v1433 = vadd.f32 %v1250, %v1423
    %v1434 = vadd.f32 %v1251, %v1424
    %v1435 = vadd.f32 %v1252, %v1425
    %v1436 = vadd.f32 %v1253, %v1426
    %v1437 = vadd.f32 %v1254, %v1427
    %v1438 = vadd.f32 %v1255, %v1428
    %v1439 = vadd.f32 %v1256, %v1429
    %v1440 = vadd.f32 %v1257, %v1430
    %v1441 = vadd.f32 %v1258, %v1431
    %v1442 = vadd.f32 %v1259, %v1432
    %s1443 = scalar_lea.vmem %s2, 48
    %v1444 = vld [vmem:[%s1443] sm:$0xff]
    %v1445 = vld [vmem:[%s1443 + $0x8] sm:$0xff]
    %v1446 = vadd.f32 %v879, %v1444
    %v1447 = vadd.f32 %v880, %v1445
    %v1448 = vadd.f32 %v881, %v1444
    %v1449 = vadd.f32 %v882, %v1445
    %v1450 = vadd.f32 %v883, %v1444
    %v1451 = vadd.f32 %v884, %v1445
    %v1452 = vadd.f32 %v885, %v1444
    %v1453 = vadd.f32 %v886, %v1445
    %v1454 = vadd.f32 %v887, %v1444
    %v1455 = vadd.f32 %v888, %v1445
    %1456 = vrot.lane.b32.xlu0 %v1446, 1
    %v1457 = vpop.permute.xlu0 %1456
    %1458 = vrot.lane.b32.xlu0 %v1448, 1
    %v1459 = vpop.permute.xlu0 %1458
    %1460 = vrot.lane.b32.xlu0 %v1450, 1
    %v1461 = vpop.permute.xlu0 %1460
    %1462 = vrot.lane.b32.xlu0 %v1452, 1
    %v1463 = vpop.permute.xlu0 %1462
    %1464 = vrot.lane.b32.xlu0 %v1454, 1
    %v1465 = vpop.permute.xlu0 %1464
    %1466 = vrot.lane.b32.xlu0 %v1447, 1
    %v1467 = vpop.permute.xlu0 %1466
    %1468 = vrot.lane.b32.xlu0 %v1449, 1
    %v1469 = vpop.permute.xlu0 %1468
    %1470 = vrot.lane.b32.xlu0 %v1451, 1
    %v1471 = vpop.permute.xlu0 %1470
    %1472 = vrot.lane.b32.xlu0 %v1453, 1
    %v1473 = vpop.permute.xlu0 %1472
    %1474 = vrot.lane.b32.xlu0 %v1455, 1
    %v1475 = vpop.permute.xlu0 %1474
    %v1476 = vsel %vm923, %v1457, %v1467
    %v1477 = vsel %vm923, %v1459, %v1469
    %v1478 = vsel %vm923, %v1461, %v1471
    %v1479 = vsel %vm923, %v1463, %v1473
    %v1480 = vsel %vm923, %v1465, %v1475
    %v1481 = vsel %vm923, %v1467, %v1457
    %v1482 = vsel %vm923, %v1469, %v1459
    %v1483 = vsel %vm923, %v1471, %v1461
    %v1484 = vsel %vm923, %v1473, %v1463
    %v1485 = vsel %vm923, %v1475, %v1465
    %v1486 = vmax.f32 %v1446, %v1481
    %v1487 = vmax.f32 %v1447, %v1476
    %v1488 = vmax.f32 %v1448, %v1482
    %v1489 = vmax.f32 %v1449, %v1477
    %v1490 = vmax.f32 %v1450, %v1483
    %v1491 = vmax.f32 %v1451, %v1478
    %v1492 = vmax.f32 %v1452, %v1484
    %v1493 = vmax.f32 %v1453, %v1479
    %v1494 = vmax.f32 %v1454, %v1485
    %v1495 = vmax.f32 %v1455, %v1480
    %1496 = vrot.lane.b32.xlu0 %v1486, 2
    %v1497 = vpop.permute.xlu0 %1496
    %1498 = vrot.lane.b32.xlu0 %v1488, 2
    %v1499 = vpop.permute.xlu0 %1498
    %1500 = vrot.lane.b32.xlu0 %v1490, 2
    %v1501 = vpop.permute.xlu0 %1500
    %1502 = vrot.lane.b32.xlu0 %v1492, 2
    %v1503 = vpop.permute.xlu0 %1502
    %1504 = vrot.lane.b32.xlu0 %v1494, 2
    %v1505 = vpop.permute.xlu0 %1504
    %1506 = vrot.lane.b32.xlu0 %v1487, 2
    %v1507 = vpop.permute.xlu0 %1506
    %1508 = vrot.lane.b32.xlu0 %v1489, 2
    %v1509 = vpop.permute.xlu0 %1508
    %1510 = vrot.lane.b32.xlu0 %v1491, 2
    %v1511 = vpop.permute.xlu0 %1510
    %1512 = vrot.lane.b32.xlu0 %v1493, 2
    %v1513 = vpop.permute.xlu0 %1512
    %1514 = vrot.lane.b32.xlu0 %v1495, 2
    %v1515 = vpop.permute.xlu0 %1514
    %v1516 = vsel %vm964, %v1497, %v1507
    %v1517 = vsel %vm964, %v1499, %v1509
    %v1518 = vsel %vm964, %v1501, %v1511
    %v1519 = vsel %vm964, %v1503, %v1513
    %v1520 = vsel %vm964, %v1505, %v1515
    %v1521 = vsel %vm964, %v1507, %v1497
    %v1522 = vsel %vm964, %v1509, %v1499
    %v1523 = vsel %vm964, %v1511, %v1501
    %v1524 = vsel %vm964, %v1513, %v1503
    %v1525 = vsel %vm964, %v1515, %v1505
    %v1526 = vmax.f32 %v1486, %v1521
    %v1527 = vmax.f32 %v1487, %v1516
    %v1528 = vmax.f32 %v1488, %v1522
    %v1529 = vmax.f32 %v1489, %v1517
    %v1530 = vmax.f32 %v1490, %v1523
    %v1531 = vmax.f32 %v1491, %v1518
    %v1532 = vmax.f32 %v1492, %v1524
    %v1533 = vmax.f32 %v1493, %v1519
    %v1534 = vmax.f32 %v1494, %v1525
    %v1535 = vmax.f32 %v1495, %v1520
    %1536 = vrot.lane.b32.xlu0 %v1526, 4
    %v1537 = vpop.permute.xlu0 %1536
    %1538 = vrot.lane.b32.xlu0 %v1528, 4
    %v1539 = vpop.permute.xlu0 %1538
    %1540 = vrot.lane.b32.xlu0 %v1530, 4
    %v1541 = vpop.permute.xlu0 %1540
    %1542 = vrot.lane.b32.xlu0 %v1532, 4
    %v1543 = vpop.permute.xlu0 %1542
    %1544 = vrot.lane.b32.xlu0 %v1534, 4
    %v1545 = vpop.permute.xlu0 %1544
    %1546 = vrot.lane.b32.xlu0 %v1527, 4
    %v1547 = vpop.permute.xlu0 %1546
    %1548 = vrot.lane.b32.xlu0 %v1529, 4
    %v1549 = vpop.permute.xlu0 %1548
    %1550 = vrot.lane.b32.xlu0 %v1531, 4
    %v1551 = vpop.permute.xlu0 %1550
    %1552 = vrot.lane.b32.xlu0 %v1533, 4
    %v1553 = vpop.permute.xlu0 %1552
    %1554 = vrot.lane.b32.xlu0 %v1535, 4
    %v1555 = vpop.permute.xlu0 %1554
    %v1556 = vsel %vm1005, %v1537, %v1547
    %v1557 = vsel %vm1005, %v1539, %v1549
    %v1558 = vsel %vm1005, %v1541, %v1551
    %v1559 = vsel %vm1005, %v1543, %v1553
    %v1560 = vsel %vm1005, %v1545, %v1555
    %v1561 = vsel %vm1005, %v1547, %v1537
    %v1562 = vsel %vm1005, %v1549, %v1539
    %v1563 = vsel %vm1005, %v1551, %v1541
    %v1564 = vsel %vm1005, %v1553, %v1543
    %v1565 = vsel %vm1005, %v1555, %v1545
    %v1566 = vmax.f32 %v1526, %v1561
    %v1567 = vmax.f32 %v1527, %v1556
    %v1568 = vmax.f32 %v1528, %v1562
    %v1569 = vmax.f32 %v1529, %v1557
    %v1570 = vmax.f32 %v1530, %v1563
    %v1571 = vmax.f32 %v1531, %v1558
    %v1572 = vmax.f32 %v1532, %v1564
    %v1573 = vmax.f32 %v1533, %v1559
    %v1574 = vmax.f32 %v1534, %v1565
    %v1575 = vmax.f32 %v1535, %v1560
    %1576 = vrot.lane.b32.xlu0 %v1566, 8
    %v1577 = vpop.permute.xlu0 %1576
    %1578 = vrot.lane.b32.xlu0 %v1568, 8
    %v1579 = vpop.permute.xlu0 %1578
    %1580 = vrot.lane.b32.xlu0 %v1570, 8
    %v1581 = vpop.permute.xlu0 %1580
    %1582 = vrot.lane.b32.xlu0 %v1572, 8
    %v1583 = vpop.permute.xlu0 %1582
    %1584 = vrot.lane.b32.xlu0 %v1574, 8
    %v1585 = vpop.permute.xlu0 %1584
    %1586 = vrot.lane.b32.xlu0 %v1567, 8
    %v1587 = vpop.permute.xlu0 %1586
    %1588 = vrot.lane.b32.xlu0 %v1569, 8
    %v1589 = vpop.permute.xlu0 %1588
    %1590 = vrot.lane.b32.xlu0 %v1571, 8
    %v1591 = vpop.permute.xlu0 %1590
    %1592 = vrot.lane.b32.xlu0 %v1573, 8
    %v1593 = vpop.permute.xlu0 %1592
    %1594 = vrot.lane.b32.xlu0 %v1575, 8
    %v1595 = vpop.permute.xlu0 %1594
    %v1596 = vsel %vm1046, %v1577, %v1587
    %v1597 = vsel %vm1046, %v1579, %v1589
    %v1598 = vsel %vm1046, %v1581, %v1591
    %v1599 = vsel %vm1046, %v1583, %v1593
    %v1600 = vsel %vm1046, %v1585, %v1595
    %v1601 = vsel %vm1046, %v1587, %v1577
    %v1602 = vsel %vm1046, %v1589, %v1579
    %v1603 = vsel %vm1046, %v1591, %v1581
    %v1604 = vsel %vm1046, %v1593, %v1583
    %v1605 = vsel %vm1046, %v1595, %v1585
    %v1606 = vmax.f32 %v1566, %v1601
    %v1607 = vmax.f32 %v1567, %v1596
    %v1608 = vmax.f32 %v1568, %v1602
    %v1609 = vmax.f32 %v1569, %v1597
    %v1610 = vmax.f32 %v1570, %v1603
    %v1611 = vmax.f32 %v1571, %v1598
    %v1612 = vmax.f32 %v1572, %v1604
    %v1613 = vmax.f32 %v1573, %v1599
    %v1614 = vmax.f32 %v1574, %v1605
    %v1615 = vmax.f32 %v1575, %v1600
    %v1616 = vadd.f32 %v1433, %v1606
    %v1617 = vadd.f32 %v1434, %v1607
    %v1618 = vadd.f32 %v1435, %v1608
    %v1619 = vadd.f32 %v1436, %v1609
    %v1620 = vadd.f32 %v1437, %v1610
    %v1621 = vadd.f32 %v1438, %v1611
    %v1622 = vadd.f32 %v1439, %v1612
    %v1623 = vadd.f32 %v1440, %v1613
    %v1624 = vadd.f32 %v1441, %v1614
    %v1625 = vadd.f32 %v1442, %v1615
    %s1626 = scalar_lea.vmem %s2, 64
    %v1627 = vld [vmem:[%s1626] sm:$0xff]
    %v1628 = vld [vmem:[%s1626 + $0x8] sm:$0xff]
    %v1629 = vadd.f32 %v879, %v1627
    %v1630 = vadd.f32 %v880, %v1628
    %v1631 = vadd.f32 %v881, %v1627
    %v1632 = vadd.f32 %v882, %v1628
    %v1633 = vadd.f32 %v883, %v1627
    %v1634 = vadd.f32 %v884, %v1628
    %v1635 = vadd.f32 %v885, %v1627
    %v1636 = vadd.f32 %v886, %v1628
    %v1637 = vadd.f32 %v887, %v1627
    %v1638 = vadd.f32 %v888, %v1628
    %1639 = vrot.lane.b32.xlu0 %v1629, 1
    %v1640 = vpop.permute.xlu0 %1639
    %1641 = vrot.lane.b32.xlu0 %v1631, 1
    %v1642 = vpop.permute.xlu0 %1641
    %1643 = vrot.lane.b32.xlu0 %v1633, 1
    %v1644 = vpop.permute.xlu0 %1643
    %1645 = vrot.lane.b32.xlu0 %v1635, 1
    %v1646 = vpop.permute.xlu0 %1645
    %1647 = vrot.lane.b32.xlu0 %v1637, 1
    %v1648 = vpop.permute.xlu0 %1647
    %1649 = vrot.lane.b32.xlu0 %v1630, 1
    %v1650 = vpop.permute.xlu0 %1649
    %1651 = vrot.lane.b32.xlu0 %v1632, 1
    %v1652 = vpop.permute.xlu0 %1651
    %1653 = vrot.lane.b32.xlu0 %v1634, 1
    %v1654 = vpop.permute.xlu0 %1653
    %1655 = vrot.lane.b32.xlu0 %v1636, 1
    %v1656 = vpop.permute.xlu0 %1655
    %1657 = vrot.lane.b32.xlu0 %v1638, 1
    %v1658 = vpop.permute.xlu0 %1657
    %v1659 = vsel %vm923, %v1640, %v1650
    %v1660 = vsel %vm923, %v1642, %v1652
    %v1661 = vsel %vm923, %v1644, %v1654
    %v1662 = vsel %vm923, %v1646, %v1656
    %v1663 = vsel %vm923, %v1648, %v1658
    %v1664 = vsel %vm923, %v1650, %v1640
    %v1665 = vsel %vm923, %v1652, %v1642
    %v1666 = vsel %vm923, %v1654, %v1644
    %v1667 = vsel %vm923, %v1656, %v1646
    %v1668 = vsel %vm923, %v1658, %v1648
    %v1669 = vmax.f32 %v1629, %v1664
    %v1670 = vmax.f32 %v1630, %v1659
    %v1671 = vmax.f32 %v1631, %v1665
    %v1672 = vmax.f32 %v1632, %v1660
    %v1673 = vmax.f32 %v1633, %v1666
    %v1674 = vmax.f32 %v1634, %v1661
    %v1675 = vmax.f32 %v1635, %v1667
    %v1676 = vmax.f32 %v1636, %v1662
    %v1677 = vmax.f32 %v1637, %v1668
    %v1678 = vmax.f32 %v1638, %v1663
    %1679 = vrot.lane.b32.xlu0 %v1669, 2
    %v1680 = vpop.permute.xlu0 %1679
    %1681 = vrot.lane.b32.xlu0 %v1671, 2
    %v1682 = vpop.permute.xlu0 %1681
    %1683 = vrot.lane.b32.xlu0 %v1673, 2
    %v1684 = vpop.permute.xlu0 %1683
    %1685 = vrot.lane.b32.xlu0 %v1675, 2
    %v1686 = vpop.permute.xlu0 %1685
    %1687 = vrot.lane.b32.xlu0 %v1677, 2
    %v1688 = vpop.permute.xlu0 %1687
    %1689 = vrot.lane.b32.xlu0 %v1670, 2
    %v1690 = vpop.permute.xlu0 %1689
    %1691 = vrot.lane.b32.xlu0 %v1672, 2
    %v1692 = vpop.permute.xlu0 %1691
    %1693 = vrot.lane.b32.xlu0 %v1674, 2
    %v1694 = vpop.permute.xlu0 %1693
    %1695 = vrot.lane.b32.xlu0 %v1676, 2
    %v1696 = vpop.permute.xlu0 %1695
    %1697 = vrot.lane.b32.xlu0 %v1678, 2
    %v1698 = vpop.permute.xlu0 %1697
    %v1699 = vsel %vm964, %v1680, %v1690
    %v1700 = vsel %vm964, %v1682, %v1692
    %v1701 = vsel %vm964, %v1684, %v1694
    %v1702 = vsel %vm964, %v1686, %v1696
    %v1703 = vsel %vm964, %v1688, %v1698
    %v1704 = vsel %vm964, %v1690, %v1680
    %v1705 = vsel %vm964, %v1692, %v1682
    %v1706 = vsel %vm964, %v1694, %v1684
    %v1707 = vsel %vm964, %v1696, %v1686
    %v1708 = vsel %vm964, %v1698, %v1688
    %v1709 = vmax.f32 %v1669, %v1704
    %v1710 = vmax.f32 %v1670, %v1699
    %v1711 = vmax.f32 %v1671, %v1705
    %v1712 = vmax.f32 %v1672, %v1700
    %v1713 = vmax.f32 %v1673, %v1706
    %v1714 = vmax.f32 %v1674, %v1701
    %v1715 = vmax.f32 %v1675, %v1707
    %v1716 = vmax.f32 %v1676, %v1702
    %v1717 = vmax.f32 %v1677, %v1708
    %v1718 = vmax.f32 %v1678, %v1703
    %1719 = vrot.lane.b32.xlu0 %v1709, 4
    %v1720 = vpop.permute.xlu0 %1719
    %1721 = vrot.lane.b32.xlu0 %v1711, 4
    %v1722 = vpop.permute.xlu0 %1721
    %1723 = vrot.lane.b32.xlu0 %v1713, 4
    %v1724 = vpop.permute.xlu0 %1723
    %1725 = vrot.lane.b32.xlu0 %v1715, 4
    %v1726 = vpop.permute.xlu0 %1725
    %1727 = vrot.lane.b32.xlu0 %v1717, 4
    %v1728 = vpop.permute.xlu0 %1727
    %1729 = vrot.lane.b32.xlu0 %v1710, 4
    %v1730 = vpop.permute.xlu0 %1729
    %1731 = vrot.lane.b32.xlu0 %v1712, 4
    %v1732 = vpop.permute.xlu0 %1731
    %1733 = vrot.lane.b32.xlu0 %v1714, 4
    %v1734 = vpop.permute.xlu0 %1733
    %1735 = vrot.lane.b32.xlu0 %v1716, 4
    %v1736 = vpop.permute.xlu0 %1735
    %1737 = vrot.lane.b32.xlu0 %v1718, 4
    %v1738 = vpop.permute.xlu0 %1737
    %v1739 = vsel %vm1005, %v1720, %v1730
    %v1740 = vsel %vm1005, %v1722, %v1732
    %v1741 = vsel %vm1005, %v1724, %v1734
    %v1742 = vsel %vm1005, %v1726, %v1736
    %v1743 = vsel %vm1005, %v1728, %v1738
    %v1744 = vsel %vm1005, %v1730, %v1720
    %v1745 = vsel %vm1005, %v1732, %v1722
    %v1746 = vsel %vm1005, %v1734, %v1724
    %v1747 = vsel %vm1005, %v1736, %v1726
    %v1748 = vsel %vm1005, %v1738, %v1728
    %v1749 = vmax.f32 %v1709, %v1744
    %v1750 = vmax.f32 %v1710, %v1739
    %v1751 = vmax.f32 %v1711, %v1745
    %v1752 = vmax.f32 %v1712, %v1740
    %v1753 = vmax.f32 %v1713, %v1746
    %v1754 = vmax.f32 %v1714, %v1741
    %v1755 = vmax.f32 %v1715, %v1747
    %v1756 = vmax.f32 %v1716, %v1742
    %v1757 = vmax.f32 %v1717, %v1748
    %v1758 = vmax.f32 %v1718, %v1743
    %1759 = vrot.lane.b32.xlu0 %v1749, 8
    %v1760 = vpop.permute.xlu0 %1759
    %1761 = vrot.lane.b32.xlu0 %v1751, 8
    %v1762 = vpop.permute.xlu0 %1761
    %1763 = vrot.lane.b32.xlu0 %v1753, 8
    %v1764 = vpop.permute.xlu0 %1763
    %1765 = vrot.lane.b32.xlu0 %v1755, 8
    %v1766 = vpop.permute.xlu0 %1765
    %1767 = vrot.lane.b32.xlu0 %v1757, 8
    %v1768 = vpop.permute.xlu0 %1767
    %1769 = vrot.lane.b32.xlu0 %v1750, 8
    %v1770 = vpop.permute.xlu0 %1769
    %1771 = vrot.lane.b32.xlu0 %v1752, 8
    %v1772 = vpop.permute.xlu0 %1771
    %1773 = vrot.lane.b32.xlu0 %v1754, 8
    %v1774 = vpop.permute.xlu0 %1773
    %1775 = vrot.lane.b32.xlu0 %v1756, 8
    %v1776 = vpop.permute.xlu0 %1775
    %1777 = vrot.lane.b32.xlu0 %v1758, 8
    %v1778 = vpop.permute.xlu0 %1777
    %v1779 = vsel %vm1046, %v1760, %v1770
    %v1780 = vsel %vm1046, %v1762, %v1772
    %v1781 = vsel %vm1046, %v1764, %v1774
    %v1782 = vsel %vm1046, %v1766, %v1776
    %v1783 = vsel %vm1046, %v1768, %v1778
    %v1784 = vsel %vm1046, %v1770, %v1760
    %v1785 = vsel %vm1046, %v1772, %v1762
    %v1786 = vsel %vm1046, %v1774, %v1764
    %v1787 = vsel %vm1046, %v1776, %v1766
    %v1788 = vsel %vm1046, %v1778, %v1768
    %v1789 = vmax.f32 %v1749, %v1784
    %v1790 = vmax.f32 %v1750, %v1779
    %v1791 = vmax.f32 %v1751, %v1785
    %v1792 = vmax.f32 %v1752, %v1780
    %v1793 = vmax.f32 %v1753, %v1786
    %v1794 = vmax.f32 %v1754, %v1781
    %v1795 = vmax.f32 %v1755, %v1787
    %v1796 = vmax.f32 %v1756, %v1782
    %v1797 = vmax.f32 %v1757, %v1788
    %v1798 = vmax.f32 %v1758, %v1783
    %v1799 = vadd.f32 %v1616, %v1789
    %v1800 = vadd.f32 %v1617, %v1790
    %v1801 = vadd.f32 %v1618, %v1791
    %v1802 = vadd.f32 %v1619, %v1792
    %v1803 = vadd.f32 %v1620, %v1793
    %v1804 = vadd.f32 %v1621, %v1794
    %v1805 = vadd.f32 %v1622, %v1795
    %v1806 = vadd.f32 %v1623, %v1796
    %v1807 = vadd.f32 %v1624, %v1797
    %v1808 = vadd.f32 %v1625, %v1798
    %v1809 = vadd.f32 %v1799, %v1801
    %v1810 = vadd.f32 %v1800, %v1802
    %v1811 = vadd.f32 %v1809, %v1803
    %v1812 = vadd.f32 %v1810, %v1804
    %v1813 = vadd.f32 %v1811, %v1805
    %v1814 = vadd.f32 %v1812, %v1806
    %v1815 = vadd.f32 %v1813, %v1807
    %v1816 = vadd.f32 %v1814, %v1808
    %v1817 = vld [vmem:[%s6 + $0x48] sm:$0xff]
    %v1818 = vld [vmem:[%s6 + $0x50] sm:$0xff]
    %v1819 = vld [vmem:[%s6 + $0x58] sm:$0xff]
    %v1820 = vld [vmem:[%s6 + $0x60] sm:$0xff]
    %v1821 = vld [vmem:[%s6 + $0x68] sm:$0xff]
    %v1822 = vld [vmem:[%s6 + $0x70] sm:$0xff]
    %v1823 = vld [vmem:[%s6 + $0x78] sm:$0xff]
    %v1824 = vld [vmem:[%s6 + $0x80] sm:$0xff]
    %v1825 = vld [vmem:[%s6 + $0x88] sm:$0xff]
    %v1826 = vld [vmem:[%s6 + $0x90] sm:$0xff]
    %v1827 = vld [vmem:[%s6 + $0x98] sm:$0xff]
    %v1828 = vld [vmem:[%s6 + $0xa0] sm:$0xff]
    %v1829 = vld [vmem:[%s6 + $0xa8] sm:$0xff]
    %v1830 = vld [vmem:[%s6 + $0xb0] sm:$0xff]
    %v1831 = vld [vmem:[%s6 + $0xb8] sm:$0xff]
    %v1832 = vld [vmem:[%s6 + $0xc0] sm:$0xff]
    %v1833 = vld [vmem:[%s6 + $0xc8] sm:$0xff]
    %v1834 = vld [vmem:[%s6 + $0xd0] sm:$0xff]
    %v1835 = vld [vmem:[%s6 + $0xd8] sm:$0xff]
    %v1836 = vld [vmem:[%s6 + $0xe0] sm:$0xff]
    %v1837 = vld [vmem:[%s6 + $0xe8] sm:$0xff]
    %v1838 = vld [vmem:[%s6 + $0xf0] sm:$0xff]
    %v1839 = vld [vmem:[%s6 + $0xf8] sm:$0xff]
    %v1840 = vld [vmem:[%s6 + $0x100] sm:$0xff]
    %v1841 = vld [vmem:[%s6 + $0x108] sm:$0xff]
    %v1842 = vld [vmem:[%s6 + $0x110] sm:$0xff]
    %v1843 = vld [vmem:[%s6 + $0x118] sm:$0xff]
    %v1844 = vld [vmem:[%s6 + $0x120] sm:$0xff]
    %v1845 = vld [vmem:[%s6 + $0x128] sm:$0xff]
    %v1846 = vld [vmem:[%s6 + $0x130] sm:$0xff]
    %v1847 = vld [vmem:[%s6 + $0x138] sm:$0xff]
    %v1848 = vld [vmem:[%s6 + $0x140] sm:$0xff]
    %1849 = vmatpush.msra.mxu0 %v1832
    %1850 = vmatpush.msra.mxu0 %v1831
    %1851 = vmatpush.msra.mxu0 %v1830
    %1852 = vmatpush.msra.mxu0 %v1829
    %1853 = vmatpush.msra.mxu0 %v1828
    %1854 = vmatpush.msra.mxu0 %v1827
    %1855 = vmatpush.msra.mxu0 %v1826
    %1856 = vmatpush.msra.mxu0 %v1825
    %1857 = vmatpush.msra.mxu0 %v1824
    %1858 = vmatpush.msra.mxu0 %v1823
    %1859 = vmatpush.msra.mxu0 %v1822
    %1860 = vmatpush.msra.mxu0 %v1821
    %1861 = vmatpush.msra.mxu0 %v1820
    %1862 = vmatpush.msra.mxu0 %v1819
    %1863 = vmatpush.msra.mxu0 %v1818
    %1864 = vmatpush.msra.mxu0 %v1817
    %1865 = vmatmul.f32.gmra.mxu0 %v1815
    %v1866 = vpop.f32.mrf.mxu0
    %v1867 = vadd.f32 0.0, %v1866
    %1868 = vdwg.mxu0
    %1869 = vmatpush.msra.mxu0 %v1848
    %1870 = vmatpush.msra.mxu0 %v1847
    %1871 = vmatpush.msra.mxu0 %v1846
    %1872 = vmatpush.msra.mxu0 %v1845
    %1873 = vmatpush.msra.mxu0 %v1844
    %1874 = vmatpush.msra.mxu0 %v1843
    %1875 = vmatpush.msra.mxu0 %v1842
    %1876 = vmatpush.msra.mxu0 %v1841
    %1877 = vmatpush.msra.mxu0 %v1840
    %1878 = vmatpush.msra.mxu0 %v1839
    %1879 = vmatpush.msra.mxu0 %v1838
    %1880 = vmatpush.msra.mxu0 %v1837
    %1881 = vmatpush.msra.mxu0 %v1836
    %1882 = vmatpush.msra.mxu0 %v1835
    %1883 = vmatpush.msra.mxu0 %v1834
    %1884 = vmatpush.msra.mxu0 %v1833
    %1885 = vmatmul.f32.gmra.mxu0 %v1816
    %v1886 = vpop.f32.mrf.mxu0
    %v1887 = vadd.f32 %v1867, %v1886
    %1888 = vdwg.mxu0
    %v1889 = vld [vmem:[%s3] sm:$0xff]
    %v1890 = vld [vmem:[%s3 + $0x8] sm:$0xff]
    %1891 = vset.pattern.permute.xlu0 0
    %1892 = vperm.xlu0 %1891, %v1889
    %v1893 = vpop.permute.xlu0 %1892
    %1894 = vset.pattern.permute.xlu0 0
    %1895 = vperm.xlu0 %1894, %v1890
    %v1896 = vpop.permute.xlu0 %1895
    %vm1897 = vcmp.eq.s32.totalorder %v1893, %v922
    %vm1898 = vcmp.eq.s32.totalorder %v1896, %v922
    %v1899 = vsel %vm1897, 1, 0
    %v1900 = vsel %vm1898, 1, 0
    %v1901 = vcvt.s32.f32 %v1899
    %v1902 = vcvt.s32.f32 %v1900
    %v1903 = vld [vmem:[%s6] sm:$0xff]
    %v1904 = vld [vmem:[%s6 + $0x8] sm:$0xff]
    %v1905 = vld [vmem:[%s6 + $0x10] sm:$0xff]
    %v1906 = vld [vmem:[%s6 + $0x18] sm:$0xff]
    %v1907 = vld [vmem:[%s6 + $0x40] sm:$0x1]
    %v1908 = vperm.slane %v1907, 0
    %vm1909 = vcmask 261120
    %v1911 = vsel %vm1909, %v1901, 0
    %v1914 = vsel %vm1909, %v1902, 0
    %1916 = vmatpush.msra.mxu0 0.0
    %1917 = vmatpush.msra.mxu0 0.0
    %1918 = vmatpush.msra.mxu0 0.0
    %1919 = vmatpush.msra.mxu0 0.0
    %1920 = vmatpush.msra.mxu0 0.0
    %1921 = vmatpush.msra.mxu0 0.0
    %1922 = vmatpush.msra.mxu0 0.0
    %1923 = vmatpush.msra.mxu0 0.0
    %1924 = vmatpush.msra.mxu0 0.0
    %1925 = vmatpush.msra.mxu0 0.0
    %1926 = vmatpush.msra.mxu0 0.0
    %1927 = vmatpush.msra.mxu0 0.0
    %1928 = vmatpush.msra.mxu0 %v1906
    %1929 = vmatpush.msra.mxu0 %v1905
    %1930 = vmatpush.msra.mxu0 %v1904
    %1931 = vmatpush.msra.mxu0 %v1903
    %1932 = vmatmul.f32.gmra.mxu0 %v1911
    %v1933 = vpop.f32.mrf.mxu0
    %v1934 = vadd.f32 %v1908, %v1933
    %1935 = vmatmul.f32.gmra.mxu0 %v1914
    %v1936 = vpop.f32.mrf.mxu0
    %v1937 = vadd.f32 %v1908, %v1936
    %1938 = vdwg.mxu0
    %v1939 = vld [vmem:[%s6 + $0x20] sm:$0xff]
    %v1940 = vld [vmem:[%s6 + $0x28] sm:$0xff]
    %v1941 = vld [vmem:[%s6 + $0x30] sm:$0xff]
    %v1942 = vld [vmem:[%s6 + $0x38] sm:$0xff]
    %v1943 = vld [vmem:[%s4] sm:$0x3]
    %v1945 = vsel %vm1909, 0.0, 0
    %1947 = vmatpush.msra.mxu0 0.0
    %1948 = vmatpush.msra.mxu0 0.0
    %1949 = vmatpush.msra.mxu0 0.0
    %1950 = vmatpush.msra.mxu0 0.0
    %1951 = vmatpush.msra.mxu0 0.0
    %1952 = vmatpush.msra.mxu0 0.0
    %1953 = vmatpush.msra.mxu0 0.0
    %1954 = vmatpush.msra.mxu0 0.0
    %1955 = vmatpush.msra.mxu0 0.0
    %1956 = vmatpush.msra.mxu0 0.0
    %1957 = vmatpush.msra.mxu0 0.0
    %1958 = vmatpush.msra.mxu0 0.0
    %1959 = vmatpush.msra.mxu0 %v1942
    %1960 = vmatpush.msra.mxu0 %v1941
    %1961 = vmatpush.msra.mxu0 %v1940
    %1962 = vmatpush.msra.mxu0 %v1939
    %1963 = vmatmul.f32.gmra.mxu0 %v1945
    %v1964 = vpop.f32.mrf.mxu0
    %v1965 = vadd.f32 0.0, %v1964
    %1966 = vdwg.mxu0
    %v1968 = vrot.slane %v1965, 1
    %v1971 = vadd.f32 %v1934, %v1965
    %v1972 = vadd.f32 %v1937, %v1968
    %v1973 = vxor.u32 %v1971, 2147483648
    %v1974 = vxor.u32 %v1972, 2147483648
    %v1975 = vmul.f32 %v1973, 1.442695
    %v1976 = vpow.pop %v1975
    %v1977 = vmul.f32 %v1974, 1.442695
    %v1978 = vpow.pop %v1977
    %v1979 = vadd.f32 %v1976, 1.0
    %v1980 = vadd.f32 %v1978, 1.0
    %v1981 = vrcp.pop %v1979
    %v1982 = vmul.f32 %v1979, %v1981
    %v1983 = vsub.f32 1.0, %v1982
    %v1984 = vmul.f32 %v1981, %v1983
    %v1985 = vadd.f32 %v1981, %v1984
    %vm1986 = vweird.f32 %v1979
    %vm1987 = vweird.f32 %v1981
    %vm1988 = vmor %vm1986, %vm1987
    %v1989 = vsel %vm1988, %v1981, %v1985
    %v1990 = vand.u32 2147483647, %v1979
    %vm1991 = vcmp.eq.f32.partialorder %v1990, 8.507059e+37
    %v1992 = vand.u32 %v1979, 2147483648
    %v1993 = vor.u32 1.1754944e-38, %v1992
    %v1994 = vsel %vm1991, %v1993, %v1989
    %v1995 = vmul.f32 1.0, %v1994
    %v1996 = vrcp.pop %v1980
    %v1997 = vmul.f32 %v1980, %v1996
    %v1998 = vsub.f32 1.0, %v1997
    %v1999 = vmul.f32 %v1996, %v1998
    %v2000 = vadd.f32 %v1996, %v1999
    %vm2001 = vweird.f32 %v1980
    %vm2002 = vweird.f32 %v1996
    %vm2003 = vmor %vm2001, %vm2002
    %v2004 = vsel %vm2003, %v1996, %v2000
    %v2005 = vand.u32 2147483647, %v1980
    %vm2006 = vcmp.eq.f32.partialorder %v2005, 8.507059e+37
    %v2007 = vand.u32 %v1980, 2147483648
    %v2008 = vor.u32 1.1754944e-38, %v2007
    %v2009 = vsel %vm2006, %v2008, %v2004
    %v2010 = vmul.f32 1.0, %v2009
    %v2011 = vtanh.pop %v1971
    %v2012 = vtanh.pop %v1972
    %v2013 = vmul.f32 %v1995, 0.0
    %v2014 = vmul.f32 %v2010, 0.0
    %2017 = vrot.lane.b32.xlu0 %v2011, 64
    %v2018 = vpop.permute.xlu0 %2017
    %2019 = vrot.lane.b32.xlu0 %v2012, 64
    %v2020 = vpop.permute.xlu0 %2019
    %v2023 = vmul.f32 %v1995, %v2018
    %v2024 = vmul.f32 %v2010, %v2020
    %2027 = vrot.lane.b32.xlu0 %v2023, 32
    %v2028 = vpop.permute.xlu0 %2027
    %2029 = vrot.lane.b32.xlu0 %v2024, 32
    %v2030 = vpop.permute.xlu0 %2029
    %v2033 = vadd.f32 %v2013, %v2028
    %v2034 = vadd.f32 %v2014, %v2030
    %v2035 = vtanh.pop %v2033
    %v2036 = vtanh.pop %v2034
    %2039 = vrot.lane.b32.xlu0 %v2035, 64
    %v2040 = vpop.permute.xlu0 %2039
    %2041 = vrot.lane.b32.xlu0 %v2036, 64
    %v2042 = vpop.permute.xlu0 %2041
    %v2045 = vmul.f32 %v1995, %v2040
    %v2046 = vmul.f32 %v2010, %v2042
    %vm2047 = vcmp.gt.s32.totalorder %v1943, 0
    %v2048 = vsel %vm2047, 1, 0
    %2049 = vset.pattern.permute.xlu0 0
    %2050 = vperm.xlu0 %2049, %v2048
    %v2051 = vpop.permute.xlu0 %2050
    %vm2052 = vcmp.eq.s32.totalorder %v2051, 1
    %v2055 = vrot.slane %v2046, 7
    %vm2056 = vcmask 1041409
    %v2057 = vsel %vm2056, %v2055, %v2045
    %2058 = vrot.lane.b32.xlu0 %v2057, 32
    %v2059 = vpop.permute.xlu0 %2058
    %v2061 = vsel %vm2052, %v2059, 0.0
    %v2064 = vrot.slane %v2034, 7
    %v2065 = vsel %vm2056, %v2064, %v2033
    %2066 = vrot.lane.b32.xlu0 %v2065, 96
    %v2067 = vpop.permute.xlu0 %2066
    %v2069 = vsel %vm2052, %v2067, 0.0
    %v2071 = vsel %vm1909, %v2061, 0
    %2073 = vmatpush.msra.mxu0 0.0
    %2074 = vmatpush.msra.mxu0 0.0
    %2075 = vmatpush.msra.mxu0 0.0
    %2076 = vmatpush.msra.mxu0 0.0
    %2077 = vmatpush.msra.mxu0 0.0
    %2078 = vmatpush.msra.mxu0 0.0
    %2079 = vmatpush.msra.mxu0 0.0
    %2080 = vmatpush.msra.mxu0 0.0
    %2081 = vmatpush.msra.mxu0 0.0
    %2082 = vmatpush.msra.mxu0 0.0
    %2083 = vmatpush.msra.mxu0 0.0
    %2084 = vmatpush.msra.mxu0 0.0
    %2085 = vmatpush.msra.mxu0 %v1942
    %2086 = vmatpush.msra.mxu0 %v1941
    %2087 = vmatpush.msra.mxu0 %v1940
    %2088 = vmatpush.msra.mxu0 %v1939
    %2089 = vmatmul.f32.gmra.mxu0 %v2071
    %v2090 = vpop.f32.mrf.mxu0
    %v2091 = vadd.f32 0.0, %v2090
    %2092 = vdwg.mxu0
    %v2094 = vrot.slane %v2091, 7
    %v2097 = vadd.f32 %v1934, %v2094
    %v2098 = vadd.f32 %v1937, %v2091
    %v2099 = vxor.u32 %v2097, 2147483648
    %v2100 = vxor.u32 %v2098, 2147483648
    %v2101 = vmul.f32 %v2099, 1.442695
    %v2102 = vpow.pop %v2101
    %v2103 = vmul.f32 %v2100, 1.442695
    %v2104 = vpow.pop %v2103
    %v2105 = vadd.f32 %v2102, 1.0
    %v2106 = vadd.f32 %v2104, 1.0
    %v2107 = vrcp.pop %v2105
    %v2108 = vmul.f32 %v2105, %v2107
    %v2109 = vsub.f32 1.0, %v2108
    %v2110 = vmul.f32 %v2107, %v2109
    %v2111 = vadd.f32 %v2107, %v2110
    %vm2112 = vweird.f32 %v2105
    %vm2113 = vweird.f32 %v2107
    %vm2114 = vmor %vm2112, %vm2113
    %v2115 = vsel %vm2114, %v2107, %v2111
    %v2116 = vand.u32 2147483647, %v2105
    %vm2117 = vcmp.eq.f32.partialorder %v2116, 8.507059e+37
    %v2118 = vand.u32 %v2105, 2147483648
    %v2119 = vor.u32 1.1754944e-38, %v2118
    %v2120 = vsel %vm2117, %v2119, %v2115
    %v2121 = vmul.f32 1.0, %v2120
    %v2122 = vrcp.pop %v2106
    %v2123 = vmul.f32 %v2106, %v2122
    %v2124 = vsub.f32 1.0, %v2123
    %v2125 = vmul.f32 %v2122, %v2124
    %v2126 = vadd.f32 %v2122, %v2125
    %vm2127 = vweird.f32 %v2106
    %vm2128 = vweird.f32 %v2122
    %vm2129 = vmor %vm2127, %vm2128
    %v2130 = vsel %vm2129, %v2122, %v2126
    %v2131 = vand.u32 2147483647, %v2106
    %vm2132 = vcmp.eq.f32.partialorder %v2131, 8.507059e+37
    %v2133 = vand.u32 %v2106, 2147483648
    %v2134 = vor.u32 1.1754944e-38, %v2133
    %v2135 = vsel %vm2132, %v2134, %v2130
    %v2136 = vmul.f32 1.0, %v2135
    %v2137 = vtanh.pop %v2097
    %v2138 = vtanh.pop %v2098
    %v2140 = vrot.slane %v2069, 7
    %2141 = vrot.lane.b32.xlu0 %v2140, 32
    %v2142 = vpop.permute.xlu0 %2141
    %2143 = vrot.lane.b32.xlu0 %v2069, 32
    %v2144 = vpop.permute.xlu0 %2143
    %v2147 = vmul.f32 %v2121, %v2142
    %v2148 = vmul.f32 %v2136, %v2144
    %2151 = vrot.lane.b32.xlu0 %v2137, 64
    %v2152 = vpop.permute.xlu0 %2151
    %2153 = vrot.lane.b32.xlu0 %v2138, 64
    %v2154 = vpop.permute.xlu0 %2153
    %v2157 = vmul.f32 %v2121, %v2152
    %v2158 = vmul.f32 %v2136, %v2154
    %2161 = vrot.lane.b32.xlu0 %v2157, 32
    %v2162 = vpop.permute.xlu0 %2161
    %2163 = vrot.lane.b32.xlu0 %v2158, 32
    %v2164 = vpop.permute.xlu0 %2163
    %v2167 = vadd.f32 %v2147, %v2162
    %v2168 = vadd.f32 %v2148, %v2164
    %v2169 = vtanh.pop %v2167
    %v2170 = vtanh.pop %v2168
    %2173 = vrot.lane.b32.xlu0 %v2169, 64
    %v2174 = vpop.permute.xlu0 %2173
    %2175 = vrot.lane.b32.xlu0 %v2170, 64
    %v2176 = vpop.permute.xlu0 %2175
    %v2179 = vmul.f32 %v2121, %v2174
    %v2180 = vmul.f32 %v2136, %v2176
    %vm2181 = vcmp.gt.s32.totalorder %v1943, 1
    %v2182 = vsel %vm2181, 1, 0
    %2183 = vset.pattern.permute.xlu0 0
    %2184 = vperm.xlu0 %2183, %v2182
    %v2185 = vpop.permute.xlu0 %2184
    %vm2186 = vcmp.eq.s32.totalorder %v2185, 1
    %v2189 = vrot.slane %v2179, 1
    %v2190 = vsel %vm2056, %v2180, %v2189
    %2191 = vrot.lane.b32.xlu0 %v2190, 32
    %v2192 = vpop.permute.xlu0 %2191
    %v2194 = vsel %vm2186, %v2192, %v2061
    %v2197 = vrot.slane %v2167, 1
    %v2198 = vsel %vm2056, %v2168, %v2197
    %2199 = vrot.lane.b32.xlu0 %v2198, 96
    %v2200 = vpop.permute.xlu0 %2199
    %v2202 = vsel %vm2186, %v2200, %v2069
    %v2204 = vsel %vm1909, %v2194, 0
    %2206 = vmatpush.msra.mxu0 0.0
    %2207 = vmatpush.msra.mxu0 0.0
    %2208 = vmatpush.msra.mxu0 0.0
    %2209 = vmatpush.msra.mxu0 0.0
    %2210 = vmatpush.msra.mxu0 0.0
    %2211 = vmatpush.msra.mxu0 0.0
    %2212 = vmatpush.msra.mxu0 0.0
    %2213 = vmatpush.msra.mxu0 0.0
    %2214 = vmatpush.msra.mxu0 0.0
    %2215 = vmatpush.msra.mxu0 0.0
    %2216 = vmatpush.msra.mxu0 0.0
    %2217 = vmatpush.msra.mxu0 0.0
    %2218 = vmatpush.msra.mxu0 %v1942
    %2219 = vmatpush.msra.mxu0 %v1941
    %2220 = vmatpush.msra.mxu0 %v1940
    %2221 = vmatpush.msra.mxu0 %v1939
    %2222 = vmatmul.f32.gmra.mxu0 %v2204
    %v2223 = vpop.f32.mrf.mxu0
    %v2224 = vadd.f32 0.0, %v2223
    %2225 = vdwg.mxu0
    %v2227 = vrot.slane %v2224, 6
    %v2228 = vrot.slane %v2224, 7
    %v2231 = vadd.f32 %v1934, %v2227
    %v2232 = vadd.f32 %v1937, %v2228
    %v2233 = vxor.u32 %v2231, 2147483648
    %v2234 = vxor.u32 %v2232, 2147483648
    %v2235 = vmul.f32 %v2233, 1.442695
    %v2236 = vpow.pop %v2235
    %v2237 = vmul.f32 %v2234, 1.442695
    %v2238 = vpow.pop %v2237
    %v2239 = vadd.f32 %v2236, 1.0
    %v2240 = vadd.f32 %v2238, 1.0
    %v2241 = vrcp.pop %v2239
    %v2242 = vmul.f32 %v2239, %v2241
    %v2243 = vsub.f32 1.0, %v2242
    %v2244 = vmul.f32 %v2241, %v2243
    %v2245 = vadd.f32 %v2241, %v2244
    %vm2246 = vweird.f32 %v2239
    %vm2247 = vweird.f32 %v2241
    %vm2248 = vmor %vm2246, %vm2247
    %v2249 = vsel %vm2248, %v2241, %v2245
    %v2250 = vand.u32 2147483647, %v2239
    %vm2251 = vcmp.eq.f32.partialorder %v2250, 8.507059e+37
    %v2252 = vand.u32 %v2239, 2147483648
    %v2253 = vor.u32 1.1754944e-38, %v2252
    %v2254 = vsel %vm2251, %v2253, %v2249
    %v2255 = vmul.f32 1.0, %v2254
    %v2256 = vrcp.pop %v2240
    %v2257 = vmul.f32 %v2240, %v2256
    %v2258 = vsub.f32 1.0, %v2257
    %v2259 = vmul.f32 %v2256, %v2258
    %v2260 = vadd.f32 %v2256, %v2259
    %vm2261 = vweird.f32 %v2240
    %vm2262 = vweird.f32 %v2256
    %vm2263 = vmor %vm2261, %vm2262
    %v2264 = vsel %vm2263, %v2256, %v2260
    %v2265 = vand.u32 2147483647, %v2240
    %vm2266 = vcmp.eq.f32.partialorder %v2265, 8.507059e+37
    %v2267 = vand.u32 %v2240, 2147483648
    %v2268 = vor.u32 1.1754944e-38, %v2267
    %v2269 = vsel %vm2266, %v2268, %v2264
    %v2270 = vmul.f32 1.0, %v2269
    %v2271 = vtanh.pop %v2231
    %v2272 = vtanh.pop %v2232
    %v2274 = vrot.slane %v2202, 6
    %v2275 = vrot.slane %v2202, 7
    %2276 = vrot.lane.b32.xlu0 %v2274, 32
    %v2277 = vpop.permute.xlu0 %2276
    %2278 = vrot.lane.b32.xlu0 %v2275, 32
    %v2279 = vpop.permute.xlu0 %2278
    %v2282 = vmul.f32 %v2255, %v2277
    %v2283 = vmul.f32 %v2270, %v2279
    %2286 = vrot.lane.b32.xlu0 %v2271, 64
    %v2287 = vpop.permute.xlu0 %2286
    %2288 = vrot.lane.b32.xlu0 %v2272, 64
    %v2289 = vpop.permute.xlu0 %2288
    %v2292 = vmul.f32 %v2255, %v2287
    %v2293 = vmul.f32 %v2270, %v2289
    %2296 = vrot.lane.b32.xlu0 %v2292, 32
    %v2297 = vpop.permute.xlu0 %2296
    %2298 = vrot.lane.b32.xlu0 %v2293, 32
    %v2299 = vpop.permute.xlu0 %2298
    %v2302 = vadd.f32 %v2282, %v2297
    %v2303 = vadd.f32 %v2283, %v2299
    %v2304 = vtanh.pop %v2302
    %v2305 = vtanh.pop %v2303
    %2308 = vrot.lane.b32.xlu0 %v2304, 64
    %v2309 = vpop.permute.xlu0 %2308
    %2310 = vrot.lane.b32.xlu0 %v2305, 64
    %v2311 = vpop.permute.xlu0 %2310
    %v2314 = vmul.f32 %v2255, %v2309
    %v2315 = vmul.f32 %v2270, %v2311
    %vm2316 = vcmp.gt.s32.totalorder %v1943, 2
    %v2317 = vsel %vm2316, 1, 0
    %2318 = vset.pattern.permute.xlu0 0
    %2319 = vperm.xlu0 %2318, %v2317
    %v2320 = vpop.permute.xlu0 %2319
    %vm2321 = vcmp.eq.s32.totalorder %v2320, 1
    %v2324 = vrot.slane %v2314, 2
    %v2325 = vrot.slane %v2315, 1
    %v2326 = vsel %vm2056, %v2325, %v2324
    %2327 = vrot.lane.b32.xlu0 %v2326, 32
    %v2328 = vpop.permute.xlu0 %2327
    %v2330 = vsel %vm2321, %v2328, %v2194
    %v2333 = vrot.slane %v2302, 2
    %v2334 = vrot.slane %v2303, 1
    %v2335 = vsel %vm2056, %v2334, %v2333
    %2336 = vrot.lane.b32.xlu0 %v2335, 96
    %v2337 = vpop.permute.xlu0 %2336
    %v2339 = vsel %vm2321, %v2337, %v2202
    %v2341 = vsel %vm1909, %v2330, 0
    %2343 = vmatpush.msra.mxu0 0.0
    %2344 = vmatpush.msra.mxu0 0.0
    %2345 = vmatpush.msra.mxu0 0.0
    %2346 = vmatpush.msra.mxu0 0.0
    %2347 = vmatpush.msra.mxu0 0.0
    %2348 = vmatpush.msra.mxu0 0.0
    %2349 = vmatpush.msra.mxu0 0.0
    %2350 = vmatpush.msra.mxu0 0.0
    %2351 = vmatpush.msra.mxu0 0.0
    %2352 = vmatpush.msra.mxu0 0.0
    %2353 = vmatpush.msra.mxu0 0.0
    %2354 = vmatpush.msra.mxu0 0.0
    %2355 = vmatpush.msra.mxu0 %v1942
    %2356 = vmatpush.msra.mxu0 %v1941
    %2357 = vmatpush.msra.mxu0 %v1940
    %2358 = vmatpush.msra.mxu0 %v1939
    %2359 = vmatmul.f32.gmra.mxu0 %v2341
    %v2360 = vpop.f32.mrf.mxu0
    %v2361 = vadd.f32 0.0, %v2360
    %2362 = vdwg.mxu0
    %v2364 = vrot.slane %v2361, 5
    %v2365 = vrot.slane %v2361, 6
    %v2368 = vadd.f32 %v1934, %v2364
    %v2369 = vadd.f32 %v1937, %v2365
    %v2370 = vxor.u32 %v2368, 2147483648
    %v2371 = vxor.u32 %v2369, 2147483648
    %v2372 = vmul.f32 %v2370, 1.442695
    %v2373 = vpow.pop %v2372
    %v2374 = vmul.f32 %v2371, 1.442695
    %v2375 = vpow.pop %v2374
    %v2376 = vadd.f32 %v2373, 1.0
    %v2377 = vadd.f32 %v2375, 1.0
    %v2378 = vrcp.pop %v2376
    %v2379 = vmul.f32 %v2376, %v2378
    %v2380 = vsub.f32 1.0, %v2379
    %v2381 = vmul.f32 %v2378, %v2380
    %v2382 = vadd.f32 %v2378, %v2381
    %vm2383 = vweird.f32 %v2376
    %vm2384 = vweird.f32 %v2378
    %vm2385 = vmor %vm2383, %vm2384
    %v2386 = vsel %vm2385, %v2378, %v2382
    %v2387 = vand.u32 2147483647, %v2376
    %vm2388 = vcmp.eq.f32.partialorder %v2387, 8.507059e+37
    %v2389 = vand.u32 %v2376, 2147483648
    %v2390 = vor.u32 1.1754944e-38, %v2389
    %v2391 = vsel %vm2388, %v2390, %v2386
    %v2392 = vmul.f32 1.0, %v2391
    %v2393 = vrcp.pop %v2377
    %v2394 = vmul.f32 %v2377, %v2393
    %v2395 = vsub.f32 1.0, %v2394
    %v2396 = vmul.f32 %v2393, %v2395
    %v2397 = vadd.f32 %v2393, %v2396
    %vm2398 = vweird.f32 %v2377
    %vm2399 = vweird.f32 %v2393
    %vm2400 = vmor %vm2398, %vm2399
    %v2401 = vsel %vm2400, %v2393, %v2397
    %v2402 = vand.u32 2147483647, %v2377
    %vm2403 = vcmp.eq.f32.partialorder %v2402, 8.507059e+37
    %v2404 = vand.u32 %v2377, 2147483648
    %v2405 = vor.u32 1.1754944e-38, %v2404
    %v2406 = vsel %vm2403, %v2405, %v2401
    %v2407 = vmul.f32 1.0, %v2406
    %v2408 = vtanh.pop %v2368
    %v2409 = vtanh.pop %v2369
    %v2411 = vrot.slane %v2339, 5
    %v2412 = vrot.slane %v2339, 6
    %2413 = vrot.lane.b32.xlu0 %v2411, 32
    %v2414 = vpop.permute.xlu0 %2413
    %2415 = vrot.lane.b32.xlu0 %v2412, 32
    %v2416 = vpop.permute.xlu0 %2415
    %v2419 = vmul.f32 %v2392, %v2414
    %v2420 = vmul.f32 %v2407, %v2416
    %2423 = vrot.lane.b32.xlu0 %v2408, 64
    %v2424 = vpop.permute.xlu0 %2423
    %2425 = vrot.lane.b32.xlu0 %v2409, 64
    %v2426 = vpop.permute.xlu0 %2425
    %v2429 = vmul.f32 %v2392, %v2424
    %v2430 = vmul.f32 %v2407, %v2426
    %2433 = vrot.lane.b32.xlu0 %v2429, 32
    %v2434 = vpop.permute.xlu0 %2433
    %2435 = vrot.lane.b32.xlu0 %v2430, 32
    %v2436 = vpop.permute.xlu0 %2435
    %v2439 = vadd.f32 %v2419, %v2434
    %v2440 = vadd.f32 %v2420, %v2436
    %v2441 = vtanh.pop %v2439
    %v2442 = vtanh.pop %v2440
    %2445 = vrot.lane.b32.xlu0 %v2441, 64
    %v2446 = vpop.permute.xlu0 %2445
    %2447 = vrot.lane.b32.xlu0 %v2442, 64
    %v2448 = vpop.permute.xlu0 %2447
    %v2451 = vmul.f32 %v2392, %v2446
    %v2452 = vmul.f32 %v2407, %v2448
    %vm2453 = vcmp.gt.s32.totalorder %v1943, 3
    %v2454 = vsel %vm2453, 1, 0
    %2455 = vset.pattern.permute.xlu0 0
    %2456 = vperm.xlu0 %2455, %v2454
    %v2457 = vpop.permute.xlu0 %2456
    %vm2458 = vcmp.eq.s32.totalorder %v2457, 1
    %v2461 = vrot.slane %v2451, 3
    %v2462 = vrot.slane %v2452, 2
    %v2463 = vsel %vm2056, %v2462, %v2461
    %2464 = vrot.lane.b32.xlu0 %v2463, 32
    %v2465 = vpop.permute.xlu0 %2464
    %v2467 = vsel %vm2458, %v2465, %v2330
    %v2470 = vrot.slane %v2439, 3
    %v2471 = vrot.slane %v2440, 2
    %v2472 = vsel %vm2056, %v2471, %v2470
    %2473 = vrot.lane.b32.xlu0 %v2472, 96
    %v2474 = vpop.permute.xlu0 %2473
    %v2476 = vsel %vm2458, %v2474, %v2339
    %v2478 = vsel %vm1909, %v2467, 0
    %2480 = vmatpush.msra.mxu0 0.0
    %2481 = vmatpush.msra.mxu0 0.0
    %2482 = vmatpush.msra.mxu0 0.0
    %2483 = vmatpush.msra.mxu0 0.0
    %2484 = vmatpush.msra.mxu0 0.0
    %2485 = vmatpush.msra.mxu0 0.0
    %2486 = vmatpush.msra.mxu0 0.0
    %2487 = vmatpush.msra.mxu0 0.0
    %2488 = vmatpush.msra.mxu0 0.0
    %2489 = vmatpush.msra.mxu0 0.0
    %2490 = vmatpush.msra.mxu0 0.0
    %2491 = vmatpush.msra.mxu0 0.0
    %2492 = vmatpush.msra.mxu0 %v1942
    %2493 = vmatpush.msra.mxu0 %v1941
    %2494 = vmatpush.msra.mxu0 %v1940
    %2495 = vmatpush.msra.mxu0 %v1939
    %2496 = vmatmul.f32.gmra.mxu0 %v2478
    %v2497 = vpop.f32.mrf.mxu0
    %v2498 = vadd.f32 0.0, %v2497
    %2499 = vdwg.mxu0
    %v2501 = vrot.slane %v2498, 4
    %v2502 = vrot.slane %v2498, 5
    %v2505 = vadd.f32 %v1934, %v2501
    %v2506 = vadd.f32 %v1937, %v2502
    %v2507 = vxor.u32 %v2505, 2147483648
    %v2508 = vxor.u32 %v2506, 2147483648
    %v2509 = vmul.f32 %v2507, 1.442695
    %v2510 = vpow.pop %v2509
    %v2511 = vmul.f32 %v2508, 1.442695
    %v2512 = vpow.pop %v2511
    %v2513 = vadd.f32 %v2510, 1.0
    %v2514 = vadd.f32 %v2512, 1.0
    %v2515 = vrcp.pop %v2513
    %v2516 = vmul.f32 %v2513, %v2515
    %v2517 = vsub.f32 1.0, %v2516
    %v2518 = vmul.f32 %v2515, %v2517
    %v2519 = vadd.f32 %v2515, %v2518
    %vm2520 = vweird.f32 %v2513
    %vm2521 = vweird.f32 %v2515
    %vm2522 = vmor %vm2520, %vm2521
    %v2523 = vsel %vm2522, %v2515, %v2519
    %v2524 = vand.u32 2147483647, %v2513
    %vm2525 = vcmp.eq.f32.partialorder %v2524, 8.507059e+37
    %v2526 = vand.u32 %v2513, 2147483648
    %v2527 = vor.u32 1.1754944e-38, %v2526
    %v2528 = vsel %vm2525, %v2527, %v2523
    %v2529 = vmul.f32 1.0, %v2528
    %v2530 = vrcp.pop %v2514
    %v2531 = vmul.f32 %v2514, %v2530
    %v2532 = vsub.f32 1.0, %v2531
    %v2533 = vmul.f32 %v2530, %v2532
    %v2534 = vadd.f32 %v2530, %v2533
    %vm2535 = vweird.f32 %v2514
    %vm2536 = vweird.f32 %v2530
    %vm2537 = vmor %vm2535, %vm2536
    %v2538 = vsel %vm2537, %v2530, %v2534
    %v2539 = vand.u32 2147483647, %v2514
    %vm2540 = vcmp.eq.f32.partialorder %v2539, 8.507059e+37
    %v2541 = vand.u32 %v2514, 2147483648
    %v2542 = vor.u32 1.1754944e-38, %v2541
    %v2543 = vsel %vm2540, %v2542, %v2538
    %v2544 = vmul.f32 1.0, %v2543
    %v2545 = vtanh.pop %v2505
    %v2546 = vtanh.pop %v2506
    %v2548 = vrot.slane %v2476, 4
    %v2549 = vrot.slane %v2476, 5
    %2550 = vrot.lane.b32.xlu0 %v2548, 32
    %v2551 = vpop.permute.xlu0 %2550
    %2552 = vrot.lane.b32.xlu0 %v2549, 32
    %v2553 = vpop.permute.xlu0 %2552
    %v2556 = vmul.f32 %v2529, %v2551
    %v2557 = vmul.f32 %v2544, %v2553
    %2560 = vrot.lane.b32.xlu0 %v2545, 64
    %v2561 = vpop.permute.xlu0 %2560
    %2562 = vrot.lane.b32.xlu0 %v2546, 64
    %v2563 = vpop.permute.xlu0 %2562
    %v2566 = vmul.f32 %v2529, %v2561
    %v2567 = vmul.f32 %v2544, %v2563
    %2570 = vrot.lane.b32.xlu0 %v2566, 32
    %v2571 = vpop.permute.xlu0 %2570
    %2572 = vrot.lane.b32.xlu0 %v2567, 32
    %v2573 = vpop.permute.xlu0 %2572
    %v2576 = vadd.f32 %v2556, %v2571
    %v2577 = vadd.f32 %v2557, %v2573
    %v2578 = vtanh.pop %v2576
    %v2579 = vtanh.pop %v2577
    %2582 = vrot.lane.b32.xlu0 %v2578, 64
    %v2583 = vpop.permute.xlu0 %2582
    %2584 = vrot.lane.b32.xlu0 %v2579, 64
    %v2585 = vpop.permute.xlu0 %2584
    %v2588 = vmul.f32 %v2529, %v2583
    %v2589 = vmul.f32 %v2544, %v2585
    %vm2590 = vcmp.gt.s32.totalorder %v1943, 4
    %v2591 = vsel %vm2590, 1, 0
    %2592 = vset.pattern.permute.xlu0 0
    %2593 = vperm.xlu0 %2592, %v2591
    %v2594 = vpop.permute.xlu0 %2593
    %vm2595 = vcmp.eq.s32.totalorder %v2594, 1
    %v2598 = vrot.slane %v2588, 4
    %v2599 = vrot.slane %v2589, 3
    %v2600 = vsel %vm2056, %v2599, %v2598
    %2601 = vrot.lane.b32.xlu0 %v2600, 32
    %v2602 = vpop.permute.xlu0 %2601
    %v2604 = vsel %vm2595, %v2602, %v2467
    %v2607 = vrot.slane %v2576, 4
    %v2608 = vrot.slane %v2577, 3
    %v2609 = vsel %vm2056, %v2608, %v2607
    %2610 = vrot.lane.b32.xlu0 %v2609, 96
    %v2611 = vpop.permute.xlu0 %2610
    %v2613 = vsel %vm2595, %v2611, %v2476
    %v2615 = vsel %vm1909, %v2604, 0
    %2617 = vmatpush.msra.mxu0 0.0
    %2618 = vmatpush.msra.mxu0 0.0
    %2619 = vmatpush.msra.mxu0 0.0
    %2620 = vmatpush.msra.mxu0 0.0
    %2621 = vmatpush.msra.mxu0 0.0
    %2622 = vmatpush.msra.mxu0 0.0
    %2623 = vmatpush.msra.mxu0 0.0
    %2624 = vmatpush.msra.mxu0 0.0
    %2625 = vmatpush.msra.mxu0 0.0
    %2626 = vmatpush.msra.mxu0 0.0
    %2627 = vmatpush.msra.mxu0 0.0
    %2628 = vmatpush.msra.mxu0 0.0
    %2629 = vmatpush.msra.mxu0 %v1942
    %2630 = vmatpush.msra.mxu0 %v1941
    %2631 = vmatpush.msra.mxu0 %v1940
    %2632 = vmatpush.msra.mxu0 %v1939
    %2633 = vmatmul.f32.gmra.mxu0 %v2615
    %v2634 = vpop.f32.mrf.mxu0
    %v2635 = vadd.f32 0.0, %v2634
    %2636 = vdwg.mxu0
    %v2638 = vrot.slane %v2635, 3
    %v2639 = vrot.slane %v2635, 4
    %v2642 = vadd.f32 %v1934, %v2638
    %v2643 = vadd.f32 %v1937, %v2639
    %v2644 = vxor.u32 %v2642, 2147483648
    %v2645 = vxor.u32 %v2643, 2147483648
    %v2646 = vmul.f32 %v2644, 1.442695
    %v2647 = vpow.pop %v2646
    %v2648 = vmul.f32 %v2645, 1.442695
    %v2649 = vpow.pop %v2648
    %v2650 = vadd.f32 %v2647, 1.0
    %v2651 = vadd.f32 %v2649, 1.0
    %v2652 = vrcp.pop %v2650
    %v2653 = vmul.f32 %v2650, %v2652
    %v2654 = vsub.f32 1.0, %v2653
    %v2655 = vmul.f32 %v2652, %v2654
    %v2656 = vadd.f32 %v2652, %v2655
    %vm2657 = vweird.f32 %v2650
    %vm2658 = vweird.f32 %v2652
    %vm2659 = vmor %vm2657, %vm2658
    %v2660 = vsel %vm2659, %v2652, %v2656
    %v2661 = vand.u32 2147483647, %v2650
    %vm2662 = vcmp.eq.f32.partialorder %v2661, 8.507059e+37
    %v2663 = vand.u32 %v2650, 2147483648
    %v2664 = vor.u32 1.1754944e-38, %v2663
    %v2665 = vsel %vm2662, %v2664, %v2660
    %v2666 = vmul.f32 1.0, %v2665
    %v2667 = vrcp.pop %v2651
    %v2668 = vmul.f32 %v2651, %v2667
    %v2669 = vsub.f32 1.0, %v2668
    %v2670 = vmul.f32 %v2667, %v2669
    %v2671 = vadd.f32 %v2667, %v2670
    %vm2672 = vweird.f32 %v2651
    %vm2673 = vweird.f32 %v2667
    %vm2674 = vmor %vm2672, %vm2673
    %v2675 = vsel %vm2674, %v2667, %v2671
    %v2676 = vand.u32 2147483647, %v2651
    %vm2677 = vcmp.eq.f32.partialorder %v2676, 8.507059e+37
    %v2678 = vand.u32 %v2651, 2147483648
    %v2679 = vor.u32 1.1754944e-38, %v2678
    %v2680 = vsel %vm2677, %v2679, %v2675
    %v2681 = vmul.f32 1.0, %v2680
    %v2682 = vtanh.pop %v2642
    %v2683 = vtanh.pop %v2643
    %v2685 = vrot.slane %v2613, 3
    %v2686 = vrot.slane %v2613, 4
    %2687 = vrot.lane.b32.xlu0 %v2685, 32
    %v2688 = vpop.permute.xlu0 %2687
    %2689 = vrot.lane.b32.xlu0 %v2686, 32
    %v2690 = vpop.permute.xlu0 %2689
    %v2693 = vmul.f32 %v2666, %v2688
    %v2694 = vmul.f32 %v2681, %v2690
    %2697 = vrot.lane.b32.xlu0 %v2682, 64
    %v2698 = vpop.permute.xlu0 %2697
    %2699 = vrot.lane.b32.xlu0 %v2683, 64
    %v2700 = vpop.permute.xlu0 %2699
    %v2703 = vmul.f32 %v2666, %v2698
    %v2704 = vmul.f32 %v2681, %v2700
    %2707 = vrot.lane.b32.xlu0 %v2703, 32
    %v2708 = vpop.permute.xlu0 %2707
    %2709 = vrot.lane.b32.xlu0 %v2704, 32
    %v2710 = vpop.permute.xlu0 %2709
    %v2713 = vadd.f32 %v2693, %v2708
    %v2714 = vadd.f32 %v2694, %v2710
    %v2715 = vtanh.pop %v2713
    %v2716 = vtanh.pop %v2714
    %2719 = vrot.lane.b32.xlu0 %v2715, 64
    %v2720 = vpop.permute.xlu0 %2719
    %2721 = vrot.lane.b32.xlu0 %v2716, 64
    %v2722 = vpop.permute.xlu0 %2721
    %v2725 = vmul.f32 %v2666, %v2720
    %v2726 = vmul.f32 %v2681, %v2722
    %vm2727 = vcmp.gt.s32.totalorder %v1943, 5
    %v2728 = vsel %vm2727, 1, 0
    %2729 = vset.pattern.permute.xlu0 0
    %2730 = vperm.xlu0 %2729, %v2728
    %v2731 = vpop.permute.xlu0 %2730
    %vm2732 = vcmp.eq.s32.totalorder %v2731, 1
    %v2735 = vrot.slane %v2725, 5
    %v2736 = vrot.slane %v2726, 4
    %v2737 = vsel %vm2056, %v2736, %v2735
    %2738 = vrot.lane.b32.xlu0 %v2737, 32
    %v2739 = vpop.permute.xlu0 %2738
    %v2741 = vsel %vm2732, %v2739, %v2604
    %v2744 = vrot.slane %v2713, 5
    %v2745 = vrot.slane %v2714, 4
    %v2746 = vsel %vm2056, %v2745, %v2744
    %2747 = vrot.lane.b32.xlu0 %v2746, 96
    %v2748 = vpop.permute.xlu0 %2747
    %v2750 = vsel %vm2732, %v2748, %v2613
    %v2752 = vsel %vm1909, %v2741, 0
    %2754 = vmatpush.msra.mxu0 0.0
    %2755 = vmatpush.msra.mxu0 0.0
    %2756 = vmatpush.msra.mxu0 0.0
    %2757 = vmatpush.msra.mxu0 0.0
    %2758 = vmatpush.msra.mxu0 0.0
    %2759 = vmatpush.msra.mxu0 0.0
    %2760 = vmatpush.msra.mxu0 0.0
    %2761 = vmatpush.msra.mxu0 0.0
    %2762 = vmatpush.msra.mxu0 0.0
    %2763 = vmatpush.msra.mxu0 0.0
    %2764 = vmatpush.msra.mxu0 0.0
    %2765 = vmatpush.msra.mxu0 0.0
    %2766 = vmatpush.msra.mxu0 %v1942
    %2767 = vmatpush.msra.mxu0 %v1941
    %2768 = vmatpush.msra.mxu0 %v1940
    %2769 = vmatpush.msra.mxu0 %v1939
    %2770 = vmatmul.f32.gmra.mxu0 %v2752
    %v2771 = vpop.f32.mrf.mxu0
    %v2772 = vadd.f32 0.0, %v2771
    %2773 = vdwg.mxu0
    %v2775 = vrot.slane %v2772, 2
    %v2776 = vrot.slane %v2772, 3
    %v2779 = vadd.f32 %v1934, %v2775
    %v2780 = vadd.f32 %v1937, %v2776
    %v2781 = vxor.u32 %v2779, 2147483648
    %v2782 = vxor.u32 %v2780, 2147483648
    %v2783 = vmul.f32 %v2781, 1.442695
    %v2784 = vpow.pop %v2783
    %v2785 = vmul.f32 %v2782, 1.442695
    %v2786 = vpow.pop %v2785
    %v2787 = vadd.f32 %v2784, 1.0
    %v2788 = vadd.f32 %v2786, 1.0
    %v2789 = vrcp.pop %v2787
    %v2790 = vmul.f32 %v2787, %v2789
    %v2791 = vsub.f32 1.0, %v2790
    %v2792 = vmul.f32 %v2789, %v2791
    %v2793 = vadd.f32 %v2789, %v2792
    %vm2794 = vweird.f32 %v2787
    %vm2795 = vweird.f32 %v2789
    %vm2796 = vmor %vm2794, %vm2795
    %v2797 = vsel %vm2796, %v2789, %v2793
    %v2798 = vand.u32 2147483647, %v2787
    %vm2799 = vcmp.eq.f32.partialorder %v2798, 8.507059e+37
    %v2800 = vand.u32 %v2787, 2147483648
    %v2801 = vor.u32 1.1754944e-38, %v2800
    %v2802 = vsel %vm2799, %v2801, %v2797
    %v2803 = vmul.f32 1.0, %v2802
    %v2804 = vrcp.pop %v2788
    %v2805 = vmul.f32 %v2788, %v2804
    %v2806 = vsub.f32 1.0, %v2805
    %v2807 = vmul.f32 %v2804, %v2806
    %v2808 = vadd.f32 %v2804, %v2807
    %vm2809 = vweird.f32 %v2788
    %vm2810 = vweird.f32 %v2804
    %vm2811 = vmor %vm2809, %vm2810
    %v2812 = vsel %vm2811, %v2804, %v2808
    %v2813 = vand.u32 2147483647, %v2788
    %vm2814 = vcmp.eq.f32.partialorder %v2813, 8.507059e+37
    %v2815 = vand.u32 %v2788, 2147483648
    %v2816 = vor.u32 1.1754944e-38, %v2815
    %v2817 = vsel %vm2814, %v2816, %v2812
    %v2818 = vmul.f32 1.0, %v2817
    %v2819 = vtanh.pop %v2779
    %v2820 = vtanh.pop %v2780
    %v2822 = vrot.slane %v2750, 2
    %v2823 = vrot.slane %v2750, 3
    %2824 = vrot.lane.b32.xlu0 %v2822, 32
    %v2825 = vpop.permute.xlu0 %2824
    %2826 = vrot.lane.b32.xlu0 %v2823, 32
    %v2827 = vpop.permute.xlu0 %2826
    %v2830 = vmul.f32 %v2803, %v2825
    %v2831 = vmul.f32 %v2818, %v2827
    %2834 = vrot.lane.b32.xlu0 %v2819, 64
    %v2835 = vpop.permute.xlu0 %2834
    %2836 = vrot.lane.b32.xlu0 %v2820, 64
    %v2837 = vpop.permute.xlu0 %2836
    %v2840 = vmul.f32 %v2803, %v2835
    %v2841 = vmul.f32 %v2818, %v2837
    %2844 = vrot.lane.b32.xlu0 %v2840, 32
    %v2845 = vpop.permute.xlu0 %2844
    %2846 = vrot.lane.b32.xlu0 %v2841, 32
    %v2847 = vpop.permute.xlu0 %2846
    %v2850 = vadd.f32 %v2830, %v2845
    %v2851 = vadd.f32 %v2831, %v2847
    %v2852 = vtanh.pop %v2850
    %v2853 = vtanh.pop %v2851
    %2856 = vrot.lane.b32.xlu0 %v2852, 64
    %v2857 = vpop.permute.xlu0 %2856
    %2858 = vrot.lane.b32.xlu0 %v2853, 64
    %v2859 = vpop.permute.xlu0 %2858
    %v2862 = vmul.f32 %v2803, %v2857
    %v2863 = vmul.f32 %v2818, %v2859
    %vm2864 = vcmp.gt.s32.totalorder %v1943, 6
    %v2865 = vsel %vm2864, 1, 0
    %2866 = vset.pattern.permute.xlu0 0
    %2867 = vperm.xlu0 %2866, %v2865
    %v2868 = vpop.permute.xlu0 %2867
    %vm2869 = vcmp.eq.s32.totalorder %v2868, 1
    %v2872 = vrot.slane %v2862, 6
    %v2873 = vrot.slane %v2863, 5
    %v2874 = vsel %vm2056, %v2873, %v2872
    %2875 = vrot.lane.b32.xlu0 %v2874, 32
    %v2876 = vpop.permute.xlu0 %2875
    %v2878 = vsel %vm2869, %v2876, %v2741
    %v2881 = vrot.slane %v2850, 6
    %v2882 = vrot.slane %v2851, 5
    %v2883 = vsel %vm2056, %v2882, %v2881
    %2884 = vrot.lane.b32.xlu0 %v2883, 96
    %v2885 = vpop.permute.xlu0 %2884
    %v2887 = vsel %vm2869, %v2885, %v2750
    %v2889 = vsel %vm1909, %v2878, 0
    %2891 = vmatpush.msra.mxu0 0.0
    %2892 = vmatpush.msra.mxu0 0.0
    %2893 = vmatpush.msra.mxu0 0.0
    %2894 = vmatpush.msra.mxu0 0.0
    %2895 = vmatpush.msra.mxu0 0.0
    %2896 = vmatpush.msra.mxu0 0.0
    %2897 = vmatpush.msra.mxu0 0.0
    %2898 = vmatpush.msra.mxu0 0.0
    %2899 = vmatpush.msra.mxu0 0.0
    %2900 = vmatpush.msra.mxu0 0.0
    %2901 = vmatpush.msra.mxu0 0.0
    %2902 = vmatpush.msra.mxu0 0.0
    %2903 = vmatpush.msra.mxu0 %v1942
    %2904 = vmatpush.msra.mxu0 %v1941
    %2905 = vmatpush.msra.mxu0 %v1940
    %2906 = vmatpush.msra.mxu0 %v1939
    %2907 = vmatmul.f32.gmra.mxu0 %v2889
    %v2908 = vpop.f32.mrf.mxu0
    %v2909 = vadd.f32 0.0, %v2908
    %2910 = vdwg.mxu0
    %v2912 = vrot.slane %v2909, 1
    %v2913 = vrot.slane %v2909, 2
    %v2916 = vadd.f32 %v1934, %v2912
    %v2917 = vadd.f32 %v1937, %v2913
    %v2918 = vxor.u32 %v2916, 2147483648
    %v2919 = vxor.u32 %v2917, 2147483648
    %v2920 = vmul.f32 %v2918, 1.442695
    %v2921 = vpow.pop %v2920
    %v2922 = vmul.f32 %v2919, 1.442695
    %v2923 = vpow.pop %v2922
    %v2924 = vadd.f32 %v2921, 1.0
    %v2925 = vadd.f32 %v2923, 1.0
    %v2926 = vrcp.pop %v2924
    %v2927 = vmul.f32 %v2924, %v2926
    %v2928 = vsub.f32 1.0, %v2927
    %v2929 = vmul.f32 %v2926, %v2928
    %v2930 = vadd.f32 %v2926, %v2929
    %vm2931 = vweird.f32 %v2924
    %vm2932 = vweird.f32 %v2926
    %vm2933 = vmor %vm2931, %vm2932
    %v2934 = vsel %vm2933, %v2926, %v2930
    %v2935 = vand.u32 2147483647, %v2924
    %vm2936 = vcmp.eq.f32.partialorder %v2935, 8.507059e+37
    %v2937 = vand.u32 %v2924, 2147483648
    %v2938 = vor.u32 1.1754944e-38, %v2937
    %v2939 = vsel %vm2936, %v2938, %v2934
    %v2940 = vmul.f32 1.0, %v2939
    %v2941 = vrcp.pop %v2925
    %v2942 = vmul.f32 %v2925, %v2941
    %v2943 = vsub.f32 1.0, %v2942
    %v2944 = vmul.f32 %v2941, %v2943
    %v2945 = vadd.f32 %v2941, %v2944
    %vm2946 = vweird.f32 %v2925
    %vm2947 = vweird.f32 %v2941
    %vm2948 = vmor %vm2946, %vm2947
    %v2949 = vsel %vm2948, %v2941, %v2945
    %v2950 = vand.u32 2147483647, %v2925
    %vm2951 = vcmp.eq.f32.partialorder %v2950, 8.507059e+37
    %v2952 = vand.u32 %v2925, 2147483648
    %v2953 = vor.u32 1.1754944e-38, %v2952
    %v2954 = vsel %vm2951, %v2953, %v2949
    %v2955 = vmul.f32 1.0, %v2954
    %v2956 = vtanh.pop %v2916
    %v2957 = vtanh.pop %v2917
    %v2959 = vrot.slane %v2887, 1
    %v2960 = vrot.slane %v2887, 2
    %2961 = vrot.lane.b32.xlu0 %v2959, 32
    %v2962 = vpop.permute.xlu0 %2961
    %2963 = vrot.lane.b32.xlu0 %v2960, 32
    %v2964 = vpop.permute.xlu0 %2963
    %v2967 = vmul.f32 %v2940, %v2962
    %v2968 = vmul.f32 %v2955, %v2964
    %2971 = vrot.lane.b32.xlu0 %v2956, 64
    %v2972 = vpop.permute.xlu0 %2971
    %2973 = vrot.lane.b32.xlu0 %v2957, 64
    %v2974 = vpop.permute.xlu0 %2973
    %v2977 = vmul.f32 %v2940, %v2972
    %v2978 = vmul.f32 %v2955, %v2974
    %2981 = vrot.lane.b32.xlu0 %v2977, 32
    %v2982 = vpop.permute.xlu0 %2981
    %2983 = vrot.lane.b32.xlu0 %v2978, 32
    %v2984 = vpop.permute.xlu0 %2983
    %v2987 = vadd.f32 %v2967, %v2982
    %v2988 = vadd.f32 %v2968, %v2984
    %v2989 = vtanh.pop %v2987
    %v2990 = vtanh.pop %v2988
    %2993 = vrot.lane.b32.xlu0 %v2989, 64
    %v2994 = vpop.permute.xlu0 %2993
    %2995 = vrot.lane.b32.xlu0 %v2990, 64
    %v2996 = vpop.permute.xlu0 %2995
    %v2999 = vmul.f32 %v2940, %v2994
    %v3000 = vmul.f32 %v2955, %v2996
    %vm3001 = vcmp.gt.s32.totalorder %v1943, 7
    %v3002 = vsel %vm3001, 1, 0
    %3003 = vset.pattern.permute.xlu0 0
    %3004 = vperm.xlu0 %3003, %v3002
    %v3005 = vpop.permute.xlu0 %3004
    %vm3006 = vcmp.eq.s32.totalorder %v3005, 1
    %v3009 = vrot.slane %v2999, 7
    %v3010 = vrot.slane %v3000, 6
    %v3011 = vsel %vm2056, %v3010, %v3009
    %3012 = vrot.lane.b32.xlu0 %v3011, 32
    %v3013 = vpop.permute.xlu0 %3012
    %v3015 = vsel %vm3006, %v3013, %v2878
    %v3016 = vld [vmem:[%s6 + $0x148] sm:$0xff]
    %v3017 = vld [vmem:[%s6 + $0x150] sm:$0xff]
    %v3018 = vld [vmem:[%s6 + $0x158] sm:$0xff]
    %v3019 = vld [vmem:[%s6 + $0x160] sm:$0xff]
    %v3021 = vsel %vm1909, %v3015, 0
    %3023 = vmatpush.msra.mxu0 0.0
    %3024 = vmatpush.msra.mxu0 0.0
    %3025 = vmatpush.msra.mxu0 0.0
    %3026 = vmatpush.msra.mxu0 0.0
    %3027 = vmatpush.msra.mxu0 0.0
    %3028 = vmatpush.msra.mxu0 0.0
    %3029 = vmatpush.msra.mxu0 0.0
    %3030 = vmatpush.msra.mxu0 0.0
    %3031 = vmatpush.msra.mxu0 0.0
    %3032 = vmatpush.msra.mxu0 0.0
    %3033 = vmatpush.msra.mxu0 0.0
    %3034 = vmatpush.msra.mxu0 0.0
    %3035 = vmatpush.msra.mxu0 %v3019
    %3036 = vmatpush.msra.mxu0 %v3018
    %3037 = vmatpush.msra.mxu0 %v3017
    %3038 = vmatpush.msra.mxu0 %v3016
    %3039 = vmatmul.f32.gmra.mxu0 %v3021
    %v3040 = vpop.f32.mrf.mxu0
    %v3041 = vadd.f32 0.0, %v3040
    %3042 = vdwg.mxu0
    %v3044 = vrot.slane %v1887, 4
    %v3047 = vrot.slane %v3041, 1
    %v3048 = vperm.slane %v3041, 0
    %v3049 = vperm.slane %v3047, 0
    %v3052 = vadd.f32 %v1887, %v3048
    %v3053 = vadd.f32 %v3044, %v3049
    %v3054 = vld [vmem:[%s6 + $0x168] sm:$0x1]
    %v3055 = vperm.slane %v3054, 0
    %v3056 = vadd.f32 %v3052, %v3055
    %v3057 = vadd.f32 %v3053, %v3055
    %v3058 = vmax.f32 %v3056, 0.0
    %v3059 = vmax.f32 %v3057, 0.0
    %v3060 = vld [vmem:[%s6 + $0x170] sm:$0x1]
    %v3061 = vperm.slane %v3060, 0
    %v3062 = vmul.f32 %v3058, %v3061
    %v3063 = vmul.f32 %v3059, %v3061
    %vm3064 = vcmask 257024
    %v3065 = vsel %vm3064, %v3062, 0.0
    %3066 = vadd.xlane.f32.xlu0 %v3065
    %v3067 = vpop.xlane.xlu0 %3066
    %v3068 = vsel %vm3064, %v3063, 0.0
    %3069 = vadd.xlane.f32.xlu0 %v3068
    %v3070 = vpop.xlane.xlu0 %3069
    %v3071 = vld [vmem:[%s6 + $0x178] sm:$0x1]
    %s3073 = vtos %v3071
    %v3074 = vstv %s3073
    %v3076 = vadd.f32 %v3067, %v3074
    %v3077 = vadd.f32 %v3070, %v3074
    %v3078 = vld [vmem:[%s5] sm:$0x3]
    %3079 = vset.pattern.permute.xlu0 0
    %3080 = vperm.xlu0 %3079, %v3078
    %v3081 = vpop.permute.xlu0 %3080
    %vm3082 = vcmp.lt.s32.totalorder %v922, %v3081
    %v3085 = vperm.slane %v3076, %v922
    %v3086 = vperm.slane %v3077, %v922
    %v3087 = vsel %vm2056, %v3086, %v3085
    %v3089 = vsel %vm3082, %v3087, -1e+30
    %vm3090 = vcmask 25600
    %v3091 = vsel %vm3090, %v3089, -inf
    %3092 = vmax.xlane.f32.xlu0 %v3091
    %v3093 = vpop.xlane.xlu0 %3092
    %v3094 = vsub.f32 %v3089, %v3093
    %v3095 = vmul.f32 %v3094, 1.442695
    %v3096 = vpow.pop %v3095
    %v3097 = vsel %vm3090, %v3096, 0.0
    %3098 = vadd.xlane.f32.xlu0 %v3097
    %v3099 = vpop.xlane.xlu0 %3098
    %v3100 = vrcp.pop %v3099
    %v3101 = vmul.f32 %v3099, %v3100
    %v3102 = vsub.f32 1.0, %v3101
    %v3103 = vmul.f32 %v3100, %v3102
    %v3104 = vadd.f32 %v3100, %v3103
    %vm3105 = vweird.f32 %v3099
    %vm3106 = vweird.f32 %v3100
    %vm3107 = vmor %vm3105, %vm3106
    %v3108 = vsel %vm3107, %v3100, %v3104
    %v3109 = vand.u32 2147483647, %v3099
    %vm3110 = vcmp.eq.f32.partialorder %v3109, 8.507059e+37
    %v3111 = vand.u32 %v3099, 2147483648
    %v3112 = vor.u32 1.1754944e-38, %v3111
    %v3113 = vsel %vm3110, %v3112, %v3108
    %v3114 = vmul.f32 %v3096, %v3113
    %v3115 = vperm.slane %v3114, 0
    %v3116 = vlaneseq
    %v3117 = vshrl.u32 %v3116, 7
    %3119 = vset.pattern.permute.xlu0 %v3117
    %3120 = vperm.xlu0 %3119, %v3115
    %v3121 = vpop.permute.xlu0 %3120
    %v3122 = vperm.slane %v3114, 1
    %v3123 = vlaneseq
    %v3124 = vshrl.u32 %v3123, 7
    %3126 = vset.pattern.permute.xlu0 %v3124
    %3127 = vperm.xlu0 %3126, %v3122
    %v3128 = vpop.permute.xlu0 %3127
    %3129 = vst [vmem:[#allocation1] ss:$2 sm:$0xff] %v1887
    %v3130 = vld.sshfl [vmem:[#allocation1] sm:$0xff pattern:$0x75316420]
    %s3131 = scalar_lea.vmem [#allocation1], 16
    %3132 = vst [vmem:[%s3131] ss:$2 sm:$0xff] %v3044
    %v3133 = vld.sshfl [vmem:[#allocation1 + $0x10] sm:$0xff pattern:$0x75316420]
    %3134 = vrot.lane.b32.xlu0 %v3130, 96
    %v3135 = vpop.permute.xlu0 %3134
    %3136 = vrot.lane.b32.xlu0 %v3133, 96
    %v3137 = vpop.permute.xlu0 %3136
    %v3140 = vmul.f32 %v3121, %v3135
    %v3141 = vmul.f32 %v3128, %v3137
    %v3142 = vsel %vm3064, %v3140, 0.0
    %v3143 = vrot.slane %v3142, 4
    %v3144 = vadd.f32 %v3142, %v3143
    %v3145 = vrot.slane %v3144, 2
    %v3146 = vadd.f32 %v3144, %v3145
    %v3147 = vrot.slane %v3146, 1
    %v3148 = vadd.f32 %v3146, %v3147
    %v3149 = vsel %vm3064, %v3141, 0.0
    %v3150 = vrot.slane %v3149, 4
    %v3151 = vadd.f32 %v3149, %v3150
    %v3152 = vrot.slane %v3151, 2
    %v3153 = vadd.f32 %v3151, %v3152
    %v3154 = vrot.slane %v3153, 1
    %v3155 = vadd.f32 %v3153, %v3154
    %v3156 = vld [vmem:[%s6 + $0x180] sm:$0x1]
    %v3157 = vperm.slane %v3156, 0
    %3159 = vrot.lane.b32.xlu0 %v3157, 32
    %v3160 = vpop.permute.xlu0 %3159
    %v3162 = vadd.f32 %v3041, %v3160
    %v3163 = vmax.f32 %v3162, 0.0
    %v3164 = vld [vmem:[%s6 + $0x188] sm:$0x1]
    %v3165 = vperm.slane %v3164, 0
    %v3166 = vadd.f32 %v3148, %v3165
    %v3167 = vadd.f32 %v3155, %v3165
    %v3168 = vmax.f32 %v3166, 0.0
    %v3169 = vmax.f32 %v3167, 0.0
    %v3172 = vrot.slane %v3169, 7
    %v3173 = vsel %vm2056, %v3172, %v3168
    %3174 = vrot.lane.b32.xlu0 %v3173, 32
    %v3175 = vpop.permute.xlu0 %3174
    %v3177 = vmul.f32 %v3163, %v3175
    %v3178 = vld [vmem:[%s6 + $0x190] sm:$0xff]
    %v3179 = vld [vmem:[%s6 + $0x198] sm:$0xff]
    %v3180 = vld [vmem:[%s6 + $0x1a0] sm:$0xff]
    %v3181 = vld [vmem:[%s6 + $0x1a8] sm:$0xff]
    %v3182 = vld [vmem:[%s6 + $0x1b0] sm:$0x1]
    %v3183 = vperm.slane %v3182, 0
    %3185 = vrot.lane.b32.xlu0 %v3177, 96
    %v3186 = vpop.permute.xlu0 %3185
    %v3187 = vsel %vm1909, %v3186, 0
    %3189 = vmatpush.msra.mxu0 0.0
    %3190 = vmatpush.msra.mxu0 0.0
    %3191 = vmatpush.msra.mxu0 0.0
    %3192 = vmatpush.msra.mxu0 0.0
    %3193 = vmatpush.msra.mxu0 0.0
    %3194 = vmatpush.msra.mxu0 0.0
    %3195 = vmatpush.msra.mxu0 0.0
    %3196 = vmatpush.msra.mxu0 0.0
    %3197 = vmatpush.msra.mxu0 0.0
    %3198 = vmatpush.msra.mxu0 0.0
    %3199 = vmatpush.msra.mxu0 0.0
    %3200 = vmatpush.msra.mxu0 0.0
    %3201 = vmatpush.msra.mxu0 %v3181
    %3202 = vmatpush.msra.mxu0 %v3180
    %3203 = vmatpush.msra.mxu0 %v3179
    %3204 = vmatpush.msra.mxu0 %v3178
    %3205 = vmatmul.f32.gmra.mxu0 %v3187
    %v3206 = vpop.f32.mrf.mxu0
    %v3207 = vadd.f32 %v3183, %v3206
    %3208 = vdwg.mxu0
    %v3209 = vmax.f32 %v3207, 0.0
    %v3210 = vld [vmem:[%s6 + $0x1b8] sm:$0xff]
    %v3211 = vld [vmem:[%s6 + $0x1c0] sm:$0xff]
    %v3212 = vld [vmem:[%s6 + $0x1c8] sm:$0xff]
    %v3213 = vld [vmem:[%s6 + $0x1d0] sm:$0xff]
    %v3214 = vld [vmem:[%s6 + $0x1d8] sm:$0xff]
    %v3215 = vld [vmem:[%s6 + $0x1e0] sm:$0xff]
    %v3216 = vld [vmem:[%s6 + $0x1e8] sm:$0xff]
    %v3217 = vld [vmem:[%s6 + $0x1f0] sm:$0xff]
    %v3218 = vld [vmem:[%s6 + $0x1f8] sm:$0x1]
    %v3219 = vperm.slane %v3218, 0
    %vm3220 = vcmask 523264
    %v3222 = vsel %vm3220, %v3209, 0
    %3224 = vmatpush.msra.mxu0 0.0
    %3225 = vmatpush.msra.mxu0 0.0
    %3226 = vmatpush.msra.mxu0 0.0
    %3227 = vmatpush.msra.mxu0 0.0
    %3228 = vmatpush.msra.mxu0 0.0
    %3229 = vmatpush.msra.mxu0 0.0
    %3230 = vmatpush.msra.mxu0 0.0
    %3231 = vmatpush.msra.mxu0 0.0
    %3232 = vmatpush.msra.mxu0 %v3217
    %3233 = vmatpush.msra.mxu0 %v3216
    %3234 = vmatpush.msra.mxu0 %v3215
    %3235 = vmatpush.msra.mxu0 %v3214
    %3236 = vmatpush.msra.mxu0 %v3213
    %3237 = vmatpush.msra.mxu0 %v3212
    %3238 = vmatpush.msra.mxu0 %v3211
    %3239 = vmatpush.msra.mxu0 %v3210
    %3240 = vmatmul.f32.gmra.mxu0 %v3222
    %v3241 = vpop.f32.mrf.mxu0
    %v3242 = vadd.f32 %v3219, %v3241
    %3243 = vdwg.mxu0
    %vm3244 = vcmask 74752
    %3245 = vst.msk [vmem:[#allocation2] sm:$0x3] %vm3244, %v3242
    // Predicated region
    $region30: #{base_model2_forward.1} parent=1 // pred_check
      _
    $region31: #{base_model2_forward.1} parent=1 // pred_check_branch
      %3247 = sbr.rel (0) target = $region33
    $region32: #{base_model2_forward.1} parent=1 // pred_region
      %3249 = vsyncadd [#allocation3], 0
      %s3251 = sshll.u32 [#allocation2], 4
      %s3252 = int_to_ptr.vmem [resolvable:$true] %s3251
      %s3253 = sshll.u32 %s7, 4
      %s3254 = int_to_ptr.hbm [resolvable:$true] %s3253
      %3256 = dma.vmem_to_hbm [thread:$0]  %s3252, 32, %s3254, [#allocation3]
    $region33: #{base_model2_forward.1} parent=1 // pred_fallthru
      _
    // Predicated region
    $region34: #{base_model2_forward.1} parent=1 // pred_check
      _
    $region35: #{base_model2_forward.1} parent=1 // pred_check_branch
      %3258 = sbr.rel (0) target = $region37
    $region36: #{base_model2_forward.1} parent=1 // pred_region
      %3260 = dma.done [#allocation3], 32
    $region37: #{base_model2_forward.1} parent=1 // pred_fallthru
      _
    %3261 = vsyncpa [#allocation3], 1

</llo_original>
